<compile_context>
chip_gen: v7x
topology: tpu7x:2x2x1
jax: 0.10.0
libtpu: 0.0.40
codegen_flags: <defaults>
</compile_context>

<pallas_src>
import jax
import jax.numpy as jnp
from jax.experimental import pallas as pl
from jax.experimental.pallas import tpu as pltpu


def _round_up(x, m):
    return ((x + m - 1) // m) * m


# -----------------------------------------------------------------------------
# In-kernel helpers (only MXU-friendly dot_general / iota / compare patterns)
# -----------------------------------------------------------------------------
def _onehot_gather(ids, table):
    """ids: (N, 1) int32, table: (V, D) f32 -> (N, D) f32 via one-hot @ table."""
    n = ids.shape[0]
    v = table.shape[0]
    onehot = (jax.lax.broadcasted_iota(jnp.int32, (n, v), 1) == ids)
    return jnp.dot(onehot.astype(table.dtype), table,
                   preferred_element_type=jnp.float32)


def _scatter_cols(part, col_offset, width):
    """Places `part` (N, D) into columns [col_offset, col_offset+D) of an
    (N, width) slab (zeros elsewhere) using a 0/1 selection-matrix matmul —
    the dual of the one-hot gather.  Keeps the concat on the MXU and keeps the
    final store a single dense 128-lane-aligned write."""
    d = part.shape[-1]
    rows = jax.lax.broadcasted_iota(jnp.int32, (d, width), 0)
    cols = jax.lax.broadcasted_iota(jnp.int32, (d, width), 1)
    sel = (cols == rows + col_offset).astype(part.dtype)
    return jnp.dot(part, sel, preferred_element_type=jnp.float32)


# -----------------------------------------------------------------------------
# Fused TokenEncoder kernel (one token-tile per grid step)
# -----------------------------------------------------------------------------
def _make_token_encoder_kernel(*, has_char, n_aux):
    def kernel(*refs):
        refs = list(refs)
        out_ref = refs.pop()
        it = iter(refs)
        word_ids_ref = next(it)
        char_ids_ref = next(it) if has_char else None
        aux_ids_refs = [next(it) for _ in range(n_aux)]
        word_table_ref = next(it)
        if has_char:
            char_table_ref = next(it)
            conv_w_ref = next(it)
            conv_b_ref = next(it)
        aux_table_refs = [next(it) for _ in range(n_aux)]

        d_pad = out_ref.shape[-1]                      # lane-padded slab width

        # ---- word embedding -------------------------------------------------
        word_vec = _onehot_gather(word_ids_ref[...], word_table_ref[...])
        out = _scatter_cols(word_vec, 0, d_pad)
        col = word_table_ref.shape[1]

        # ---- char embedding: lookup + width-K conv + ReLU + max-pool --------
        if has_char:
            t, l, _ = char_ids_ref.shape               # (tile, L, 1)
            v_c, _ = char_table_ref.shape
            k_w, _, d_out = conv_w_ref.shape
            out_len = l - k_w + 1

            cids = char_ids_ref[...]                   # (T, L, 1) int32
            onehot = (jax.lax.broadcasted_iota(jnp.int32, (t, l, v_c), 2)
                      == cids).astype(char_table_ref.dtype)          # (T, L, Vc)
            cvec = jnp.einsum("tlv,vd->tld", onehot, char_table_ref[...],
                              preferred_element_type=jnp.float32)    # (T, L, Din)

            conv = jnp.zeros((t, out_len, d_out), jnp.float32)
            for k in range(k_w):                       # static unroll over K
                conv = conv + jnp.einsum(
                    "tld,do->tlo", cvec[:, k:k + out_len, :],
                    conv_w_ref[k].astype(jnp.float32),
                    preferred_element_type=jnp.float32)
            conv = jnp.maximum(conv + conv_b_ref[...].astype(jnp.float32), 0.0)
            pooled = jnp.max(conv, axis=1)             # (T, Dout) max over chars

            out = out + _scatter_cols(pooled, col, d_pad)
            col += d_out

        # ---- aux word embeddings --------------------------------------------
        for ids_ref, tbl_ref in zip(aux_ids_refs, aux_table_refs):
            out = out + _scatter_cols(
                _onehot_gather(ids_ref[...], tbl_ref[...]), col, d_pad)
            col += tbl_ref.shape[1]

        # dropout p == 0.0 -> identity.
        out_ref[...] = out.astype(out_ref.dtype)

    return kernel


# -----------------------------------------------------------------------------
# Host-side wrapper
# -----------------------------------------------------------------------------
def token_encoder_forward(params, seq_inputs, char_seq_inputs=None,
                          aux_seq_inputs=None, *, char_batch_size=None,
                          token_tile=128):
    """Fused TokenEncoder forward.

    `char_batch_size` is accepted for API parity with the PyTorch module but
    ignored: chunking the char batch and concatenating is mathematically the
    identity (dropout == 0), and a single fused launch is strictly faster than
    B separate pallas_calls plus an XLA concatenate.
    """
    del char_batch_size
    b, s = seq_inputs.shape
    n = b * s

    word_table = params["word_table"]
    dw = word_table.shape[1]

    has_char = char_seq_inputs is not None
    aux_items = list(aux_seq_inputs.items()) if aux_seq_inputs else []
    n_aux = len(aux_items)

    # Token tile: 128 keeps the MXU busy on all generations (bump to 256 on
    # v6e/v7x if desired); shrink for tiny inputs so padding stays cheap.
    tile = min(token_tile, _round_up(n, 8))
    npad = _round_up(n, tile)
    pad = npad - n

    inputs, in_specs = [], []

    word_ids = jnp.pad(seq_inputs.reshape(n, 1).astype(jnp.int32),
                       ((0, pad), (0, 0)))
    inputs.append(word_ids)
    in_specs.append(pl.BlockSpec((tile, 1), lambda i: (i, 0)))

    if has_char:
        l = char_seq_inputs.shape[2]
        k_w, _, dc_out = params["char_conv_w"].shape
        if l < k_w:
            raise ValueError(f"char length {l} < conv width {k_w}")
        char_ids = jnp.pad(char_seq_inputs.reshape(n, l, 1).astype(jnp.int32),
                           ((0, pad), (0, 0), (0, 0)))
        inputs.append(char_ids)
        in_specs.append(pl.BlockSpec((tile, l, 1), lambda i: (i, 0, 0)))

    for _, aux_in in aux_items:
        aux_ids = jnp.pad(aux_in.reshape(n, 1).astype(jnp.int32),
                          ((0, pad), (0, 0)))
        inputs.append(aux_ids)
        in_specs.append(pl.BlockSpec((tile, 1), lambda i: (i, 0)))

    # Parameter tables: full-array blocks, VMEM-resident across the grid.
    def _const_spec(arr):
        nd = arr.ndim
        return pl.BlockSpec(arr.shape, lambda *_: (0,) * nd)

    inputs.append(word_table)
    in_specs.append(_const_spec(word_table))
    d_total = dw

    if has_char:
        char_table = params["char_table"]
        conv_w = params["char_conv_w"]
        conv_b = params["char_conv_b"].reshape(1, -1)
        inputs += [char_table, conv_w, conv_b]
        in_specs += [_const_spec(char_table), _const_spec(conv_w),
                     _const_spec(conv_b)]
        d_total += dc_out

    for aid, _ in aux_items:
        tbl = params["aux_tables"][aid]
        inputs.append(tbl)
        in_specs.append(_const_spec(tbl))
        d_total += tbl.shape[1]

    d_pad = _round_up(d_total, 128)    # lane-dense, unmasked output stores

    kernel = _make_token_encoder_kernel(has_char=has_char, n_aux=n_aux)

    out = pl.pallas_call(
        kernel,
        out_shape=jax.ShapeDtypeStruct((npad, d_pad), jnp.float32),
        grid=(npad // tile,),
        in_specs=in_specs,
        out_specs=pl.BlockSpec((tile, d_pad), lambda i: (i, 0)),
        compiler_params=pltpu.CompilerParams(
            dimension_semantics=("parallel",),
            vmem_limit_bytes=32 * 1024 * 1024),
    )(*inputs)

    # Padded tokens (id 0) compute real rows; they are trimmed here before any
    # downstream consumer can see them, as is the lane padding.
    return out[:n, :d_total].reshape(b, s, d_total)


# -----------------------------------------------------------------------------
# Pure-JAX reference (for correctness checking only)
# -----------------------------------------------------------------------------
def reference_forward(params, seq_inputs, char_seq_inputs=None,
                      aux_seq_inputs=None):
    parts = [params["word_table"][seq_inputs]]
    if char_seq_inputs is not None:
        c = params["char_table"][char_seq_inputs]             # (B,S,L,Din)
        w = params["char_conv_w"]                             # (K,Din,Dout)
        k_w = w.shape[0]
        l = c.shape[2]
        out_len = l - k_w + 1
        conv = jnp.zeros(c.shape[:2] + (out_len, w.shape[2]), jnp.float32)
        for k in range(k_w):
            conv = conv + jnp.einsum("bsld,do->bslo",
                                     c[:, :, k:k + out_len, :], w[k])
        conv = jnp.maximum(conv + params["char_conv_b"], 0.0)
        parts.append(jnp.max(conv, axis=2))
    if aux_seq_inputs:
        for aid, a in aux_seq_inputs.items():
            parts.append(params["aux_tables"][aid][a])
    return jnp.concatenate(parts, axis=2)


# -----------------------------------------------------------------------------
# Deterministic parameter init + example run
# -----------------------------------------------------------------------------
def make_params(key, *, word_vocab, word_dim, char_vocab, char_dim_in,
                char_dim_out, char_kernel, aux_specs):
    keys = jax.random.split(key, 5 + len(aux_specs))
    params = {
        "word_table": jax.random.normal(keys[0], (word_vocab, word_dim),
                                        jnp.float32) * 0.1,
        "char_table": jax.random.normal(keys[1], (char_vocab, char_dim_in),
                                        jnp.float32) * 0.1,
        "char_conv_w": jax.random.normal(
            keys[2], (char_kernel, char_dim_in, char_dim_out),
            jnp.float32) * 0.1,
        "char_conv_b": jax.random.normal(keys[3], (char_dim_out,),
                                         jnp.float32) * 0.01,
        "aux_tables": {},
    }
    for i, (aid, (v, d)) in enumerate(sorted(aux_specs.items())):
        params["aux_tables"][aid] = jax.random.normal(
            keys[5 + i], (v, d), jnp.float32) * 0.1
    return params


if __name__ == "__main__":
    B, S, L = 2, 8, 12
    WORD_VOCAB, WORD_DIM = 50, 32
    CHAR_VOCAB, CHAR_DIM_IN, CHAR_DIM_OUT, CHAR_K = 30, 16, 24, 3
    AUX_SPECS = {"pos": (40, 16)}

    key = jax.random.PRNGKey(0)
    kp, k1, k2, k3 = jax.random.split(key, 4)

    params = make_params(
        kp, word_vocab=WORD_VOCAB, word_dim=WORD_DIM, char_vocab=CHAR_VOCAB,
        char_dim_in=CHAR_DIM_IN, char_dim_out=CHAR_DIM_OUT,
        char_kernel=CHAR_K, aux_specs=AUX_SPECS)

    seq_inputs = jax.random.randint(k1, (B, S), 0, WORD_VOCAB, jnp.int32)
    char_seq_inputs = jax.random.randint(k2, (B, S, L), 0, CHAR_VOCAB,
                                         jnp.int32)
    aux_seq_inputs = {
        "pos": jax.random.randint(k3, (B, S), 0, AUX_SPECS["pos"][0],
                                  jnp.int32)
    }

    out = token_encoder_forward(params, seq_inputs, char_seq_inputs,
                                aux_seq_inputs, char_batch_size=1)
    out = jax.block_until_ready(out)

    expected_dim = WORD_DIM + CHAR_DIM_OUT + sum(d for _, d in
                                                 AUX_SPECS.values())
    assert out.shape == (B, S, expected_dim), out.shape
    assert out.dtype == jnp.float32

    # word-embedding slice must match a direct table gather
    ref_word = params["word_table"][seq_inputs]
    assert jnp.allclose(out[..., :WORD_DIM], ref_word, atol=1e-4), (
        float(jnp.max(jnp.abs(out[..., :WORD_DIM] - ref_word))))

    # full fused output vs pure-JAX reference
    ref = reference_forward(params, seq_inputs, char_seq_inputs,
                            aux_seq_inputs)
    assert jnp.allclose(out, ref, atol=2e-3), (
        float(jnp.max(jnp.abs(out - ref))))

    print("KERNEL_OK")
</pallas_src>

<mosaic_0001>
module attributes {stable_mosaic.version = 11 : i64} {
  func.func @kernel(%arg0: i32, %arg1: memref<16x1xi32, #tpu.memory_space<vmem>>, %arg2: memref<16x12x1xi32, #tpu.memory_space<vmem>>, %arg3: memref<16x1xi32, #tpu.memory_space<vmem>>, %arg4: memref<50x32xf32, #tpu.memory_space<vmem>>, %arg5: memref<30x16xf32, #tpu.memory_space<vmem>>, %arg6: memref<3x16x24xf32, #tpu.memory_space<vmem>>, %arg7: memref<1x24xf32, #tpu.memory_space<vmem>>, %arg8: memref<40x16xf32, #tpu.memory_space<vmem>>, %arg9: memref<16x128xf32, #tpu.memory_space<vmem>>) attributes {dimension_semantics = [#tpu.dimension_semantics<parallel>], iteration_bounds = array<i64: 1>, scalar_prefetch = 0 : i64, scratch_operands = 0 : i64, tpu.core_type = #tpu.core_type<tc>, window_params = [{transform_indices = @transform_0, window_bounds = array<i64: 16, 1>}, {transform_indices = @transform_1, window_bounds = array<i64: 16, 12, 1>}, {transform_indices = @transform_2, window_bounds = array<i64: 16, 1>}, {pipeline_mode = #tpu.pipeline_mode<synchronous>, transform_indices = @transform_3, window_bounds = array<i64: 50, 32>}, {pipeline_mode = #tpu.pipeline_mode<synchronous>, transform_indices = @transform_4, window_bounds = array<i64: 30, 16>}, {pipeline_mode = #tpu.pipeline_mode<synchronous>, transform_indices = @transform_5, window_bounds = array<i64: 3, 16, 24>}, {pipeline_mode = #tpu.pipeline_mode<synchronous>, transform_indices = @transform_6, window_bounds = array<i64: 1, 24>}, {pipeline_mode = #tpu.pipeline_mode<synchronous>, transform_indices = @transform_7, window_bounds = array<i64: 40, 16>}, {transform_indices = @transform_8, window_bounds = array<i64: 16, 128>}]} {
    %c0 = arith.constant 0 : index
    %c0_0 = arith.constant 0 : index
    %0 = vector.load %arg1[%c0, %c0_0] : memref<16x1xi32, #tpu.memory_space<vmem>>, vector<16x1xi32>
    %c0_1 = arith.constant 0 : index
    %c0_2 = arith.constant 0 : index
    %1 = vector.load %arg4[%c0_1, %c0_2] : memref<50x32xf32, #tpu.memory_space<vmem>>, vector<50x32xf32>
    %2 = tpu.iota {dimensions = array<i32: 1>} : vector<16x50xi32>
    %3 = vector.broadcast %0 : vector<16x1xi32> to vector<16x50xi32>
    %4 = arith.cmpi eq, %2, %3 : vector<16x50xi32>
    %5 = arith.extui %4 : vector<16x50xi1> to vector<16x50xi32>
    %6 = arith.sitofp %5 : vector<16x50xi32> to vector<16x50xf32>
    %cst = arith.constant dense<0.000000e+00> : vector<16x32xf32>
    %7 = tpu.matmul %6, %1, %cst {dimension_numbers = #tpu.dot_dimension_numbers<[1], [0], [0], [1], [0, 0, 1, 1], [], []>} : vector<16x50xf32>, vector<50x32xf32>, vector<16x32xf32> -> vector<16x32xf32>
    %8 = tpu.iota {dimensions = array<i32: 0>} : vector<32x128xi32>
    %9 = tpu.iota {dimensions = array<i32: 1>} : vector<32x128xi32>
    %c0_i32 = arith.constant 0 : i32
    %10 = vector.broadcast %c0_i32 : i32 to vector<32x128xi32>
    %11 = arith.addi %8, %10 : vector<32x128xi32>
    %12 = arith.cmpi eq, %9, %11 : vector<32x128xi32>
    %13 = arith.extui %12 : vector<32x128xi1> to vector<32x128xi32>
    %14 = arith.sitofp %13 : vector<32x128xi32> to vector<32x128xf32>
    %cst_3 = arith.constant dense<0.000000e+00> : vector<16x128xf32>
    %15 = tpu.matmul %7, %14, %cst_3 {dimension_numbers = #tpu.dot_dimension_numbers<[1], [0], [0], [1], [0, 0, 1, 1], [], []>} : vector<16x32xf32>, vector<32x128xf32>, vector<16x128xf32> -> vector<16x128xf32>
    %c0_4 = arith.constant 0 : index
    %c0_5 = arith.constant 0 : index
    %c0_6 = arith.constant 0 : index
    %16 = vector.load %arg2[%c0_4, %c0_5, %c0_6] : memref<16x12x1xi32, #tpu.memory_space<vmem>>, vector<16x12x1xi32>
    %17 = tpu.iota {dimensions = array<i32: 2>} : vector<16x12x30xi32>
    %18 = vector.broadcast %16 : vector<16x12x1xi32> to vector<16x12x30xi32>
    %19 = arith.cmpi eq, %17, %18 : vector<16x12x30xi32>
    %20 = arith.extui %19 : vector<16x12x30xi1> to vector<16x12x30xi32>
    %21 = arith.sitofp %20 : vector<16x12x30xi32> to vector<16x12x30xf32>
    %c0_7 = arith.constant 0 : index
    %c0_8 = arith.constant 0 : index
    %22 = vector.load %arg5[%c0_7, %c0_8] : memref<30x16xf32, #tpu.memory_space<vmem>>, vector<30x16xf32>
    "tpu.trace_start"() <{level = 10 : i32, message = "tlv,vd->tld"}> : () -> ()
    %cst_9 = arith.constant dense<0.000000e+00> : vector<16x12x16xf32>
    %23 = tpu.matmul %21, %22, %cst_9 {dimension_numbers = #tpu.dot_dimension_numbers<[2], [0], [0, 1], [1], [0, 0, 0, 1, 1, 1], [], []>} : vector<16x12x30xf32>, vector<30x16xf32>, vector<16x12x16xf32> -> vector<16x12x16xf32>
    %cst_10 = arith.constant 0.000000e+00 : f32
    "tpu.trace_stop"() : () -> ()
    %24 = vector.broadcast %cst_10 : f32 to vector<16x10x24xf32>
    %25 = vector.extract_strided_slice %23 {offsets = [0, 0, 0], sizes = [16, 10, 16], strides = [1, 1, 1]} : vector<16x12x16xf32> to vector<16x10x16xf32>
    %c0_11 = arith.constant 0 : index
    %c0_12 = arith.constant 0 : index
    %c0_13 = arith.constant 0 : index
    %26 = vector.load %arg6[%c0_11, %c0_12, %c0_13] : memref<3x16x24xf32, #tpu.memory_space<vmem>>, vector<1x16x24xf32>
    %27 = vector.shape_cast %26 : vector<1x16x24xf32> to vector<16x24xf32>
    "tpu.trace_start"() <{level = 10 : i32, message = "tld,do->tlo"}> : () -> ()
    %cst_14 = arith.constant dense<0.000000e+00> : vector<16x10x24xf32>
    %28 = tpu.matmul %25, %27, %cst_14 {dimension_numbers = #tpu.dot_dimension_numbers<[2], [0], [0, 1], [1], [0, 0, 0, 1, 1, 1], [], []>} : vector<16x10x16xf32>, vector<16x24xf32>, vector<16x10x24xf32> -> vector<16x10x24xf32>
    "tpu.trace_stop"() : () -> ()
    %29 = arith.addf %24, %28 : vector<16x10x24xf32>
    %30 = vector.extract_strided_slice %23 {offsets = [0, 1, 0], sizes = [16, 10, 16], strides = [1, 1, 1]} : vector<16x12x16xf32> to vector<16x10x16xf32>
    %c1 = arith.constant 1 : index
    %c0_15 = arith.constant 0 : index
    %c0_16 = arith.constant 0 : index
    %31 = vector.load %arg6[%c1, %c0_15, %c0_16] : memref<3x16x24xf32, #tpu.memory_space<vmem>>, vector<1x16x24xf32>
    %32 = vector.shape_cast %31 : vector<1x16x24xf32> to vector<16x24xf32>
    "tpu.trace_start"() <{level = 10 : i32, message = "tld,do->tlo"}> : () -> ()
    %cst_17 = arith.constant dense<0.000000e+00> : vector<16x10x24xf32>
    %33 = tpu.matmul %30, %32, %cst_17 {dimension_numbers = #tpu.dot_dimension_numbers<[2], [0], [0, 1], [1], [0, 0, 0, 1, 1, 1], [], []>} : vector<16x10x16xf32>, vector<16x24xf32>, vector<16x10x24xf32> -> vector<16x10x24xf32>
    "tpu.trace_stop"() : () -> ()
    %34 = arith.addf %29, %33 : vector<16x10x24xf32>
    %35 = vector.extract_strided_slice %23 {offsets = [0, 2, 0], sizes = [16, 10, 16], strides = [1, 1, 1]} : vector<16x12x16xf32> to vector<16x10x16xf32>
    %c2 = arith.constant 2 : index
    %c0_18 = arith.constant 0 : index
    %c0_19 = arith.constant 0 : index
    %36 = vector.load %arg6[%c2, %c0_18, %c0_19] : memref<3x16x24xf32, #tpu.memory_space<vmem>>, vector<1x16x24xf32>
    %37 = vector.shape_cast %36 : vector<1x16x24xf32> to vector<16x24xf32>
    "tpu.trace_start"() <{level = 10 : i32, message = "tld,do->tlo"}> : () -> ()
    %cst_20 = arith.constant dense<0.000000e+00> : vector<16x10x24xf32>
    %38 = tpu.matmul %35, %37, %cst_20 {dimension_numbers = #tpu.dot_dimension_numbers<[2], [0], [0, 1], [1], [0, 0, 0, 1, 1, 1], [], []>} : vector<16x10x16xf32>, vector<16x24xf32>, vector<16x10x24xf32> -> vector<16x10x24xf32>
    "tpu.trace_stop"() : () -> ()
    %39 = arith.addf %34, %38 : vector<16x10x24xf32>
    %c0_21 = arith.constant 0 : index
    %c0_22 = arith.constant 0 : index
    %40 = vector.load %arg7[%c0_21, %c0_22] : memref<1x24xf32, #tpu.memory_space<vmem>>, vector<1x24xf32>
    %41 = vector.shape_cast %40 : vector<1x24xf32> to vector<1x1x24xf32>
    %42 = vector.broadcast %41 : vector<1x1x24xf32> to vector<16x10x24xf32>
    %43 = arith.addf %39, %42 : vector<16x10x24xf32>
    %cst_23 = arith.constant 0.000000e+00 : f32
    %44 = vector.broadcast %cst_23 : f32 to vector<16x10x24xf32>
    %45 = arith.maximumf %43, %44 : vector<16x10x24xf32>
    %cst_24 = arith.constant dense<0xFF800000> : vector<16x24xf32>
    %46 = vector.multi_reduction <maximumf>, %45, %cst_24 [1] : vector<16x10x24xf32> to vector<16x24xf32>
    %47 = tpu.iota {dimensions = array<i32: 0>} : vector<24x128xi32>
    %48 = tpu.iota {dimensions = array<i32: 1>} : vector<24x128xi32>
    %c32_i32 = arith.constant 32 : i32
    %49 = vector.broadcast %c32_i32 : i32 to vector<24x128xi32>
    %50 = arith.addi %47, %49 : vector<24x128xi32>
    %51 = arith.cmpi eq, %48, %50 : vector<24x128xi32>
    %52 = arith.extui %51 : vector<24x128xi1> to vector<24x128xi32>
    %53 = arith.sitofp %52 : vector<24x128xi32> to vector<24x128xf32>
    %cst_25 = arith.constant dense<0.000000e+00> : vector<16x128xf32>
    %54 = tpu.matmul %46, %53, %cst_25 {dimension_numbers = #tpu.dot_dimension_numbers<[1], [0], [0], [1], [0, 0, 1, 1], [], []>} : vector<16x24xf32>, vector<24x128xf32>, vector<16x128xf32> -> vector<16x128xf32>
    %55 = arith.addf %15, %54 : vector<16x128xf32>
    %c0_26 = arith.constant 0 : index
    %c0_27 = arith.constant 0 : index
    %56 = vector.load %arg3[%c0_26, %c0_27] : memref<16x1xi32, #tpu.memory_space<vmem>>, vector<16x1xi32>
    %c0_28 = arith.constant 0 : index
    %c0_29 = arith.constant 0 : index
    %57 = vector.load %arg8[%c0_28, %c0_29] : memref<40x16xf32, #tpu.memory_space<vmem>>, vector<40x16xf32>
    %58 = tpu.iota {dimensions = array<i32: 1>} : vector<16x40xi32>
    %59 = vector.broadcast %56 : vector<16x1xi32> to vector<16x40xi32>
    %60 = arith.cmpi eq, %58, %59 : vector<16x40xi32>
    %61 = arith.extui %60 : vector<16x40xi1> to vector<16x40xi32>
    %62 = arith.sitofp %61 : vector<16x40xi32> to vector<16x40xf32>
    %cst_30 = arith.constant dense<0.000000e+00> : vector<16x16xf32>
    %63 = tpu.matmul %62, %57, %cst_30 {dimension_numbers = #tpu.dot_dimension_numbers<[1], [0], [0], [1], [0, 0, 1, 1], [], []>} : vector<16x40xf32>, vector<40x16xf32>, vector<16x16xf32> -> vector<16x16xf32>
    %64 = tpu.iota {dimensions = array<i32: 0>} : vector<16x128xi32>
    %65 = tpu.iota {dimensions = array<i32: 1>} : vector<16x128xi32>
    %c56_i32 = arith.constant 56 : i32
    %66 = vector.broadcast %c56_i32 : i32 to vector<16x128xi32>
    %67 = arith.addi %64, %66 : vector<16x128xi32>
    %68 = arith.cmpi eq, %65, %67 : vector<16x128xi32>
    %69 = arith.extui %68 : vector<16x128xi1> to vector<16x128xi32>
    %70 = arith.sitofp %69 : vector<16x128xi32> to vector<16x128xf32>
    %cst_31 = arith.constant dense<0.000000e+00> : vector<16x128xf32>
    %71 = tpu.matmul %63, %70, %cst_31 {dimension_numbers = #tpu.dot_dimension_numbers<[1], [0], [0], [1], [0, 0, 1, 1], [], []>} : vector<16x16xf32>, vector<16x128xf32>, vector<16x128xf32> -> vector<16x128xf32>
    %72 = arith.addf %55, %71 : vector<16x128xf32>
    %c0_32 = arith.constant 0 : index
    %c0_33 = arith.constant 0 : index
    %73 = vector.load %arg9[%c0_32, %c0_33] : memref<16x128xf32, #tpu.memory_space<vmem>>, vector<16x128xf32>
    tpu.vector_store %arg9[%c0_32, %c0_33], %72 {strides = array<i32>} : memref<16x128xf32, #tpu.memory_space<vmem>>, vector<16x128xf32>,
    return
  }
  func.func @transform_0(%arg0: i32) -> (i32, i32) {
    %c0_i32 = arith.constant 0 : i32
    %c0_i32_0 = arith.constant 0 : i32
    return %arg0, %c0_i32 : i32, i32
  }
  func.func @transform_1(%arg0: i32) -> (i32, i32, i32) {
    %c0_i32 = arith.constant 0 : i32
    %c0_i32_0 = arith.constant 0 : i32
    %c0_i32_1 = arith.constant 0 : i32
    return %arg0, %c0_i32, %c0_i32_0 : i32, i32, i32
  }
  func.func @transform_2(%arg0: i32) -> (i32, i32) {
    %c0_i32 = arith.constant 0 : i32
    %c0_i32_0 = arith.constant 0 : i32
    return %arg0, %c0_i32 : i32, i32
  }
  func.func @transform_3(%arg0: i32) -> (i32, i32) {
    %c0_i32 = arith.constant 0 : i32
    %c0_i32_0 = arith.constant 0 : i32
    %c0_i32_1 = arith.constant 0 : i32
    return %c0_i32, %c0_i32_0 : i32, i32
  }
  func.func @transform_4(%arg0: i32) -> (i32, i32) {
    %c0_i32 = arith.constant 0 : i32
    %c0_i32_0 = arith.constant 0 : i32
    %c0_i32_1 = arith.constant 0 : i32
    return %c0_i32, %c0_i32_0 : i32, i32
  }
  func.func @transform_5(%arg0: i32) -> (i32, i32, i32) {
    %c0_i32 = arith.constant 0 : i32
    %c0_i32_0 = arith.constant 0 : i32
    %c0_i32_1 = arith.constant 0 : i32
    %c0_i32_2 = arith.constant 0 : i32
    return %c0_i32, %c0_i32_0, %c0_i32_1 : i32, i32, i32
  }
  func.func @transform_6(%arg0: i32) -> (i32, i32) {
    %c0_i32 = arith.constant 0 : i32
    %c0_i32_0 = arith.constant 0 : i32
    %c0_i32_1 = arith.constant 0 : i32
    return %c0_i32, %c0_i32_0 : i32, i32
  }
  func.func @transform_7(%arg0: i32) -> (i32, i32) {
    %c0_i32 = arith.constant 0 : i32
    %c0_i32_0 = arith.constant 0 : i32
    %c0_i32_1 = arith.constant 0 : i32
    return %c0_i32, %c0_i32_0 : i32, i32
  }
  func.func @transform_8(%arg0: i32) -> (i32, i32) {
    %c0_i32 = arith.constant 0 : i32
    %c0_i32_0 = arith.constant 0 : i32
    return %arg0, %c0_i32 : i32, i32
  }
}

</mosaic_0001>

<llo_original>
// kernel: tpu_custom_call.1
$region0: #{tpu_custom_call.1}
  #allocation0 [shape = 'u32[]', space=smem, size = 0x4, offset = 0x4, fixed_abs, tag = 'smem constant byte address 0x4 - core index']
  #allocation1 [shape = 'u32[144,128]{1,0:T(1,128)}', space=vmem, size = 0x12000, scoped, tag = 'internal scratch']
  %s0 = inlined_call_operand.vmem [shape: s32[16,1], index: 0, kind: input, shape index: {}]
  %s1 = inlined_call_operand.vmem [shape: s32[16,12,1], index: 1, kind: input, shape index: {}]
  %s2 = inlined_call_operand.vmem [shape: s32[16,1], index: 2, kind: input, shape index: {}]
  %s3 = inlined_call_operand.vmem [shape: f32[50,32], index: 3, kind: input, shape index: {}]
  %s4 = inlined_call_operand.vmem [shape: f32[30,16], index: 4, kind: input, shape index: {}]
  %s5 = inlined_call_operand.vmem [shape: f32[3,16,24], index: 5, kind: input, shape index: {}]
  %s6 = inlined_call_operand.vmem [shape: f32[1,24], index: 6, kind: input, shape index: {}]
  %s7 = inlined_call_operand.vmem [shape: f32[40,16], index: 7, kind: input, shape index: {}]
  %s8 = inlined_call_operand.hbm [shape: f32[16,128], index: 8, kind: output, shape index: {}]
  %s9 = sld [smem:[#allocation0]]
  $region42: #{tpu_custom_call.1} parent=0
    _
  %s11 = ssub.s32 1, %s9
  %s12 = scalar_select 0, %s11, %s9
  $region1: #{tpu_custom_call.1} parent=0
    #allocation2 [shape = 'u8[8192]{0}', space=vmem, size = 0x2000, scoped, tag = 'output window, operand 0, single buffered']
    #allocation3 [shape = 's32[1]{0}', space=sflag, size = 0x4, scoped, tag = 'scoped memory for tpu_custom_call.1']
    %13 = vsyncpa [#allocation3], 0
    // Predicated region
    $region2: #{tpu_custom_call.1} parent=1 // pred_check
      _
    $region3: #{tpu_custom_call.1} parent=1 // pred_check_branch
      %15 = sbr.rel (0) target = $region5
    $region4: #{tpu_custom_call.1} parent=1 // pred_region
      _
    $region5: #{tpu_custom_call.1} parent=1 // pred_fallthru
      _
    // Predicated region
    $region6: #{tpu_custom_call.1} parent=1 // pred_check
      _
    $region7: #{tpu_custom_call.1} parent=1 // pred_check_branch
      %17 = sbr.rel (0) target = $region9
    $region8: #{tpu_custom_call.1} parent=1 // pred_region
      _
    $region9: #{tpu_custom_call.1} parent=1 // pred_fallthru
      _
    // Predicated region
    $region10: #{tpu_custom_call.1} parent=1 // pred_check
      _
    $region11: #{tpu_custom_call.1} parent=1 // pred_check_branch
      %19 = sbr.rel (0) target = $region13
    $region12: #{tpu_custom_call.1} parent=1 // pred_region
      _
    $region13: #{tpu_custom_call.1} parent=1 // pred_fallthru
      _
    // Predicated region
    $region14: #{tpu_custom_call.1} parent=1 // pred_check
      _
    $region15: #{tpu_custom_call.1} parent=1 // pred_check_branch
      %21 = sbr.rel (0) target = $region17
    $region16: #{tpu_custom_call.1} parent=1 // pred_region
      _
    $region17: #{tpu_custom_call.1} parent=1 // pred_fallthru
      _
    // Predicated region
    $region18: #{tpu_custom_call.1} parent=1 // pred_check
      _
    $region19: #{tpu_custom_call.1} parent=1 // pred_check_branch
      %23 = sbr.rel (0) target = $region21
    $region20: #{tpu_custom_call.1} parent=1 // pred_region
      _
    $region21: #{tpu_custom_call.1} parent=1 // pred_fallthru
      _
    // Predicated region
    $region22: #{tpu_custom_call.1} parent=1 // pred_check
      _
    $region23: #{tpu_custom_call.1} parent=1 // pred_check_branch
      %25 = sbr.rel (0) target = $region25
    $region24: #{tpu_custom_call.1} parent=1 // pred_region
      _
    $region25: #{tpu_custom_call.1} parent=1 // pred_fallthru
      _
    // Predicated region
    $region26: #{tpu_custom_call.1} parent=1 // pred_check
      _
    $region27: #{tpu_custom_call.1} parent=1 // pred_check_branch
      %27 = sbr.rel (0) target = $region29
    $region28: #{tpu_custom_call.1} parent=1 // pred_region
      _
    $region29: #{tpu_custom_call.1} parent=1 // pred_fallthru
      _
    // Predicated region
    $region30: #{tpu_custom_call.1} parent=1 // pred_check
      _
    $region31: #{tpu_custom_call.1} parent=1 // pred_check_branch
      %29 = sbr.rel (0) target = $region33
    $region32: #{tpu_custom_call.1} parent=1 // pred_region
      _
    $region33: #{tpu_custom_call.1} parent=1 // pred_fallthru
      _
    %v30 = vld [vmem:[%s0] sm:$0xff]
    %v31 = vld [vmem:[%s0 + $0x8] sm:$0xff]
    %v32 = vld [vmem:[%s3] sm:$0xff]
    %v33 = vld [vmem:[%s3 + $0x8] sm:$0xff]
    %v34 = vld [vmem:[%s3 + $0x10] sm:$0xff]
    %v35 = vld [vmem:[%s3 + $0x18] sm:$0xff]
    %v36 = vld [vmem:[%s3 + $0x20] sm:$0xff]
    %v37 = vld [vmem:[%s3 + $0x28] sm:$0xff]
    %v38 = vld [vmem:[%s3 + $0x30] sm:$0x3]
    %v39 = vlaneseq
    %v40 = vand.u32 %v39, 127
    %41 = vset.pattern.permute.xlu0 0
    %42 = vperm.xlu0 %41, %v30
    %v43 = vpop.permute.xlu0 %42
    %44 = vset.pattern.permute.xlu0 0
    %45 = vperm.xlu0 %44, %v31
    %v46 = vpop.permute.xlu0 %45
    %vm47 = vcmp.eq.s32.totalorder %v40, %v43
    %vm48 = vcmp.eq.s32.totalorder %v40, %v46
    %v49 = vsel %vm47, 1, 0
    %v50 = vsel %vm48, 1, 0
    %v51 = vcvt.s32.f32 %v49
    %v52 = vcvt.s32.f32 %v50
    %vm53 = vcmask 408576
    %v55 = vsel %vm53, %v51, 0
    %v58 = vsel %vm53, %v52, 0
    %vm60 = vcmask 1041408
    %v62 = vsel %vm60, %v38, 0
    %64 = vmatprep.subr.mxu0 0.0
    %65 = vmatpush1.msra.mxu0 %v32
    %66 = vmatprep.subr.mxu0 0.0
    %67 = vmatpush1.msra.mxu0 %v33
    %68 = vmatprep.subr.mxu0 0.0
    %69 = vmatpush1.msra.mxu0 %v34
    %70 = vmatprep.subr.mxu0 0.0
    %71 = vmatpush1.msra.mxu0 %v35
    %72 = vmatprep.subr.mxu0 0.0
    %73 = vmatpush1.msra.mxu0 %v36
    %74 = vmatprep.subr.mxu0 0.0
    %75 = vmatpush1.msra.mxu0 %v37
    %76 = vmatprep.subr.mxu0 0.0
    %77 = vmatpush1.msra.mxu0 %v62
    %78 = vmatprep.subr.mxu0 0.0
    %79 = vmatpush1.msra.mxu0 0.0
    %80 = vmatprep.subr.mxu0 0.0
    %81 = vmatpush1.msra.mxu0 0.0
    %82 = vmatprep.subr.mxu0 0.0
    %83 = vmatpush1.msra.mxu0 0.0
    %84 = vmatprep.subr.mxu0 0.0
    %85 = vmatpush1.msra.mxu0 0.0
    %86 = vmatprep.subr.mxu0 0.0
    %87 = vmatpush1.msra.mxu0 0.0
    %88 = vmatprep.subr.mxu0 0.0
    %89 = vmatpush1.msra.mxu0 0.0
    %90 = vmatprep.subr.mxu0 0.0
    %91 = vmatpush1.msra.mxu0 0.0
    %92 = vmatprep.subr.mxu0 0.0
    %93 = vmatpush1.msra.mxu0 0.0
    %94 = vmatprep.subr.mxu0 0.0
    %95 = vmatpush1.msra.mxu0 0.0
    %96 = vmatprep.subr.mxu0 0.0
    %97 = vmatpush1.msra.mxu0 0.0
    %98 = vmatprep.subr.mxu0 0.0
    %99 = vmatpush1.msra.mxu0 0.0
    %100 = vmatprep.subr.mxu0 0.0
    %101 = vmatpush1.msra.mxu0 0.0
    %102 = vmatprep.subr.mxu0 0.0
    %103 = vmatpush1.msra.mxu0 0.0
    %104 = vmatprep.subr.mxu0 0.0
    %105 = vmatpush1.msra.mxu0 0.0
    %106 = vmatprep.subr.mxu0 0.0
    %107 = vmatpush1.msra.mxu0 0.0
    %108 = vmatprep.subr.mxu0 0.0
    %109 = vmatpush1.msra.mxu0 0.0
    %110 = vmatprep.subr.mxu0 0.0
    %111 = vmatpush1.msra.mxu0 0.0
    %112 = vmatprep.subr.mxu0 0.0
    %113 = vmatpush1.msra.mxu0 0.0
    %114 = vmatprep.subr.mxu0 0.0
    %115 = vmatpush1.msra.mxu0 0.0
    %116 = vmatprep.subr.mxu0 0.0
    %117 = vmatpush1.msra.mxu0 0.0
    %118 = vmatprep.subr.mxu0 0.0
    %119 = vmatpush1.msra.mxu0 0.0
    %120 = vmatprep.subr.mxu0 0.0
    %121 = vmatpush1.msra.mxu0 0.0
    %122 = vmatprep.subr.mxu0 0.0
    %123 = vmatpush1.msra.mxu0 0.0
    %124 = vmatprep.subr.mxu0 0.0
    %125 = vmatpush1.msra.mxu0 0.0
    %126 = vmatprep.subr.mxu0 0.0
    %127 = vmatpush1.msra.mxu0 0.0
    %128 = vmatprep.mubr.f32.mxu0 0.0
    %129 = vmatmul.mubr.f32.gmra.mrb[0].mxu0 %v55
    %v130 = vpop.f32.mrb[0].mxu0
    %v131 = vadd.f32 0.0, %v130
    %v132 = vpop.f32.mrb[0].mxu0
    %133 = vmatprep.mubr.f32.mxu0 0.0
    %134 = vmatmul.mubr.f32.gmra.mrb[0].mxu0 %v58
    %v135 = vpop.f32.mrb[0].mxu0
    %v136 = vadd.f32 0.0, %v135
    %v137 = vpop.f32.mrb[0].mxu0
    %138 = vdwg.mxu0
    %v139 = vlaneseq
    %v140 = vshrl.u32 %v139, 7
    %v141 = vadd.s32 %v140, 8
    %v142 = vadd.s32 %v140, 16
    %v143 = vadd.s32 %v140, 24
    %vm144 = vcmp.eq.s32.totalorder %v40, %v140
    %vm145 = vcmp.eq.s32.totalorder %v40, %v141
    %vm146 = vcmp.eq.s32.totalorder %v40, %v142
    %vm147 = vcmp.eq.s32.totalorder %v40, %v143
    %v148 = vsel %vm144, 1, 0
    %v149 = vsel %vm145, 1, 0
    %v150 = vsel %vm146, 1, 0
    %v151 = vsel %vm147, 1, 0
    %v152 = vcvt.s32.f32 %v148
    %v153 = vcvt.s32.f32 %v149
    %v154 = vcvt.s32.f32 %v150
    %v155 = vcvt.s32.f32 %v151
    %v156 = vld [vmem:[%s1] sm:$0xff]
    %v157 = vld [vmem:[%s1 + $0x8] sm:$0xf]
    %v158 = vld [vmem:[%s1 + $0x10] sm:$0xff]
    %v159 = vld [vmem:[%s1 + $0x18] sm:$0xf]
    %v160 = vld [vmem:[%s1 + $0x20] sm:$0xff]
    %v161 = vld [vmem:[%s1 + $0x28] sm:$0xf]
    %v162 = vld [vmem:[%s1 + $0x30] sm:$0xff]
    %v163 = vld [vmem:[%s1 + $0x38] sm:$0xf]
    %v164 = vld [vmem:[%s1 + $0x40] sm:$0xff]
    %v165 = vld [vmem:[%s1 + $0x48] sm:$0xf]
    %v166 = vld [vmem:[%s1 + $0x50] sm:$0xff]
    %v167 = vld [vmem:[%s1 + $0x58] sm:$0xf]
    %v168 = vld [vmem:[%s1 + $0x60] sm:$0xff]
    %v169 = vld [vmem:[%s1 + $0x68] sm:$0xf]
    %v170 = vld [vmem:[%s1 + $0x70] sm:$0xff]
    %v171 = vld [vmem:[%s1 + $0x78] sm:$0xf]
    %v172 = vld [vmem:[%s1 + $0x80] sm:$0xff]
    %v173 = vld [vmem:[%s1 + $0x88] sm:$0xf]
    %v174 = vld [vmem:[%s1 + $0x90] sm:$0xff]
    %v175 = vld [vmem:[%s1 + $0x98] sm:$0xf]
    %v176 = vld [vmem:[%s1 + $0xa0] sm:$0xff]
    %v177 = vld [vmem:[%s1 + $0xa8] sm:$0xf]
    %v178 = vld [vmem:[%s1 + $0xb0] sm:$0xff]
    %v179 = vld [vmem:[%s1 + $0xb8] sm:$0xf]
    %v180 = vld [vmem:[%s1 + $0xc0] sm:$0xff]
    %v181 = vld [vmem:[%s1 + $0xc8] sm:$0xf]
    %v182 = vld [vmem:[%s1 + $0xd0] sm:$0xff]
    %v183 = vld [vmem:[%s1 + $0xd8] sm:$0xf]
    %v184 = vld [vmem:[%s1 + $0xe0] sm:$0xff]
    %v185 = vld [vmem:[%s1 + $0xe8] sm:$0xf]
    %v186 = vld [vmem:[%s1 + $0xf0] sm:$0xff]
    %v187 = vld [vmem:[%s1 + $0xf8] sm:$0xf]
    %188 = vset.pattern.permute.xlu0 0
    %189 = vperm.xlu0 %188, %v156
    %v190 = vpop.permute.xlu0 %189
    %191 = vset.pattern.permute.xlu0 0
    %192 = vperm.xlu0 %191, %v157
    %v193 = vpop.permute.xlu0 %192
    %194 = vset.pattern.permute.xlu0 0
    %195 = vperm.xlu0 %194, %v158
    %v196 = vpop.permute.xlu0 %195
    %197 = vset.pattern.permute.xlu0 0
    %198 = vperm.xlu0 %197, %v159
    %v199 = vpop.permute.xlu0 %198
    %200 = vset.pattern.permute.xlu0 0
    %201 = vperm.xlu0 %200, %v160
    %v202 = vpop.permute.xlu0 %201
    %203 = vset.pattern.permute.xlu0 0
    %204 = vperm.xlu0 %203, %v161
    %v205 = vpop.permute.xlu0 %204
    %206 = vset.pattern.permute.xlu0 0
    %207 = vperm.xlu0 %206, %v162
    %v208 = vpop.permute.xlu0 %207
    %209 = vset.pattern.permute.xlu0 0
    %210 = vperm.xlu0 %209, %v163
    %v211 = vpop.permute.xlu0 %210
    %212 = vset.pattern.permute.xlu0 0
    %213 = vperm.xlu0 %212, %v164
    %v214 = vpop.permute.xlu0 %213
    %215 = vset.pattern.permute.xlu0 0
    %216 = vperm.xlu0 %215, %v165
    %v217 = vpop.permute.xlu0 %216
    %218 = vset.pattern.permute.xlu0 0
    %219 = vperm.xlu0 %218, %v166
    %v220 = vpop.permute.xlu0 %219
    %221 = vset.pattern.permute.xlu0 0
    %222 = vperm.xlu0 %221, %v167
    %v223 = vpop.permute.xlu0 %222
    %224 = vset.pattern.permute.xlu0 0
    %225 = vperm.xlu0 %224, %v168
    %v226 = vpop.permute.xlu0 %225
    %227 = vset.pattern.permute.xlu0 0
    %228 = vperm.xlu0 %227, %v169
    %v229 = vpop.permute.xlu0 %228
    %230 = vset.pattern.permute.xlu0 0
    %231 = vperm.xlu0 %230, %v170
    %v232 = vpop.permute.xlu0 %231
    %233 = vset.pattern.permute.xlu0 0
    %234 = vperm.xlu0 %233, %v171
    %v235 = vpop.permute.xlu0 %234
    %236 = vset.pattern.permute.xlu0 0
    %237 = vperm.xlu0 %236, %v172
    %v238 = vpop.permute.xlu0 %237
    %239 = vset.pattern.permute.xlu0 0
    %240 = vperm.xlu0 %239, %v173
    %v241 = vpop.permute.xlu0 %240
    %242 = vset.pattern.permute.xlu0 0
    %243 = vperm.xlu0 %242, %v174
    %v244 = vpop.permute.xlu0 %243
    %245 = vset.pattern.permute.xlu0 0
    %246 = vperm.xlu0 %245, %v175
    %v247 = vpop.permute.xlu0 %246
    %248 = vset.pattern.permute.xlu0 0
    %249 = vperm.xlu0 %248, %v176
    %v250 = vpop.permute.xlu0 %249
    %251 = vset.pattern.permute.xlu0 0
    %252 = vperm.xlu0 %251, %v177
    %v253 = vpop.permute.xlu0 %252
    %254 = vset.pattern.permute.xlu0 0
    %255 = vperm.xlu0 %254, %v178
    %v256 = vpop.permute.xlu0 %255
    %257 = vset.pattern.permute.xlu0 0
    %258 = vperm.xlu0 %257, %v179
    %v259 = vpop.permute.xlu0 %258
    %260 = vset.pattern.permute.xlu0 0
    %261 = vperm.xlu0 %260, %v180
    %v262 = vpop.permute.xlu0 %261
    %263 = vset.pattern.permute.xlu0 0
    %264 = vperm.xlu0 %263, %v181
    %v265 = vpop.permute.xlu0 %264
    %266 = vset.pattern.permute.xlu0 0
    %267 = vperm.xlu0 %266, %v182
    %v268 = vpop.permute.xlu0 %267
    %269 = vset.pattern.permute.xlu0 0
    %270 = vperm.xlu0 %269, %v183
    %v271 = vpop.permute.xlu0 %270
    %272 = vset.pattern.permute.xlu0 0
    %273 = vperm.xlu0 %272, %v184
    %v274 = vpop.permute.xlu0 %273
    %275 = vset.pattern.permute.xlu0 0
    %276 = vperm.xlu0 %275, %v185
    %v277 = vpop.permute.xlu0 %276
    %278 = vset.pattern.permute.xlu0 0
    %279 = vperm.xlu0 %278, %v186
    %v280 = vpop.permute.xlu0 %279
    %281 = vset.pattern.permute.xlu0 0
    %282 = vperm.xlu0 %281, %v187
    %v283 = vpop.permute.xlu0 %282
    %vm284 = vcmp.eq.s32.totalorder %v40, %v190
    %vm285 = vcmp.eq.s32.totalorder %v40, %v193
    %vm286 = vcmp.eq.s32.totalorder %v40, %v196
    %vm287 = vcmp.eq.s32.totalorder %v40, %v199
    %vm288 = vcmp.eq.s32.totalorder %v40, %v202
    %vm289 = vcmp.eq.s32.totalorder %v40, %v205
    %vm290 = vcmp.eq.s32.totalorder %v40, %v208
    %vm291 = vcmp.eq.s32.totalorder %v40, %v211
    %vm292 = vcmp.eq.s32.totalorder %v40, %v214
    %vm293 = vcmp.eq.s32.totalorder %v40, %v217
    %vm294 = vcmp.eq.s32.totalorder %v40, %v220
    %vm295 = vcmp.eq.s32.totalorder %v40, %v223
    %vm296 = vcmp.eq.s32.totalorder %v40, %v226
    %vm297 = vcmp.eq.s32.totalorder %v40, %v229
    %vm298 = vcmp.eq.s32.totalorder %v40, %v232
    %vm299 = vcmp.eq.s32.totalorder %v40, %v235
    %vm300 = vcmp.eq.s32.totalorder %v40, %v238
    %vm301 = vcmp.eq.s32.totalorder %v40, %v241
    %vm302 = vcmp.eq.s32.totalorder %v40, %v244
    %vm303 = vcmp.eq.s32.totalorder %v40, %v247
    %vm304 = vcmp.eq.s32.totalorder %v40, %v250
    %vm305 = vcmp.eq.s32.totalorder %v40, %v253
    %vm306 = vcmp.eq.s32.totalorder %v40, %v256
    %vm307 = vcmp.eq.s32.totalorder %v40, %v259
    %vm308 = vcmp.eq.s32.totalorder %v40, %v262
    %vm309 = vcmp.eq.s32.totalorder %v40, %v265
    %vm310 = vcmp.eq.s32.totalorder %v40, %v268
    %vm311 = vcmp.eq.s32.totalorder %v40, %v271
    %vm312 = vcmp.eq.s32.totalorder %v40, %v274
    %vm313 = vcmp.eq.s32.totalorder %v40, %v277
    %vm314 = vcmp.eq.s32.totalorder %v40, %v280
    %vm315 = vcmp.eq.s32.totalorder %v40, %v283
    %v316 = vsel %vm284, 1, 0
    %v317 = vsel %vm285, 1, 0
    %v318 = vsel %vm286, 1, 0
    %v319 = vsel %vm287, 1, 0
    %v320 = vsel %vm288, 1, 0
    %v321 = vsel %vm289, 1, 0
    %v322 = vsel %vm290, 1, 0
    %v323 = vsel %vm291, 1, 0
    %v324 = vsel %vm292, 1, 0
    %v325 = vsel %vm293, 1, 0
    %v326 = vsel %vm294, 1, 0
    %v327 = vsel %vm295, 1, 0
    %v328 = vsel %vm296, 1, 0
    %v329 = vsel %vm297, 1, 0
    %v330 = vsel %vm298, 1, 0
    %v331 = vsel %vm299, 1, 0
    %v332 = vsel %vm300, 1, 0
    %v333 = vsel %vm301, 1, 0
    %v334 = vsel %vm302, 1, 0
    %v335 = vsel %vm303, 1, 0
    %v336 = vsel %vm304, 1, 0
    %v337 = vsel %vm305, 1, 0
    %v338 = vsel %vm306, 1, 0
    %v339 = vsel %vm307, 1, 0
    %v340 = vsel %vm308, 1, 0
    %v341 = vsel %vm309, 1, 0
    %v342 = vsel %vm310, 1, 0
    %v343 = vsel %vm311, 1, 0
    %v344 = vsel %vm312, 1, 0
    %v345 = vsel %vm313, 1, 0
    %v346 = vsel %vm314, 1, 0
    %v347 = vsel %vm315, 1, 0
    %v348 = vcvt.s32.f32 %v316
    %v349 = vcvt.s32.f32 %v317
    %v350 = vcvt.s32.f32 %v318
    %v351 = vcvt.s32.f32 %v319
    %v352 = vcvt.s32.f32 %v320
    %v353 = vcvt.s32.f32 %v321
    %v354 = vcvt.s32.f32 %v322
    %v355 = vcvt.s32.f32 %v323
    %v356 = vcvt.s32.f32 %v324
    %v357 = vcvt.s32.f32 %v325
    %v358 = vcvt.s32.f32 %v326
    %v359 = vcvt.s32.f32 %v327
    %v360 = vcvt.s32.f32 %v328
    %v361 = vcvt.s32.f32 %v329
    %v362 = vcvt.s32.f32 %v330
    %v363 = vcvt.s32.f32 %v331
    %v364 = vcvt.s32.f32 %v332
    %v365 = vcvt.s32.f32 %v333
    %v366 = vcvt.s32.f32 %v334
    %v367 = vcvt.s32.f32 %v335
    %v368 = vcvt.s32.f32 %v336
    %v369 = vcvt.s32.f32 %v337
    %v370 = vcvt.s32.f32 %v338
    %v371 = vcvt.s32.f32 %v339
    %v372 = vcvt.s32.f32 %v340
    %v373 = vcvt.s32.f32 %v341
    %v374 = vcvt.s32.f32 %v342
    %v375 = vcvt.s32.f32 %v343
    %v376 = vcvt.s32.f32 %v344
    %v377 = vcvt.s32.f32 %v345
    %v378 = vcvt.s32.f32 %v346
    %v379 = vcvt.s32.f32 %v347
    %v380 = vld [vmem:[%s4] sm:$0xff]
    %v381 = vld [vmem:[%s4 + $0x8] sm:$0xff]
    %v382 = vld [vmem:[%s4 + $0x10] sm:$0xff]
    %v383 = vld [vmem:[%s4 + $0x18] sm:$0x3f]
    %v416 = vcombine.high %v348, %v348
    %v417 = vcombine.high %v350, %v350
    %v418 = vcombine.high %v352, %v352
    %v419 = vcombine.high %v354, %v354
    %v420 = vcombine.high %v356, %v356
    %v421 = vcombine.high %v358, %v358
    %v422 = vcombine.high %v360, %v360
    %v423 = vcombine.high %v362, %v362
    %v424 = vcombine.high %v364, %v364
    %v425 = vcombine.high %v366, %v366
    %v426 = vcombine.high %v368, %v368
    %v427 = vcombine.high %v370, %v370
    %v428 = vcombine.high %v372, %v372
    %v429 = vcombine.high %v374, %v374
    %v430 = vcombine.high %v376, %v376
    %v431 = vcombine.high %v378, %v378
    %v432 = vcombine.low %v348, %v416
    %v433 = vcombine.low %v349, %v350
    %v434 = vcombine.low %v417, %v351
    %v435 = vcombine.low %v352, %v418
    %v436 = vcombine.low %v353, %v354
    %v437 = vcombine.low %v419, %v355
    %v438 = vcombine.low %v356, %v420
    %v439 = vcombine.low %v357, %v358
    %v440 = vcombine.low %v421, %v359
    %v441 = vcombine.low %v360, %v422
    %v442 = vcombine.low %v361, %v362
    %v443 = vcombine.low %v423, %v363
    %v444 = vcombine.low %v364, %v424
    %v445 = vcombine.low %v365, %v366
    %v446 = vcombine.low %v425, %v367
    %v447 = vcombine.low %v368, %v426
    %v448 = vcombine.low %v369, %v370
    %v449 = vcombine.low %v427, %v371
    %v450 = vcombine.low %v372, %v428
    %v451 = vcombine.low %v373, %v374
    %v452 = vcombine.low %v429, %v375
    %v453 = vcombine.low %v376, %v430
    %v454 = vcombine.low %v377, %v378
    %v455 = vcombine.low %v431, %v379
    %vm456 = vcmask 244736
    %v457 = vsel %vm456, %v432, 0
    %v459 = vsel %vm456, %v433, 0
    %v461 = vsel %vm456, %v434, 0
    %v463 = vsel %vm456, %v435, 0
    %v465 = vsel %vm456, %v436, 0
    %v467 = vsel %vm456, %v437, 0
    %v469 = vsel %vm456, %v438, 0
    %v471 = vsel %vm456, %v439, 0
    %v473 = vsel %vm456, %v440, 0
    %v475 = vsel %vm456, %v441, 0
    %v477 = vsel %vm456, %v442, 0
    %v479 = vsel %vm456, %v443, 0
    %v481 = vsel %vm456, %v444, 0
    %v483 = vsel %vm456, %v445, 0
    %v485 = vsel %vm456, %v446, 0
    %v487 = vsel %vm456, %v447, 0
    %v489 = vsel %vm456, %v448, 0
    %v491 = vsel %vm456, %v449, 0
    %v493 = vsel %vm456, %v450, 0
    %v495 = vsel %vm456, %v451, 0
    %v497 = vsel %vm456, %v452, 0
    %v499 = vsel %vm456, %v453, 0
    %v501 = vsel %vm456, %v454, 0
    %v503 = vsel %vm456, %v455, 0
    %vm505 = vcmask 1045504
    %v507 = vsel %vm505, %v383, 0
    %509 = vmatprep.subr.mxu0 0.0
    %510 = vmatpush1.msra.mxu0 %v380
    %511 = vmatprep.subr.mxu0 0.0
    %512 = vmatpush1.msra.mxu0 %v381
    %513 = vmatprep.subr.mxu0 0.0
    %514 = vmatpush1.msra.mxu0 %v382
    %515 = vmatprep.subr.mxu0 0.0
    %516 = vmatpush1.msra.mxu0 %v507
    %517 = vmatprep.subr.mxu0 0.0
    %518 = vmatpush1.msra.mxu0 0.0
    %519 = vmatprep.subr.mxu0 0.0
    %520 = vmatpush1.msra.mxu0 0.0
    %521 = vmatprep.subr.mxu0 0.0
    %522 = vmatpush1.msra.mxu0 0.0
    %523 = vmatprep.subr.mxu0 0.0
    %524 = vmatpush1.msra.mxu0 0.0
    %525 = vmatprep.subr.mxu0 0.0
    %526 = vmatpush1.msra.mxu0 0.0
    %527 = vmatprep.subr.mxu0 0.0
    %528 = vmatpush1.msra.mxu0 0.0
    %529 = vmatprep.subr.mxu0 0.0
    %530 = vmatpush1.msra.mxu0 0.0
    %531 = vmatprep.subr.mxu0 0.0
    %532 = vmatpush1.msra.mxu0 0.0
    %533 = vmatprep.subr.mxu0 0.0
    %534 = vmatpush1.msra.mxu0 0.0
    %535 = vmatprep.subr.mxu0 0.0
    %536 = vmatpush1.msra.mxu0 0.0
    %537 = vmatprep.subr.mxu0 0.0
    %538 = vmatpush1.msra.mxu0 0.0
    %539 = vmatprep.subr.mxu0 0.0
    %540 = vmatpush1.msra.mxu0 0.0
    %541 = vmatprep.subr.mxu0 0.0
    %542 = vmatpush1.msra.mxu0 0.0
    %543 = vmatprep.subr.mxu0 0.0
    %544 = vmatpush1.msra.mxu0 0.0
    %545 = vmatprep.subr.mxu0 0.0
    %546 = vmatpush1.msra.mxu0 0.0
    %547 = vmatprep.subr.mxu0 0.0
    %548 = vmatpush1.msra.mxu0 0.0
    %549 = vmatprep.subr.mxu0 0.0
    %550 = vmatpush1.msra.mxu0 0.0
    %551 = vmatprep.subr.mxu0 0.0
    %552 = vmatpush1.msra.mxu0 0.0
    %553 = vmatprep.subr.mxu0 0.0
    %554 = vmatpush1.msra.mxu0 0.0
    %555 = vmatprep.subr.mxu0 0.0
    %556 = vmatpush1.msra.mxu0 0.0
    %557 = vmatprep.subr.mxu0 0.0
    %558 = vmatpush1.msra.mxu0 0.0
    %559 = vmatprep.subr.mxu0 0.0
    %560 = vmatpush1.msra.mxu0 0.0
    %561 = vmatprep.subr.mxu0 0.0
    %562 = vmatpush1.msra.mxu0 0.0
    %563 = vmatprep.subr.mxu0 0.0
    %564 = vmatpush1.msra.mxu0 0.0
    %565 = vmatprep.subr.mxu0 0.0
    %566 = vmatpush1.msra.mxu0 0.0
    %567 = vmatprep.subr.mxu0 0.0
    %568 = vmatpush1.msra.mxu0 0.0
    %569 = vmatprep.subr.mxu0 0.0
    %570 = vmatpush1.msra.mxu0 0.0
    %571 = vmatprep.subr.mxu0 0.0
    %572 = vmatpush1.msra.mxu0 0.0
    %573 = vmatprep.mubr.f32.mxu0 0.0
    %574 = vmatmul.mubr.f32.gmra.mrb[0].mxu0 %v457
    %v575 = vpop.f32.mrb[0].mxu0
    %v576 = vadd.f32 0.0, %v575
    %v577 = vpop.f32.mrb[0].mxu0
    %578 = vmatprep.mubr.f32.mxu0 0.0
    %579 = vmatmul.mubr.f32.gmra.mrb[0].mxu0 %v459
    %v580 = vpop.f32.mrb[0].mxu0
    %v581 = vadd.f32 0.0, %v580
    %v582 = vpop.f32.mrb[0].mxu0
    %583 = vmatprep.mubr.f32.mxu0 0.0
    %584 = vmatmul.mubr.f32.gmra.mrb[0].mxu0 %v461
    %v585 = vpop.f32.mrb[0].mxu0
    %v586 = vadd.f32 0.0, %v585
    %v587 = vpop.f32.mrb[0].mxu0
    %588 = vmatprep.mubr.f32.mxu0 0.0
    %589 = vmatmul.mubr.f32.gmra.mrb[0].mxu0 %v463
    %v590 = vpop.f32.mrb[0].mxu0
    %v591 = vadd.f32 0.0, %v590
    %v592 = vpop.f32.mrb[0].mxu0
    %593 = vmatprep.mubr.f32.mxu0 0.0
    %594 = vmatmul.mubr.f32.gmra.mrb[0].mxu0 %v465
    %v595 = vpop.f32.mrb[0].mxu0
    %v596 = vadd.f32 0.0, %v595
    %v597 = vpop.f32.mrb[0].mxu0
    %598 = vmatprep.mubr.f32.mxu0 0.0
    %599 = vmatmul.mubr.f32.gmra.mrb[0].mxu0 %v467
    %v600 = vpop.f32.mrb[0].mxu0
    %v601 = vadd.f32 0.0, %v600
    %v602 = vpop.f32.mrb[0].mxu0
    %603 = vmatprep.mubr.f32.mxu0 0.0
    %604 = vmatmul.mubr.f32.gmra.mrb[0].mxu0 %v469
    %v605 = vpop.f32.mrb[0].mxu0
    %v606 = vadd.f32 0.0, %v605
    %v607 = vpop.f32.mrb[0].mxu0
    %608 = vmatprep.mubr.f32.mxu0 0.0
    %609 = vmatmul.mubr.f32.gmra.mrb[0].mxu0 %v471
    %v610 = vpop.f32.mrb[0].mxu0
    %v611 = vadd.f32 0.0, %v610
    %v612 = vpop.f32.mrb[0].mxu0
    %613 = vmatprep.mubr.f32.mxu0 0.0
    %614 = vmatmul.mubr.f32.gmra.mrb[0].mxu0 %v473
    %v615 = vpop.f32.mrb[0].mxu0
    %v616 = vadd.f32 0.0, %v615
    %v617 = vpop.f32.mrb[0].mxu0
    %618 = vmatprep.mubr.f32.mxu0 0.0
    %619 = vmatmul.mubr.f32.gmra.mrb[0].mxu0 %v475
    %v620 = vpop.f32.mrb[0].mxu0
    %v621 = vadd.f32 0.0, %v620
    %v622 = vpop.f32.mrb[0].mxu0
    %623 = vmatprep.mubr.f32.mxu0 0.0
    %624 = vmatmul.mubr.f32.gmra.mrb[0].mxu0 %v477
    %v625 = vpop.f32.mrb[0].mxu0
    %v626 = vadd.f32 0.0, %v625
    %v627 = vpop.f32.mrb[0].mxu0
    %628 = vmatprep.mubr.f32.mxu0 0.0
    %629 = vmatmul.mubr.f32.gmra.mrb[0].mxu0 %v479
    %v630 = vpop.f32.mrb[0].mxu0
    %v631 = vadd.f32 0.0, %v630
    %v632 = vpop.f32.mrb[0].mxu0
    %633 = vmatprep.mubr.f32.mxu0 0.0
    %634 = vmatmul.mubr.f32.gmra.mrb[0].mxu0 %v481
    %v635 = vpop.f32.mrb[0].mxu0
    %v636 = vadd.f32 0.0, %v635
    %v637 = vpop.f32.mrb[0].mxu0
    %638 = vmatprep.mubr.f32.mxu0 0.0
    %639 = vmatmul.mubr.f32.gmra.mrb[0].mxu0 %v483
    %v640 = vpop.f32.mrb[0].mxu0
    %v641 = vadd.f32 0.0, %v640
    %v642 = vpop.f32.mrb[0].mxu0
    %643 = vmatprep.mubr.f32.mxu0 0.0
    %644 = vmatmul.mubr.f32.gmra.mrb[0].mxu0 %v485
    %v645 = vpop.f32.mrb[0].mxu0
    %v646 = vadd.f32 0.0, %v645
    %v647 = vpop.f32.mrb[0].mxu0
    %648 = vmatprep.mubr.f32.mxu0 0.0
    %649 = vmatmul.mubr.f32.gmra.mrb[0].mxu0 %v487
    %v650 = vpop.f32.mrb[0].mxu0
    %v651 = vadd.f32 0.0, %v650
    %v652 = vpop.f32.mrb[0].mxu0
    %653 = vmatprep.mubr.f32.mxu0 0.0
    %654 = vmatmul.mubr.f32.gmra.mrb[0].mxu0 %v489
    %v655 = vpop.f32.mrb[0].mxu0
    %v656 = vadd.f32 0.0, %v655
    %v657 = vpop.f32.mrb[0].mxu0
    %658 = vmatprep.mubr.f32.mxu0 0.0
    %659 = vmatmul.mubr.f32.gmra.mrb[0].mxu0 %v491
    %v660 = vpop.f32.mrb[0].mxu0
    %v661 = vadd.f32 0.0, %v660
    %v662 = vpop.f32.mrb[0].mxu0
    %663 = vmatprep.mubr.f32.mxu0 0.0
    %664 = vmatmul.mubr.f32.gmra.mrb[0].mxu0 %v493
    %v665 = vpop.f32.mrb[0].mxu0
    %v666 = vadd.f32 0.0, %v665
    %v667 = vpop.f32.mrb[0].mxu0
    %668 = vmatprep.mubr.f32.mxu0 0.0
    %669 = vmatmul.mubr.f32.gmra.mrb[0].mxu0 %v495
    %v670 = vpop.f32.mrb[0].mxu0
    %v671 = vadd.f32 0.0, %v670
    %v672 = vpop.f32.mrb[0].mxu0
    %673 = vmatprep.mubr.f32.mxu0 0.0
    %674 = vmatmul.mubr.f32.gmra.mrb[0].mxu0 %v497
    %v675 = vpop.f32.mrb[0].mxu0
    %v676 = vadd.f32 0.0, %v675
    %v677 = vpop.f32.mrb[0].mxu0
    %678 = vmatprep.mubr.f32.mxu0 0.0
    %679 = vmatmul.mubr.f32.gmra.mrb[0].mxu0 %v499
    %v680 = vpop.f32.mrb[0].mxu0
    %v681 = vadd.f32 0.0, %v680
    %v682 = vpop.f32.mrb[0].mxu0
    %683 = vmatprep.mubr.f32.mxu0 0.0
    %684 = vmatmul.mubr.f32.gmra.mrb[0].mxu0 %v501
    %v685 = vpop.f32.mrb[0].mxu0
    %v686 = vadd.f32 0.0, %v685
    %v687 = vpop.f32.mrb[0].mxu0
    %688 = vmatprep.mubr.f32.mxu0 0.0
    %689 = vmatmul.mubr.f32.gmra.mrb[0].mxu0 %v503
    %v690 = vpop.f32.mrb[0].mxu0
    %v691 = vadd.f32 0.0, %v690
    %v692 = vpop.f32.mrb[0].mxu0
    %693 = vdwg.mxu0
    %v718 = vcombine.high %v576, %v576
    %v719 = vcombine.high %v581, %v581
    %v720 = vcombine.high %v586, %v586
    %v721 = vcombine.high %v591, %v591
    %v722 = vcombine.high %v596, %v596
    %v723 = vcombine.high %v601, %v601
    %v724 = vcombine.high %v606, %v606
    %v725 = vcombine.high %v611, %v611
    %v726 = vcombine.high %v616, %v616
    %v727 = vcombine.high %v621, %v621
    %v728 = vcombine.high %v626, %v626
    %v729 = vcombine.high %v631, %v631
    %v730 = vcombine.high %v636, %v636
    %v731 = vcombine.high %v641, %v641
    %v732 = vcombine.high %v646, %v646
    %v733 = vcombine.high %v651, %v651
    %v734 = vcombine.high %v656, %v656
    %v735 = vcombine.high %v661, %v661
    %v736 = vcombine.high %v666, %v666
    %v737 = vcombine.high %v671, %v671
    %v738 = vcombine.high %v676, %v676
    %v739 = vcombine.high %v681, %v681
    %v740 = vcombine.high %v686, %v686
    %v741 = vcombine.high %v691, %v691
    %v742 = vld [vmem:[%s5] sm:$0xff]
    %v743 = vld [vmem:[%s5 + $0x8] sm:$0xff]
    %s744 = scalar_lea.vmem %s5, 16
    %v745 = vld [vmem:[%s744] sm:$0xff]
    %v746 = vld [vmem:[%s744 + $0x8] sm:$0xff]
    %v748 = vunpack.c.l.s4 1983009808
    %v749 = vunpack.c.0.s8 %v748
    %v750 = vlaneseq
    %v751 = vshrl.u32 %v750, 7
    %v752 = vsub.s32 %v749, %v751
    %v753 = vrot.slane %v576, %v752
    %v754 = vcombine.high %v753, %v753
    %v756 = vunpack.c.l.s4 1983009808
    %v757 = vunpack.c.0.s8 %v756
    %v758 = vlaneseq
    %v759 = vshrl.u32 %v758, 7
    %v760 = vsub.s32 %v757, %v759
    %v761 = vrot.slane %v718, %v760
    %v762 = vcombine.high %v761, %v761
    %v764 = vunpack.c.l.s4 1983009808
    %v765 = vunpack.c.0.s8 %v764
    %v766 = vlaneseq
    %v767 = vshrl.u32 %v766, 7
    %v768 = vsub.s32 %v765, %v767
    %v769 = vrot.slane %v581, %v768
    %v770 = vcombine.high %v769, %v769
    %v772 = vunpack.c.l.s4 1983009808
    %v773 = vunpack.c.0.s8 %v772
    %v774 = vlaneseq
    %v775 = vshrl.u32 %v774, 7
    %v776 = vsub.s32 %v773, %v775
    %v777 = vrot.slane %v719, %v776
    %v778 = vcombine.high %v777, %v777
    %v780 = vunpack.c.l.s4 1983009808
    %v781 = vunpack.c.0.s8 %v780
    %v782 = vlaneseq
    %v783 = vshrl.u32 %v782, 7
    %v784 = vsub.s32 %v781, %v783
    %v785 = vrot.slane %v586, %v784
    %v786 = vcombine.high %v785, %v785
    %v788 = vunpack.c.l.s4 1983009808
    %v789 = vunpack.c.0.s8 %v788
    %v790 = vlaneseq
    %v791 = vshrl.u32 %v790, 7
    %v792 = vsub.s32 %v789, %v791
    %v793 = vrot.slane %v720, %v792
    %v794 = vcombine.high %v793, %v793
    %v796 = vunpack.c.l.s4 1983009808
    %v797 = vunpack.c.0.s8 %v796
    %v798 = vlaneseq
    %v799 = vshrl.u32 %v798, 7
    %v800 = vsub.s32 %v797, %v799
    %v801 = vrot.slane %v591, %v800
    %v802 = vcombine.high %v801, %v801
    %v804 = vunpack.c.l.s4 1983009808
    %v805 = vunpack.c.0.s8 %v804
    %v806 = vlaneseq
    %v807 = vshrl.u32 %v806, 7
    %v808 = vsub.s32 %v805, %v807
    %v809 = vrot.slane %v721, %v808
    %v810 = vcombine.high %v809, %v809
    %v812 = vunpack.c.l.s4 1983009808
    %v813 = vunpack.c.0.s8 %v812
    %v814 = vlaneseq
    %v815 = vshrl.u32 %v814, 7
    %v816 = vsub.s32 %v813, %v815
    %v817 = vrot.slane %v596, %v816
    %v818 = vcombine.high %v817, %v817
    %v820 = vunpack.c.l.s4 1983009808
    %v821 = vunpack.c.0.s8 %v820
    %v822 = vlaneseq
    %v823 = vshrl.u32 %v822, 7
    %v824 = vsub.s32 %v821, %v823
    %v825 = vrot.slane %v722, %v824
    %v826 = vcombine.high %v825, %v825
    %v828 = vunpack.c.l.s4 1983009808
    %v829 = vunpack.c.0.s8 %v828
    %v830 = vlaneseq
    %v831 = vshrl.u32 %v830, 7
    %v832 = vsub.s32 %v829, %v831
    %v833 = vrot.slane %v601, %v832
    %v834 = vcombine.high %v833, %v833
    %v836 = vunpack.c.l.s4 1983009808
    %v837 = vunpack.c.0.s8 %v836
    %v838 = vlaneseq
    %v839 = vshrl.u32 %v838, 7
    %v840 = vsub.s32 %v837, %v839
    %v841 = vrot.slane %v723, %v840
    %v842 = vcombine.high %v841, %v841
    %v844 = vunpack.c.l.s4 1983009808
    %v845 = vunpack.c.0.s8 %v844
    %v846 = vlaneseq
    %v847 = vshrl.u32 %v846, 7
    %v848 = vsub.s32 %v845, %v847
    %v849 = vrot.slane %v606, %v848
    %v850 = vcombine.high %v849, %v849
    %v852 = vunpack.c.l.s4 1983009808
    %v853 = vunpack.c.0.s8 %v852
    %v854 = vlaneseq
    %v855 = vshrl.u32 %v854, 7
    %v856 = vsub.s32 %v853, %v855
    %v857 = vrot.slane %v724, %v856
    %v858 = vcombine.high %v857, %v857
    %v860 = vunpack.c.l.s4 1983009808
    %v861 = vunpack.c.0.s8 %v860
    %v862 = vlaneseq
    %v863 = vshrl.u32 %v862, 7
    %v864 = vsub.s32 %v861, %v863
    %v865 = vrot.slane %v611, %v864
    %v866 = vcombine.high %v865, %v865
    %v868 = vunpack.c.l.s4 1983009808
    %v869 = vunpack.c.0.s8 %v868
    %v870 = vlaneseq
    %v871 = vshrl.u32 %v870, 7
    %v872 = vsub.s32 %v869, %v871
    %v873 = vrot.slane %v725, %v872
    %v874 = vcombine.high %v873, %v873
    %v876 = vunpack.c.l.s4 1983009808
    %v877 = vunpack.c.0.s8 %v876
    %v878 = vlaneseq
    %v879 = vshrl.u32 %v878, 7
    %v880 = vsub.s32 %v877, %v879
    %v881 = vrot.slane %v616, %v880
    %v882 = vcombine.high %v881, %v881
    %v884 = vunpack.c.l.s4 1983009808
    %v885 = vunpack.c.0.s8 %v884
    %v886 = vlaneseq
    %v887 = vshrl.u32 %v886, 7
    %v888 = vsub.s32 %v885, %v887
    %v889 = vrot.slane %v726, %v888
    %v890 = vcombine.high %v889, %v889
    %v892 = vunpack.c.l.s4 1983009808
    %v893 = vunpack.c.0.s8 %v892
    %v894 = vlaneseq
    %v895 = vshrl.u32 %v894, 7
    %v896 = vsub.s32 %v893, %v895
    %v897 = vrot.slane %v621, %v896
    %v898 = vcombine.high %v897, %v897
    %v900 = vunpack.c.l.s4 1983009808
    %v901 = vunpack.c.0.s8 %v900
    %v902 = vlaneseq
    %v903 = vshrl.u32 %v902, 7
    %v904 = vsub.s32 %v901, %v903
    %v905 = vrot.slane %v727, %v904
    %v906 = vcombine.high %v905, %v905
    %v908 = vunpack.c.l.s4 1983009808
    %v909 = vunpack.c.0.s8 %v908
    %v910 = vlaneseq
    %v911 = vshrl.u32 %v910, 7
    %v912 = vsub.s32 %v909, %v911
    %v913 = vrot.slane %v626, %v912
    %v914 = vcombine.high %v913, %v913
    %v916 = vunpack.c.l.s4 1983009808
    %v917 = vunpack.c.0.s8 %v916
    %v918 = vlaneseq
    %v919 = vshrl.u32 %v918, 7
    %v920 = vsub.s32 %v917, %v919
    %v921 = vrot.slane %v728, %v920
    %v922 = vcombine.high %v921, %v921
    %v924 = vunpack.c.l.s4 1983009808
    %v925 = vunpack.c.0.s8 %v924
    %v926 = vlaneseq
    %v927 = vshrl.u32 %v926, 7
    %v928 = vsub.s32 %v925, %v927
    %v929 = vrot.slane %v631, %v928
    %v930 = vcombine.high %v929, %v929
    %v932 = vunpack.c.l.s4 1983009808
    %v933 = vunpack.c.0.s8 %v932
    %v934 = vlaneseq
    %v935 = vshrl.u32 %v934, 7
    %v936 = vsub.s32 %v933, %v935
    %v937 = vrot.slane %v729, %v936
    %v938 = vcombine.high %v937, %v937
    %v940 = vunpack.c.l.s4 1983009808
    %v941 = vunpack.c.0.s8 %v940
    %v942 = vlaneseq
    %v943 = vshrl.u32 %v942, 7
    %v944 = vsub.s32 %v941, %v943
    %v945 = vrot.slane %v636, %v944
    %v946 = vcombine.high %v945, %v945
    %v948 = vunpack.c.l.s4 1983009808
    %v949 = vunpack.c.0.s8 %v948
    %v950 = vlaneseq
    %v951 = vshrl.u32 %v950, 7
    %v952 = vsub.s32 %v949, %v951
    %v953 = vrot.slane %v730, %v952
    %v954 = vcombine.high %v953, %v953
    %v956 = vunpack.c.l.s4 1983009808
    %v957 = vunpack.c.0.s8 %v956
    %v958 = vlaneseq
    %v959 = vshrl.u32 %v958, 7
    %v960 = vsub.s32 %v957, %v959
    %v961 = vrot.slane %v641, %v960
    %v962 = vcombine.high %v961, %v961
    %v964 = vunpack.c.l.s4 1983009808
    %v965 = vunpack.c.0.s8 %v964
    %v966 = vlaneseq
    %v967 = vshrl.u32 %v966, 7
    %v968 = vsub.s32 %v965, %v967
    %v969 = vrot.slane %v731, %v968
    %v970 = vcombine.high %v969, %v969
    %v972 = vunpack.c.l.s4 1983009808
    %v973 = vunpack.c.0.s8 %v972
    %v974 = vlaneseq
    %v975 = vshrl.u32 %v974, 7
    %v976 = vsub.s32 %v973, %v975
    %v977 = vrot.slane %v646, %v976
    %v978 = vcombine.high %v977, %v977
    %v980 = vunpack.c.l.s4 1983009808
    %v981 = vunpack.c.0.s8 %v980
    %v982 = vlaneseq
    %v983 = vshrl.u32 %v982, 7
    %v984 = vsub.s32 %v981, %v983
    %v985 = vrot.slane %v732, %v984
    %v986 = vcombine.high %v985, %v985
    %v988 = vunpack.c.l.s4 1983009808
    %v989 = vunpack.c.0.s8 %v988
    %v990 = vlaneseq
    %v991 = vshrl.u32 %v990, 7
    %v992 = vsub.s32 %v989, %v991
    %v993 = vrot.slane %v651, %v992
    %v994 = vcombine.high %v993, %v993
    %v996 = vunpack.c.l.s4 1983009808
    %v997 = vunpack.c.0.s8 %v996
    %v998 = vlaneseq
    %v999 = vshrl.u32 %v998, 7
    %v1000 = vsub.s32 %v997, %v999
    %v1001 = vrot.slane %v733, %v1000
    %v1002 = vcombine.high %v1001, %v1001
    %v1004 = vunpack.c.l.s4 1983009808
    %v1005 = vunpack.c.0.s8 %v1004
    %v1006 = vlaneseq
    %v1007 = vshrl.u32 %v1006, 7
    %v1008 = vsub.s32 %v1005, %v1007
    %v1009 = vrot.slane %v656, %v1008
    %v1010 = vcombine.high %v1009, %v1009
    %v1012 = vunpack.c.l.s4 1983009808
    %v1013 = vunpack.c.0.s8 %v1012
    %v1014 = vlaneseq
    %v1015 = vshrl.u32 %v1014, 7
    %v1016 = vsub.s32 %v1013, %v1015
    %v1017 = vrot.slane %v734, %v1016
    %v1018 = vcombine.high %v1017, %v1017
    %v1020 = vunpack.c.l.s4 1983009808
    %v1021 = vunpack.c.0.s8 %v1020
    %v1022 = vlaneseq
    %v1023 = vshrl.u32 %v1022, 7
    %v1024 = vsub.s32 %v1021, %v1023
    %v1025 = vrot.slane %v661, %v1024
    %v1026 = vcombine.high %v1025, %v1025
    %v1028 = vunpack.c.l.s4 1983009808
    %v1029 = vunpack.c.0.s8 %v1028
    %v1030 = vlaneseq
    %v1031 = vshrl.u32 %v1030, 7
    %v1032 = vsub.s32 %v1029, %v1031
    %v1033 = vrot.slane %v735, %v1032
    %v1034 = vcombine.high %v1033, %v1033
    %v1036 = vunpack.c.l.s4 1983009808
    %v1037 = vunpack.c.0.s8 %v1036
    %v1038 = vlaneseq
    %v1039 = vshrl.u32 %v1038, 7
    %v1040 = vsub.s32 %v1037, %v1039
    %v1041 = vrot.slane %v666, %v1040
    %v1042 = vcombine.high %v1041, %v1041
    %v1044 = vunpack.c.l.s4 1983009808
    %v1045 = vunpack.c.0.s8 %v1044
    %v1046 = vlaneseq
    %v1047 = vshrl.u32 %v1046, 7
    %v1048 = vsub.s32 %v1045, %v1047
    %v1049 = vrot.slane %v736, %v1048
    %v1050 = vcombine.high %v1049, %v1049
    %v1052 = vunpack.c.l.s4 1983009808
    %v1053 = vunpack.c.0.s8 %v1052
    %v1054 = vlaneseq
    %v1055 = vshrl.u32 %v1054, 7
    %v1056 = vsub.s32 %v1053, %v1055
    %v1057 = vrot.slane %v671, %v1056
    %v1058 = vcombine.high %v1057, %v1057
    %v1060 = vunpack.c.l.s4 1983009808
    %v1061 = vunpack.c.0.s8 %v1060
    %v1062 = vlaneseq
    %v1063 = vshrl.u32 %v1062, 7
    %v1064 = vsub.s32 %v1061, %v1063
    %v1065 = vrot.slane %v737, %v1064
    %v1066 = vcombine.high %v1065, %v1065
    %v1068 = vunpack.c.l.s4 1983009808
    %v1069 = vunpack.c.0.s8 %v1068
    %v1070 = vlaneseq
    %v1071 = vshrl.u32 %v1070, 7
    %v1072 = vsub.s32 %v1069, %v1071
    %v1073 = vrot.slane %v676, %v1072
    %v1074 = vcombine.high %v1073, %v1073
    %v1076 = vunpack.c.l.s4 1983009808
    %v1077 = vunpack.c.0.s8 %v1076
    %v1078 = vlaneseq
    %v1079 = vshrl.u32 %v1078, 7
    %v1080 = vsub.s32 %v1077, %v1079
    %v1081 = vrot.slane %v738, %v1080
    %v1082 = vcombine.high %v1081, %v1081
    %v1084 = vunpack.c.l.s4 1983009808
    %v1085 = vunpack.c.0.s8 %v1084
    %v1086 = vlaneseq
    %v1087 = vshrl.u32 %v1086, 7
    %v1088 = vsub.s32 %v1085, %v1087
    %v1089 = vrot.slane %v681, %v1088
    %v1090 = vcombine.high %v1089, %v1089
    %v1092 = vunpack.c.l.s4 1983009808
    %v1093 = vunpack.c.0.s8 %v1092
    %v1094 = vlaneseq
    %v1095 = vshrl.u32 %v1094, 7
    %v1096 = vsub.s32 %v1093, %v1095
    %v1097 = vrot.slane %v739, %v1096
    %v1098 = vcombine.high %v1097, %v1097
    %v1100 = vunpack.c.l.s4 1983009808
    %v1101 = vunpack.c.0.s8 %v1100
    %v1102 = vlaneseq
    %v1103 = vshrl.u32 %v1102, 7
    %v1104 = vsub.s32 %v1101, %v1103
    %v1105 = vrot.slane %v686, %v1104
    %v1106 = vcombine.high %v1105, %v1105
    %v1108 = vunpack.c.l.s4 1983009808
    %v1109 = vunpack.c.0.s8 %v1108
    %v1110 = vlaneseq
    %v1111 = vshrl.u32 %v1110, 7
    %v1112 = vsub.s32 %v1109, %v1111
    %v1113 = vrot.slane %v740, %v1112
    %v1114 = vcombine.high %v1113, %v1113
    %v1116 = vunpack.c.l.s4 1983009808
    %v1117 = vunpack.c.0.s8 %v1116
    %v1118 = vlaneseq
    %v1119 = vshrl.u32 %v1118, 7
    %v1120 = vsub.s32 %v1117, %v1119
    %v1121 = vrot.slane %v691, %v1120
    %v1122 = vcombine.high %v1121, %v1121
    %v1124 = vunpack.c.l.s4 1983009808
    %v1125 = vunpack.c.0.s8 %v1124
    %v1126 = vlaneseq
    %v1127 = vshrl.u32 %v1126, 7
    %v1128 = vsub.s32 %v1125, %v1127
    %v1129 = vrot.slane %v741, %v1128
    %v1130 = vcombine.high %v1129, %v1129
    %vm1131 = vcmask 1040384
    %vm1132 = vcmask 1042434
    %vm1133 = vmor %vm1131, %vm1132
    %vm1134 = vcmask 1044484
    %vm1135 = vmor %vm1133, %vm1134
    %vm1136 = vcmask 1046534
    %vm1137 = vmor %vm1135, %vm1136
    %v1138 = vrot.slane %v753, 7
    %v1139 = vrot.slane %v1138, 2
    %v1140 = vrot.slane %v754, 7
    %v1141 = vsel %vm1137, %v1139, %v1140
    %v1142 = vrot.slane %v1140, 2
    %v1143 = vrot.slane %v761, 7
    %v1144 = vsel %vm1137, %v1142, %v1143
    %v1145 = vrot.slane %v1143, 2
    %v1146 = vrot.slane %v762, 7
    %v1147 = vsel %vm1137, %v1145, %v1146
    %v1148 = vrot.slane %v1146, 2
    %v1149 = vrot.slane %v769, 7
    %v1150 = vsel %vm1137, %v1148, %v1149
    %v1151 = vrot.slane %v1149, 2
    %v1152 = vrot.slane %v770, 7
    %v1153 = vsel %vm1137, %v1151, %v1152
    %v1154 = vrot.slane %v777, 7
    %v1155 = vrot.slane %v1154, 2
    %v1156 = vrot.slane %v778, 7
    %v1157 = vsel %vm1137, %v1155, %v1156
    %v1158 = vrot.slane %v1156, 2
    %v1159 = vrot.slane %v785, 7
    %v1160 = vsel %vm1137, %v1158, %v1159
    %v1161 = vrot.slane %v1159, 2
    %v1162 = vrot.slane %v786, 7
    %v1163 = vsel %vm1137, %v1161, %v1162
    %v1164 = vrot.slane %v1162, 2
    %v1165 = vrot.slane %v793, 7
    %v1166 = vsel %vm1137, %v1164, %v1165
    %v1167 = vrot.slane %v1165, 2
    %v1168 = vrot.slane %v794, 7
    %v1169 = vsel %vm1137, %v1167, %v1168
    %v1170 = vrot.slane %v801, 7
    %v1171 = vrot.slane %v1170, 2
    %v1172 = vrot.slane %v802, 7
    %v1173 = vsel %vm1137, %v1171, %v1172
    %v1174 = vrot.slane %v1172, 2
    %v1175 = vrot.slane %v809, 7
    %v1176 = vsel %vm1137, %v1174, %v1175
    %v1177 = vrot.slane %v1175, 2
    %v1178 = vrot.slane %v810, 7
    %v1179 = vsel %vm1137, %v1177, %v1178
    %v1180 = vrot.slane %v1178, 2
    %v1181 = vrot.slane %v817, 7
    %v1182 = vsel %vm1137, %v1180, %v1181
    %v1183 = vrot.slane %v1181, 2
    %v1184 = vrot.slane %v818, 7
    %v1185 = vsel %vm1137, %v1183, %v1184
    %v1186 = vrot.slane %v825, 7
    %v1187 = vrot.slane %v1186, 2
    %v1188 = vrot.slane %v826, 7
    %v1189 = vsel %vm1137, %v1187, %v1188
    %v1190 = vrot.slane %v1188, 2
    %v1191 = vrot.slane %v833, 7
    %v1192 = vsel %vm1137, %v1190, %v1191
    %v1193 = vrot.slane %v1191, 2
    %v1194 = vrot.slane %v834, 7
    %v1195 = vsel %vm1137, %v1193, %v1194
    %v1196 = vrot.slane %v1194, 2
    %v1197 = vrot.slane %v841, 7
    %v1198 = vsel %vm1137, %v1196, %v1197
    %v1199 = vrot.slane %v1197, 2
    %v1200 = vrot.slane %v842, 7
    %v1201 = vsel %vm1137, %v1199, %v1200
    %v1202 = vrot.slane %v849, 7
    %v1203 = vrot.slane %v1202, 2
    %v1204 = vrot.slane %v850, 7
    %v1205 = vsel %vm1137, %v1203, %v1204
    %v1206 = vrot.slane %v1204, 2
    %v1207 = vrot.slane %v857, 7
    %v1208 = vsel %vm1137, %v1206, %v1207
    %v1209 = vrot.slane %v1207, 2
    %v1210 = vrot.slane %v858, 7
    %v1211 = vsel %vm1137, %v1209, %v1210
    %v1212 = vrot.slane %v1210, 2
    %v1213 = vrot.slane %v865, 7
    %v1214 = vsel %vm1137, %v1212, %v1213
    %v1215 = vrot.slane %v1213, 2
    %v1216 = vrot.slane %v866, 7
    %v1217 = vsel %vm1137, %v1215, %v1216
    %v1218 = vrot.slane %v873, 7
    %v1219 = vrot.slane %v1218, 2
    %v1220 = vrot.slane %v874, 7
    %v1221 = vsel %vm1137, %v1219, %v1220
    %v1222 = vrot.slane %v1220, 2
    %v1223 = vrot.slane %v881, 7
    %v1224 = vsel %vm1137, %v1222, %v1223
    %v1225 = vrot.slane %v1223, 2
    %v1226 = vrot.slane %v882, 7
    %v1227 = vsel %vm1137, %v1225, %v1226
    %v1228 = vrot.slane %v1226, 2
    %v1229 = vrot.slane %v889, 7
    %v1230 = vsel %vm1137, %v1228, %v1229
    %v1231 = vrot.slane %v1229, 2
    %v1232 = vrot.slane %v890, 7
    %v1233 = vsel %vm1137, %v1231, %v1232
    %v1234 = vrot.slane %v897, 7
    %v1235 = vrot.slane %v1234, 2
    %v1236 = vrot.slane %v898, 7
    %v1237 = vsel %vm1137, %v1235, %v1236
    %v1238 = vrot.slane %v1236, 2
    %v1239 = vrot.slane %v905, 7
    %v1240 = vsel %vm1137, %v1238, %v1239
    %v1241 = vrot.slane %v1239, 2
    %v1242 = vrot.slane %v906, 7
    %v1243 = vsel %vm1137, %v1241, %v1242
    %v1244 = vrot.slane %v1242, 2
    %v1245 = vrot.slane %v913, 7
    %v1246 = vsel %vm1137, %v1244, %v1245
    %v1247 = vrot.slane %v1245, 2
    %v1248 = vrot.slane %v914, 7
    %v1249 = vsel %vm1137, %v1247, %v1248
    %v1250 = vrot.slane %v921, 7
    %v1251 = vrot.slane %v1250, 2
    %v1252 = vrot.slane %v922, 7
    %v1253 = vsel %vm1137, %v1251, %v1252
    %v1254 = vrot.slane %v1252, 2
    %v1255 = vrot.slane %v929, 7
    %v1256 = vsel %vm1137, %v1254, %v1255
    %v1257 = vrot.slane %v1255, 2
    %v1258 = vrot.slane %v930, 7
    %v1259 = vsel %vm1137, %v1257, %v1258
    %v1260 = vrot.slane %v1258, 2
    %v1261 = vrot.slane %v937, 7
    %v1262 = vsel %vm1137, %v1260, %v1261
    %v1263 = vrot.slane %v1261, 2
    %v1264 = vrot.slane %v938, 7
    %v1265 = vsel %vm1137, %v1263, %v1264
    %v1266 = vrot.slane %v945, 7
    %v1267 = vrot.slane %v1266, 2
    %v1268 = vrot.slane %v946, 7
    %v1269 = vsel %vm1137, %v1267, %v1268
    %v1270 = vrot.slane %v1268, 2
    %v1271 = vrot.slane %v953, 7
    %v1272 = vsel %vm1137, %v1270, %v1271
    %v1273 = vrot.slane %v1271, 2
    %v1274 = vrot.slane %v954, 7
    %v1275 = vsel %vm1137, %v1273, %v1274
    %v1276 = vrot.slane %v1274, 2
    %v1277 = vrot.slane %v961, 7
    %v1278 = vsel %vm1137, %v1276, %v1277
    %v1279 = vrot.slane %v1277, 2
    %v1280 = vrot.slane %v962, 7
    %v1281 = vsel %vm1137, %v1279, %v1280
    %v1282 = vrot.slane %v969, 7
    %v1283 = vrot.slane %v1282, 2
    %v1284 = vrot.slane %v970, 7
    %v1285 = vsel %vm1137, %v1283, %v1284
    %v1286 = vrot.slane %v1284, 2
    %v1287 = vrot.slane %v977, 7
    %v1288 = vsel %vm1137, %v1286, %v1287
    %v1289 = vrot.slane %v1287, 2
    %v1290 = vrot.slane %v978, 7
    %v1291 = vsel %vm1137, %v1289, %v1290
    %v1292 = vrot.slane %v1290, 2
    %v1293 = vrot.slane %v985, 7
    %v1294 = vsel %vm1137, %v1292, %v1293
    %v1295 = vrot.slane %v1293, 2
    %v1296 = vrot.slane %v986, 7
    %v1297 = vsel %vm1137, %v1295, %v1296
    %v1298 = vrot.slane %v993, 7
    %v1299 = vrot.slane %v1298, 2
    %v1300 = vrot.slane %v994, 7
    %v1301 = vsel %vm1137, %v1299, %v1300
    %v1302 = vrot.slane %v1300, 2
    %v1303 = vrot.slane %v1001, 7
    %v1304 = vsel %vm1137, %v1302, %v1303
    %v1305 = vrot.slane %v1303, 2
    %v1306 = vrot.slane %v1002, 7
    %v1307 = vsel %vm1137, %v1305, %v1306
    %v1308 = vrot.slane %v1306, 2
    %v1309 = vrot.slane %v1009, 7
    %v1310 = vsel %vm1137, %v1308, %v1309
    %v1311 = vrot.slane %v1309, 2
    %v1312 = vrot.slane %v1010, 7
    %v1313 = vsel %vm1137, %v1311, %v1312
    %v1314 = vrot.slane %v1017, 7
    %v1315 = vrot.slane %v1314, 2
    %v1316 = vrot.slane %v1018, 7
    %v1317 = vsel %vm1137, %v1315, %v1316
    %v1318 = vrot.slane %v1316, 2
    %v1319 = vrot.slane %v1025, 7
    %v1320 = vsel %vm1137, %v1318, %v1319
    %v1321 = vrot.slane %v1319, 2
    %v1322 = vrot.slane %v1026, 7
    %v1323 = vsel %vm1137, %v1321, %v1322
    %v1324 = vrot.slane %v1322, 2
    %v1325 = vrot.slane %v1033, 7
    %v1326 = vsel %vm1137, %v1324, %v1325
    %v1327 = vrot.slane %v1325, 2
    %v1328 = vrot.slane %v1034, 7
    %v1329 = vsel %vm1137, %v1327, %v1328
    %v1330 = vrot.slane %v1041, 7
    %v1331 = vrot.slane %v1330, 2
    %v1332 = vrot.slane %v1042, 7
    %v1333 = vsel %vm1137, %v1331, %v1332
    %v1334 = vrot.slane %v1332, 2
    %v1335 = vrot.slane %v1049, 7
    %v1336 = vsel %vm1137, %v1334, %v1335
    %v1337 = vrot.slane %v1335, 2
    %v1338 = vrot.slane %v1050, 7
    %v1339 = vsel %vm1137, %v1337, %v1338
    %v1340 = vrot.slane %v1338, 2
    %v1341 = vrot.slane %v1057, 7
    %v1342 = vsel %vm1137, %v1340, %v1341
    %v1343 = vrot.slane %v1341, 2
    %v1344 = vrot.slane %v1058, 7
    %v1345 = vsel %vm1137, %v1343, %v1344
    %v1346 = vrot.slane %v1065, 7
    %v1347 = vrot.slane %v1346, 2
    %v1348 = vrot.slane %v1066, 7
    %v1349 = vsel %vm1137, %v1347, %v1348
    %v1350 = vrot.slane %v1348, 2
    %v1351 = vrot.slane %v1073, 7
    %v1352 = vsel %vm1137, %v1350, %v1351
    %v1353 = vrot.slane %v1351, 2
    %v1354 = vrot.slane %v1074, 7
    %v1355 = vsel %vm1137, %v1353, %v1354
    %v1356 = vrot.slane %v1354, 2
    %v1357 = vrot.slane %v1081, 7
    %v1358 = vsel %vm1137, %v1356, %v1357
    %v1359 = vrot.slane %v1357, 2
    %v1360 = vrot.slane %v1082, 7
    %v1361 = vsel %vm1137, %v1359, %v1360
    %v1362 = vrot.slane %v1089, 7
    %v1363 = vrot.slane %v1362, 2
    %v1364 = vrot.slane %v1090, 7
    %v1365 = vsel %vm1137, %v1363, %v1364
    %v1366 = vrot.slane %v1364, 2
    %v1367 = vrot.slane %v1097, 7
    %v1368 = vsel %vm1137, %v1366, %v1367
    %v1369 = vrot.slane %v1367, 2
    %v1370 = vrot.slane %v1098, 7
    %v1371 = vsel %vm1137, %v1369, %v1370
    %v1372 = vrot.slane %v1370, 2
    %v1373 = vrot.slane %v1105, 7
    %v1374 = vsel %vm1137, %v1372, %v1373
    %v1375 = vrot.slane %v1373, 2
    %v1376 = vrot.slane %v1106, 7
    %v1377 = vsel %vm1137, %v1375, %v1376
    %v1378 = vrot.slane %v1113, 7
    %v1379 = vrot.slane %v1378, 2
    %v1380 = vrot.slane %v1114, 7
    %v1381 = vsel %vm1137, %v1379, %v1380
    %v1382 = vrot.slane %v1380, 2
    %v1383 = vrot.slane %v1121, 7
    %v1384 = vsel %vm1137, %v1382, %v1383
    %v1385 = vrot.slane %v1383, 2
    %v1386 = vrot.slane %v1122, 7
    %v1387 = vsel %vm1137, %v1385, %v1386
    %v1388 = vrot.slane %v1386, 2
    %v1389 = vrot.slane %v1129, 7
    %v1390 = vsel %vm1137, %v1388, %v1389
    %v1391 = vrot.slane %v1389, 2
    %v1392 = vrot.slane %v1130, 7
    %v1393 = vsel %vm1137, %v1391, %v1392
    %v1394 = vcombine.low %v1141, %v1144
    %v1395 = vcombine.low %v1147, %v1150
    %v1397 = vunpack.c.l.s4 1983009808
    %v1398 = vunpack.c.0.s8 %v1397
    %v1399 = vlaneseq
    %v1400 = vshrl.u32 %v1399, 7
    %v1401 = vsub.s32 %v1398, %v1400
    %v1402 = vrot.slane %v1394, %v1401
    %v1404 = vunpack.c.l.s4 1983009808
    %v1405 = vunpack.c.0.s8 %v1404
    %v1406 = vlaneseq
    %v1407 = vshrl.u32 %v1406, 7
    %v1408 = vsub.s32 %v1405, %v1407
    %v1409 = vrot.slane %v1395, %v1408
    %v1410 = vcombine.low %v1402, %v1409
    %v1411 = vcombine.low %v1153, %v1157
    %v1412 = vcombine.low %v1160, %v1163
    %v1414 = vunpack.c.l.s4 1983009808
    %v1415 = vunpack.c.0.s8 %v1414
    %v1416 = vlaneseq
    %v1417 = vshrl.u32 %v1416, 7
    %v1418 = vsub.s32 %v1415, %v1417
    %v1419 = vrot.slane %v1411, %v1418
    %v1421 = vunpack.c.l.s4 1983009808
    %v1422 = vunpack.c.0.s8 %v1421
    %v1423 = vlaneseq
    %v1424 = vshrl.u32 %v1423, 7
    %v1425 = vsub.s32 %v1422, %v1424
    %v1426 = vrot.slane %v1412, %v1425
    %v1427 = vcombine.low %v1419, %v1426
    %v1428 = vcombine.low %v1166, %v1169
    %v1429 = vcombine.low %v1173, %v1176
    %v1431 = vunpack.c.l.s4 1983009808
    %v1432 = vunpack.c.0.s8 %v1431
    %v1433 = vlaneseq
    %v1434 = vshrl.u32 %v1433, 7
    %v1435 = vsub.s32 %v1432, %v1434
    %v1436 = vrot.slane %v1428, %v1435
    %v1438 = vunpack.c.l.s4 1983009808
    %v1439 = vunpack.c.0.s8 %v1438
    %v1440 = vlaneseq
    %v1441 = vshrl.u32 %v1440, 7
    %v1442 = vsub.s32 %v1439, %v1441
    %v1443 = vrot.slane %v1429, %v1442
    %v1444 = vcombine.low %v1436, %v1443
    %v1445 = vcombine.low %v1179, %v1182
    %v1446 = vcombine.low %v1185, %v1189
    %v1448 = vunpack.c.l.s4 1983009808
    %v1449 = vunpack.c.0.s8 %v1448
    %v1450 = vlaneseq
    %v1451 = vshrl.u32 %v1450, 7
    %v1452 = vsub.s32 %v1449, %v1451
    %v1453 = vrot.slane %v1445, %v1452
    %v1455 = vunpack.c.l.s4 1983009808
    %v1456 = vunpack.c.0.s8 %v1455
    %v1457 = vlaneseq
    %v1458 = vshrl.u32 %v1457, 7
    %v1459 = vsub.s32 %v1456, %v1458
    %v1460 = vrot.slane %v1446, %v1459
    %v1461 = vcombine.low %v1453, %v1460
    %v1462 = vcombine.low %v1192, %v1195
    %v1463 = vcombine.low %v1198, %v1201
    %v1465 = vunpack.c.l.s4 1983009808
    %v1466 = vunpack.c.0.s8 %v1465
    %v1467 = vlaneseq
    %v1468 = vshrl.u32 %v1467, 7
    %v1469 = vsub.s32 %v1466, %v1468
    %v1470 = vrot.slane %v1462, %v1469
    %v1472 = vunpack.c.l.s4 1983009808
    %v1473 = vunpack.c.0.s8 %v1472
    %v1474 = vlaneseq
    %v1475 = vshrl.u32 %v1474, 7
    %v1476 = vsub.s32 %v1473, %v1475
    %v1477 = vrot.slane %v1463, %v1476
    %v1478 = vcombine.low %v1470, %v1477
    %v1479 = vcombine.low %v1205, %v1208
    %v1480 = vcombine.low %v1211, %v1214
    %v1482 = vunpack.c.l.s4 1983009808
    %v1483 = vunpack.c.0.s8 %v1482
    %v1484 = vlaneseq
    %v1485 = vshrl.u32 %v1484, 7
    %v1486 = vsub.s32 %v1483, %v1485
    %v1487 = vrot.slane %v1479, %v1486
    %v1489 = vunpack.c.l.s4 1983009808
    %v1490 = vunpack.c.0.s8 %v1489
    %v1491 = vlaneseq
    %v1492 = vshrl.u32 %v1491, 7
    %v1493 = vsub.s32 %v1490, %v1492
    %v1494 = vrot.slane %v1480, %v1493
    %v1495 = vcombine.low %v1487, %v1494
    %v1496 = vcombine.low %v1217, %v1221
    %v1497 = vcombine.low %v1224, %v1227
    %v1499 = vunpack.c.l.s4 1983009808
    %v1500 = vunpack.c.0.s8 %v1499
    %v1501 = vlaneseq
    %v1502 = vshrl.u32 %v1501, 7
    %v1503 = vsub.s32 %v1500, %v1502
    %v1504 = vrot.slane %v1496, %v1503
    %v1506 = vunpack.c.l.s4 1983009808
    %v1507 = vunpack.c.0.s8 %v1506
    %v1508 = vlaneseq
    %v1509 = vshrl.u32 %v1508, 7
    %v1510 = vsub.s32 %v1507, %v1509
    %v1511 = vrot.slane %v1497, %v1510
    %v1512 = vcombine.low %v1504, %v1511
    %v1513 = vcombine.low %v1230, %v1233
    %v1514 = vcombine.low %v1237, %v1240
    %v1516 = vunpack.c.l.s4 1983009808
    %v1517 = vunpack.c.0.s8 %v1516
    %v1518 = vlaneseq
    %v1519 = vshrl.u32 %v1518, 7
    %v1520 = vsub.s32 %v1517, %v1519
    %v1521 = vrot.slane %v1513, %v1520
    %v1523 = vunpack.c.l.s4 1983009808
    %v1524 = vunpack.c.0.s8 %v1523
    %v1525 = vlaneseq
    %v1526 = vshrl.u32 %v1525, 7
    %v1527 = vsub.s32 %v1524, %v1526
    %v1528 = vrot.slane %v1514, %v1527
    %v1529 = vcombine.low %v1521, %v1528
    %v1530 = vcombine.low %v1243, %v1246
    %v1531 = vcombine.low %v1249, %v1253
    %v1533 = vunpack.c.l.s4 1983009808
    %v1534 = vunpack.c.0.s8 %v1533
    %v1535 = vlaneseq
    %v1536 = vshrl.u32 %v1535, 7
    %v1537 = vsub.s32 %v1534, %v1536
    %v1538 = vrot.slane %v1530, %v1537
    %v1540 = vunpack.c.l.s4 1983009808
    %v1541 = vunpack.c.0.s8 %v1540
    %v1542 = vlaneseq
    %v1543 = vshrl.u32 %v1542, 7
    %v1544 = vsub.s32 %v1541, %v1543
    %v1545 = vrot.slane %v1531, %v1544
    %v1546 = vcombine.low %v1538, %v1545
    %v1547 = vcombine.low %v1256, %v1259
    %v1548 = vcombine.low %v1262, %v1265
    %v1550 = vunpack.c.l.s4 1983009808
    %v1551 = vunpack.c.0.s8 %v1550
    %v1552 = vlaneseq
    %v1553 = vshrl.u32 %v1552, 7
    %v1554 = vsub.s32 %v1551, %v1553
    %v1555 = vrot.slane %v1547, %v1554
    %v1557 = vunpack.c.l.s4 1983009808
    %v1558 = vunpack.c.0.s8 %v1557
    %v1559 = vlaneseq
    %v1560 = vshrl.u32 %v1559, 7
    %v1561 = vsub.s32 %v1558, %v1560
    %v1562 = vrot.slane %v1548, %v1561
    %v1563 = vcombine.low %v1555, %v1562
    %v1564 = vcombine.low %v1269, %v1272
    %v1565 = vcombine.low %v1275, %v1278
    %v1567 = vunpack.c.l.s4 1983009808
    %v1568 = vunpack.c.0.s8 %v1567
    %v1569 = vlaneseq
    %v1570 = vshrl.u32 %v1569, 7
    %v1571 = vsub.s32 %v1568, %v1570
    %v1572 = vrot.slane %v1564, %v1571
    %v1574 = vunpack.c.l.s4 1983009808
    %v1575 = vunpack.c.0.s8 %v1574
    %v1576 = vlaneseq
    %v1577 = vshrl.u32 %v1576, 7
    %v1578 = vsub.s32 %v1575, %v1577
    %v1579 = vrot.slane %v1565, %v1578
    %v1580 = vcombine.low %v1572, %v1579
    %v1581 = vcombine.low %v1281, %v1285
    %v1582 = vcombine.low %v1288, %v1291
    %v1584 = vunpack.c.l.s4 1983009808
    %v1585 = vunpack.c.0.s8 %v1584
    %v1586 = vlaneseq
    %v1587 = vshrl.u32 %v1586, 7
    %v1588 = vsub.s32 %v1585, %v1587
    %v1589 = vrot.slane %v1581, %v1588
    %v1591 = vunpack.c.l.s4 1983009808
    %v1592 = vunpack.c.0.s8 %v1591
    %v1593 = vlaneseq
    %v1594 = vshrl.u32 %v1593, 7
    %v1595 = vsub.s32 %v1592, %v1594
    %v1596 = vrot.slane %v1582, %v1595
    %v1597 = vcombine.low %v1589, %v1596
    %v1598 = vcombine.low %v1294, %v1297
    %v1599 = vcombine.low %v1301, %v1304
    %v1601 = vunpack.c.l.s4 1983009808
    %v1602 = vunpack.c.0.s8 %v1601
    %v1603 = vlaneseq
    %v1604 = vshrl.u32 %v1603, 7
    %v1605 = vsub.s32 %v1602, %v1604
    %v1606 = vrot.slane %v1598, %v1605
    %v1608 = vunpack.c.l.s4 1983009808
    %v1609 = vunpack.c.0.s8 %v1608
    %v1610 = vlaneseq
    %v1611 = vshrl.u32 %v1610, 7
    %v1612 = vsub.s32 %v1609, %v1611
    %v1613 = vrot.slane %v1599, %v1612
    %v1614 = vcombine.low %v1606, %v1613
    %v1615 = vcombine.low %v1307, %v1310
    %v1616 = vcombine.low %v1313, %v1317
    %v1618 = vunpack.c.l.s4 1983009808
    %v1619 = vunpack.c.0.s8 %v1618
    %v1620 = vlaneseq
    %v1621 = vshrl.u32 %v1620, 7
    %v1622 = vsub.s32 %v1619, %v1621
    %v1623 = vrot.slane %v1615, %v1622
    %v1625 = vunpack.c.l.s4 1983009808
    %v1626 = vunpack.c.0.s8 %v1625
    %v1627 = vlaneseq
    %v1628 = vshrl.u32 %v1627, 7
    %v1629 = vsub.s32 %v1626, %v1628
    %v1630 = vrot.slane %v1616, %v1629
    %v1631 = vcombine.low %v1623, %v1630
    %v1632 = vcombine.low %v1320, %v1323
    %v1633 = vcombine.low %v1326, %v1329
    %v1635 = vunpack.c.l.s4 1983009808
    %v1636 = vunpack.c.0.s8 %v1635
    %v1637 = vlaneseq
    %v1638 = vshrl.u32 %v1637, 7
    %v1639 = vsub.s32 %v1636, %v1638
    %v1640 = vrot.slane %v1632, %v1639
    %v1642 = vunpack.c.l.s4 1983009808
    %v1643 = vunpack.c.0.s8 %v1642
    %v1644 = vlaneseq
    %v1645 = vshrl.u32 %v1644, 7
    %v1646 = vsub.s32 %v1643, %v1645
    %v1647 = vrot.slane %v1633, %v1646
    %v1648 = vcombine.low %v1640, %v1647
    %v1649 = vcombine.low %v1333, %v1336
    %v1650 = vcombine.low %v1339, %v1342
    %v1652 = vunpack.c.l.s4 1983009808
    %v1653 = vunpack.c.0.s8 %v1652
    %v1654 = vlaneseq
    %v1655 = vshrl.u32 %v1654, 7
    %v1656 = vsub.s32 %v1653, %v1655
    %v1657 = vrot.slane %v1649, %v1656
    %v1659 = vunpack.c.l.s4 1983009808
    %v1660 = vunpack.c.0.s8 %v1659
    %v1661 = vlaneseq
    %v1662 = vshrl.u32 %v1661, 7
    %v1663 = vsub.s32 %v1660, %v1662
    %v1664 = vrot.slane %v1650, %v1663
    %v1665 = vcombine.low %v1657, %v1664
    %v1666 = vcombine.low %v1345, %v1349
    %v1667 = vcombine.low %v1352, %v1355
    %v1669 = vunpack.c.l.s4 1983009808
    %v1670 = vunpack.c.0.s8 %v1669
    %v1671 = vlaneseq
    %v1672 = vshrl.u32 %v1671, 7
    %v1673 = vsub.s32 %v1670, %v1672
    %v1674 = vrot.slane %v1666, %v1673
    %v1676 = vunpack.c.l.s4 1983009808
    %v1677 = vunpack.c.0.s8 %v1676
    %v1678 = vlaneseq
    %v1679 = vshrl.u32 %v1678, 7
    %v1680 = vsub.s32 %v1677, %v1679
    %v1681 = vrot.slane %v1667, %v1680
    %v1682 = vcombine.low %v1674, %v1681
    %v1683 = vcombine.low %v1358, %v1361
    %v1684 = vcombine.low %v1365, %v1368
    %v1686 = vunpack.c.l.s4 1983009808
    %v1687 = vunpack.c.0.s8 %v1686
    %v1688 = vlaneseq
    %v1689 = vshrl.u32 %v1688, 7
    %v1690 = vsub.s32 %v1687, %v1689
    %v1691 = vrot.slane %v1683, %v1690
    %v1693 = vunpack.c.l.s4 1983009808
    %v1694 = vunpack.c.0.s8 %v1693
    %v1695 = vlaneseq
    %v1696 = vshrl.u32 %v1695, 7
    %v1697 = vsub.s32 %v1694, %v1696
    %v1698 = vrot.slane %v1684, %v1697
    %v1699 = vcombine.low %v1691, %v1698
    %v1700 = vcombine.low %v1371, %v1374
    %v1701 = vcombine.low %v1377, %v1381
    %v1703 = vunpack.c.l.s4 1983009808
    %v1704 = vunpack.c.0.s8 %v1703
    %v1705 = vlaneseq
    %v1706 = vshrl.u32 %v1705, 7
    %v1707 = vsub.s32 %v1704, %v1706
    %v1708 = vrot.slane %v1700, %v1707
    %v1710 = vunpack.c.l.s4 1983009808
    %v1711 = vunpack.c.0.s8 %v1710
    %v1712 = vlaneseq
    %v1713 = vshrl.u32 %v1712, 7
    %v1714 = vsub.s32 %v1711, %v1713
    %v1715 = vrot.slane %v1701, %v1714
    %v1716 = vcombine.low %v1708, %v1715
    %v1717 = vcombine.low %v1384, %v1387
    %v1718 = vcombine.low %v1390, %v1393
    %v1720 = vunpack.c.l.s4 1983009808
    %v1721 = vunpack.c.0.s8 %v1720
    %v1722 = vlaneseq
    %v1723 = vshrl.u32 %v1722, 7
    %v1724 = vsub.s32 %v1721, %v1723
    %v1725 = vrot.slane %v1717, %v1724
    %v1727 = vunpack.c.l.s4 1983009808
    %v1728 = vunpack.c.0.s8 %v1727
    %v1729 = vlaneseq
    %v1730 = vshrl.u32 %v1729, 7
    %v1731 = vsub.s32 %v1728, %v1730
    %v1732 = vrot.slane %v1718, %v1731
    %v1733 = vcombine.low %v1725, %v1732
    %vm1734 = vcmask 130048
    %v1735 = vsel %vm1734, %v1410, 0
    %v1737 = vsel %vm1734, %v1427, 0
    %v1739 = vsel %vm1734, %v1444, 0
    %v1741 = vsel %vm1734, %v1461, 0
    %v1743 = vsel %vm1734, %v1478, 0
    %v1745 = vsel %vm1734, %v1495, 0
    %v1747 = vsel %vm1734, %v1512, 0
    %v1749 = vsel %vm1734, %v1529, 0
    %v1751 = vsel %vm1734, %v1546, 0
    %v1753 = vsel %vm1734, %v1563, 0
    %v1755 = vsel %vm1734, %v1580, 0
    %v1757 = vsel %vm1734, %v1597, 0
    %v1759 = vsel %vm1734, %v1614, 0
    %v1761 = vsel %vm1734, %v1631, 0
    %v1763 = vsel %vm1734, %v1648, 0
    %v1765 = vsel %vm1734, %v1665, 0
    %v1767 = vsel %vm1734, %v1682, 0
    %v1769 = vsel %vm1734, %v1699, 0
    %v1771 = vsel %vm1734, %v1716, 0
    %v1773 = vsel %vm1734, %v1733, 0
    %1775 = vmatprep.subr.mxu0 0.0
    %1776 = vmatpush1.msra.mxu0 %v745
    %1777 = vmatprep.subr.mxu0 0.0
    %1778 = vmatpush1.msra.mxu0 %v746
    %1779 = vmatprep.subr.mxu0 0.0
    %1780 = vmatpush1.msra.mxu0 0.0
    %1781 = vmatprep.subr.mxu0 0.0
    %1782 = vmatpush1.msra.mxu0 0.0
    %1783 = vmatprep.subr.mxu0 0.0
    %1784 = vmatpush1.msra.mxu0 0.0
    %1785 = vmatprep.subr.mxu0 0.0
    %1786 = vmatpush1.msra.mxu0 0.0
    %1787 = vmatprep.subr.mxu0 0.0
    %1788 = vmatpush1.msra.mxu0 0.0
    %1789 = vmatprep.subr.mxu0 0.0
    %1790 = vmatpush1.msra.mxu0 0.0
    %1791 = vmatprep.subr.mxu0 0.0
    %1792 = vmatpush1.msra.mxu0 0.0
    %1793 = vmatprep.subr.mxu0 0.0
    %1794 = vmatpush1.msra.mxu0 0.0
    %1795 = vmatprep.subr.mxu0 0.0
    %1796 = vmatpush1.msra.mxu0 0.0
    %1797 = vmatprep.subr.mxu0 0.0
    %1798 = vmatpush1.msra.mxu0 0.0
    %1799 = vmatprep.subr.mxu0 0.0
    %1800 = vmatpush1.msra.mxu0 0.0
    %1801 = vmatprep.subr.mxu0 0.0
    %1802 = vmatpush1.msra.mxu0 0.0
    %1803 = vmatprep.subr.mxu0 0.0
    %1804 = vmatpush1.msra.mxu0 0.0
    %1805 = vmatprep.subr.mxu0 0.0
    %1806 = vmatpush1.msra.mxu0 0.0
    %1807 = vmatprep.subr.mxu0 0.0
    %1808 = vmatpush1.msra.mxu0 0.0
    %1809 = vmatprep.subr.mxu0 0.0
    %1810 = vmatpush1.msra.mxu0 0.0
    %1811 = vmatprep.subr.mxu0 0.0
    %1812 = vmatpush1.msra.mxu0 0.0
    %1813 = vmatprep.subr.mxu0 0.0
    %1814 = vmatpush1.msra.mxu0 0.0
    %1815 = vmatprep.subr.mxu0 0.0
    %1816 = vmatpush1.msra.mxu0 0.0
    %1817 = vmatprep.subr.mxu0 0.0
    %1818 = vmatpush1.msra.mxu0 0.0
    %1819 = vmatprep.subr.mxu0 0.0
    %1820 = vmatpush1.msra.mxu0 0.0
    %1821 = vmatprep.subr.mxu0 0.0
    %1822 = vmatpush1.msra.mxu0 0.0
    %1823 = vmatprep.subr.mxu0 0.0
    %1824 = vmatpush1.msra.mxu0 0.0
    %1825 = vmatprep.subr.mxu0 0.0
    %1826 = vmatpush1.msra.mxu0 0.0
    %1827 = vmatprep.subr.mxu0 0.0
    %1828 = vmatpush1.msra.mxu0 0.0
    %1829 = vmatprep.subr.mxu0 0.0
    %1830 = vmatpush1.msra.mxu0 0.0
    %1831 = vmatprep.subr.mxu0 0.0
    %1832 = vmatpush1.msra.mxu0 0.0
    %1833 = vmatprep.subr.mxu0 0.0
    %1834 = vmatpush1.msra.mxu0 0.0
    %1835 = vmatprep.subr.mxu0 0.0
    %1836 = vmatpush1.msra.mxu0 0.0
    %1837 = vmatprep.subr.mxu0 0.0
    %1838 = vmatpush1.msra.mxu0 0.0
    %1839 = vmatprep.mubr.f32.mxu0 0.0
    %1840 = vmatmul.mubr.f32.gmra.mrb[0].mxu0 %v1735
    %v1841 = vpop.f32.mrb[0].mxu0
    %v1842 = vadd.f32 0.0, %v1841
    %v1843 = vpop.f32.mrb[0].mxu0
    %1844 = vmatprep.mubr.f32.mxu0 0.0
    %1845 = vmatmul.mubr.f32.gmra.mrb[0].mxu0 %v1737
    %v1846 = vpop.f32.mrb[0].mxu0
    %v1847 = vadd.f32 0.0, %v1846
    %v1848 = vpop.f32.mrb[0].mxu0
    %1849 = vmatprep.mubr.f32.mxu0 0.0
    %1850 = vmatmul.mubr.f32.gmra.mrb[0].mxu0 %v1739
    %v1851 = vpop.f32.mrb[0].mxu0
    %v1852 = vadd.f32 0.0, %v1851
    %v1853 = vpop.f32.mrb[0].mxu0
    %1854 = vmatprep.mubr.f32.mxu0 0.0
    %1855 = vmatmul.mubr.f32.gmra.mrb[0].mxu0 %v1741
    %v1856 = vpop.f32.mrb[0].mxu0
    %v1857 = vadd.f32 0.0, %v1856
    %v1858 = vpop.f32.mrb[0].mxu0
    %1859 = vmatprep.mubr.f32.mxu0 0.0
    %1860 = vmatmul.mubr.f32.gmra.mrb[0].mxu0 %v1743
    %v1861 = vpop.f32.mrb[0].mxu0
    %v1862 = vadd.f32 0.0, %v1861
    %v1863 = vpop.f32.mrb[0].mxu0
    %1864 = vmatprep.mubr.f32.mxu0 0.0
    %1865 = vmatmul.mubr.f32.gmra.mrb[0].mxu0 %v1745
    %v1866 = vpop.f32.mrb[0].mxu0
    %v1867 = vadd.f32 0.0, %v1866
    %v1868 = vpop.f32.mrb[0].mxu0
    %1869 = vmatprep.mubr.f32.mxu0 0.0
    %1870 = vmatmul.mubr.f32.gmra.mrb[0].mxu0 %v1747
    %v1871 = vpop.f32.mrb[0].mxu0
    %v1872 = vadd.f32 0.0, %v1871
    %v1873 = vpop.f32.mrb[0].mxu0
    %1874 = vmatprep.mubr.f32.mxu0 0.0
    %1875 = vmatmul.mubr.f32.gmra.mrb[0].mxu0 %v1749
    %v1876 = vpop.f32.mrb[0].mxu0
    %v1877 = vadd.f32 0.0, %v1876
    %v1878 = vpop.f32.mrb[0].mxu0
    %1879 = vmatprep.mubr.f32.mxu0 0.0
    %1880 = vmatmul.mubr.f32.gmra.mrb[0].mxu0 %v1751
    %v1881 = vpop.f32.mrb[0].mxu0
    %v1882 = vadd.f32 0.0, %v1881
    %v1883 = vpop.f32.mrb[0].mxu0
    %1884 = vmatprep.mubr.f32.mxu0 0.0
    %1885 = vmatmul.mubr.f32.gmra.mrb[0].mxu0 %v1753
    %v1886 = vpop.f32.mrb[0].mxu0
    %v1887 = vadd.f32 0.0, %v1886
    %v1888 = vpop.f32.mrb[0].mxu0
    %1889 = vmatprep.mubr.f32.mxu0 0.0
    %1890 = vmatmul.mubr.f32.gmra.mrb[0].mxu0 %v1755
    %v1891 = vpop.f32.mrb[0].mxu0
    %v1892 = vadd.f32 0.0, %v1891
    %v1893 = vpop.f32.mrb[0].mxu0
    %1894 = vmatprep.mubr.f32.mxu0 0.0
    %1895 = vmatmul.mubr.f32.gmra.mrb[0].mxu0 %v1757
    %v1896 = vpop.f32.mrb[0].mxu0
    %v1897 = vadd.f32 0.0, %v1896
    %v1898 = vpop.f32.mrb[0].mxu0
    %1899 = vmatprep.mubr.f32.mxu0 0.0
    %1900 = vmatmul.mubr.f32.gmra.mrb[0].mxu0 %v1759
    %v1901 = vpop.f32.mrb[0].mxu0
    %v1902 = vadd.f32 0.0, %v1901
    %v1903 = vpop.f32.mrb[0].mxu0
    %1904 = vmatprep.mubr.f32.mxu0 0.0
    %1905 = vmatmul.mubr.f32.gmra.mrb[0].mxu0 %v1761
    %v1906 = vpop.f32.mrb[0].mxu0
    %v1907 = vadd.f32 0.0, %v1906
    %v1908 = vpop.f32.mrb[0].mxu0
    %1909 = vmatprep.mubr.f32.mxu0 0.0
    %1910 = vmatmul.mubr.f32.gmra.mrb[0].mxu0 %v1763
    %v1911 = vpop.f32.mrb[0].mxu0
    %v1912 = vadd.f32 0.0, %v1911
    %v1913 = vpop.f32.mrb[0].mxu0
    %1914 = vmatprep.mubr.f32.mxu0 0.0
    %1915 = vmatmul.mubr.f32.gmra.mrb[0].mxu0 %v1765
    %v1916 = vpop.f32.mrb[0].mxu0
    %v1917 = vadd.f32 0.0, %v1916
    %v1918 = vpop.f32.mrb[0].mxu0
    %1919 = vmatprep.mubr.f32.mxu0 0.0
    %1920 = vmatmul.mubr.f32.gmra.mrb[0].mxu0 %v1767
    %v1921 = vpop.f32.mrb[0].mxu0
    %v1922 = vadd.f32 0.0, %v1921
    %v1923 = vpop.f32.mrb[0].mxu0
    %1924 = vmatprep.mubr.f32.mxu0 0.0
    %1925 = vmatmul.mubr.f32.gmra.mrb[0].mxu0 %v1769
    %v1926 = vpop.f32.mrb[0].mxu0
    %v1927 = vadd.f32 0.0, %v1926
    %v1928 = vpop.f32.mrb[0].mxu0
    %1929 = vmatprep.mubr.f32.mxu0 0.0
    %1930 = vmatmul.mubr.f32.gmra.mrb[0].mxu0 %v1771
    %v1931 = vpop.f32.mrb[0].mxu0
    %v1932 = vadd.f32 0.0, %v1931
    %v1933 = vpop.f32.mrb[0].mxu0
    %1934 = vmatprep.mubr.f32.mxu0 0.0
    %1935 = vmatmul.mubr.f32.gmra.mrb[0].mxu0 %v1773
    %v1936 = vpop.f32.mrb[0].mxu0
    %v1937 = vadd.f32 0.0, %v1936
    %v1938 = vpop.f32.mrb[0].mxu0
    %1939 = vdwg.mxu0
    %v1940 = vcombine.low %v753, %v754
    %v1941 = vcombine.low %v761, %v762
    %v1943 = vunpack.c.l.s4 1983009808
    %v1944 = vunpack.c.0.s8 %v1943
    %v1945 = vlaneseq
    %v1946 = vshrl.u32 %v1945, 7
    %v1947 = vsub.s32 %v1944, %v1946
    %v1948 = vrot.slane %v1940, %v1947
    %v1950 = vunpack.c.l.s4 1983009808
    %v1951 = vunpack.c.0.s8 %v1950
    %v1952 = vlaneseq
    %v1953 = vshrl.u32 %v1952, 7
    %v1954 = vsub.s32 %v1951, %v1953
    %v1955 = vrot.slane %v1941, %v1954
    %v1956 = vcombine.low %v1948, %v1955
    %v1957 = vcombine.low %v769, %v777
    %v1958 = vcombine.low %v778, %v785
    %v1960 = vunpack.c.l.s4 1983009808
    %v1961 = vunpack.c.0.s8 %v1960
    %v1962 = vlaneseq
    %v1963 = vshrl.u32 %v1962, 7
    %v1964 = vsub.s32 %v1961, %v1963
    %v1965 = vrot.slane %v1957, %v1964
    %v1967 = vunpack.c.l.s4 1983009808
    %v1968 = vunpack.c.0.s8 %v1967
    %v1969 = vlaneseq
    %v1970 = vshrl.u32 %v1969, 7
    %v1971 = vsub.s32 %v1968, %v1970
    %v1972 = vrot.slane %v1958, %v1971
    %v1973 = vcombine.low %v1965, %v1972
    %v1974 = vcombine.low %v786, %v793
    %v1975 = vcombine.low %v801, %v802
    %v1977 = vunpack.c.l.s4 1983009808
    %v1978 = vunpack.c.0.s8 %v1977
    %v1979 = vlaneseq
    %v1980 = vshrl.u32 %v1979, 7
    %v1981 = vsub.s32 %v1978, %v1980
    %v1982 = vrot.slane %v1974, %v1981
    %v1984 = vunpack.c.l.s4 1983009808
    %v1985 = vunpack.c.0.s8 %v1984
    %v1986 = vlaneseq
    %v1987 = vshrl.u32 %v1986, 7
    %v1988 = vsub.s32 %v1985, %v1987
    %v1989 = vrot.slane %v1975, %v1988
    %v1990 = vcombine.low %v1982, %v1989
    %v1991 = vcombine.low %v809, %v810
    %v1992 = vcombine.low %v817, %v825
    %v1994 = vunpack.c.l.s4 1983009808
    %v1995 = vunpack.c.0.s8 %v1994
    %v1996 = vlaneseq
    %v1997 = vshrl.u32 %v1996, 7
    %v1998 = vsub.s32 %v1995, %v1997
    %v1999 = vrot.slane %v1991, %v1998
    %v2001 = vunpack.c.l.s4 1983009808
    %v2002 = vunpack.c.0.s8 %v2001
    %v2003 = vlaneseq
    %v2004 = vshrl.u32 %v2003, 7
    %v2005 = vsub.s32 %v2002, %v2004
    %v2006 = vrot.slane %v1992, %v2005
    %v2007 = vcombine.low %v1999, %v2006
    %v2008 = vcombine.low %v826, %v833
    %v2009 = vcombine.low %v834, %v841
    %v2011 = vunpack.c.l.s4 1983009808
    %v2012 = vunpack.c.0.s8 %v2011
    %v2013 = vlaneseq
    %v2014 = vshrl.u32 %v2013, 7
    %v2015 = vsub.s32 %v2012, %v2014
    %v2016 = vrot.slane %v2008, %v2015
    %v2018 = vunpack.c.l.s4 1983009808
    %v2019 = vunpack.c.0.s8 %v2018
    %v2020 = vlaneseq
    %v2021 = vshrl.u32 %v2020, 7
    %v2022 = vsub.s32 %v2019, %v2021
    %v2023 = vrot.slane %v2009, %v2022
    %v2024 = vcombine.low %v2016, %v2023
    %v2025 = vcombine.low %v849, %v850
    %v2026 = vcombine.low %v857, %v858
    %v2028 = vunpack.c.l.s4 1983009808
    %v2029 = vunpack.c.0.s8 %v2028
    %v2030 = vlaneseq
    %v2031 = vshrl.u32 %v2030, 7
    %v2032 = vsub.s32 %v2029, %v2031
    %v2033 = vrot.slane %v2025, %v2032
    %v2035 = vunpack.c.l.s4 1983009808
    %v2036 = vunpack.c.0.s8 %v2035
    %v2037 = vlaneseq
    %v2038 = vshrl.u32 %v2037, 7
    %v2039 = vsub.s32 %v2036, %v2038
    %v2040 = vrot.slane %v2026, %v2039
    %v2041 = vcombine.low %v2033, %v2040
    %v2042 = vcombine.low %v865, %v873
    %v2043 = vcombine.low %v874, %v881
    %v2045 = vunpack.c.l.s4 1983009808
    %v2046 = vunpack.c.0.s8 %v2045
    %v2047 = vlaneseq
    %v2048 = vshrl.u32 %v2047, 7
    %v2049 = vsub.s32 %v2046, %v2048
    %v2050 = vrot.slane %v2042, %v2049
    %v2052 = vunpack.c.l.s4 1983009808
    %v2053 = vunpack.c.0.s8 %v2052
    %v2054 = vlaneseq
    %v2055 = vshrl.u32 %v2054, 7
    %v2056 = vsub.s32 %v2053, %v2055
    %v2057 = vrot.slane %v2043, %v2056
    %v2058 = vcombine.low %v2050, %v2057
    %v2059 = vcombine.low %v882, %v889
    %v2060 = vcombine.low %v897, %v898
    %v2062 = vunpack.c.l.s4 1983009808
    %v2063 = vunpack.c.0.s8 %v2062
    %v2064 = vlaneseq
    %v2065 = vshrl.u32 %v2064, 7
    %v2066 = vsub.s32 %v2063, %v2065
    %v2067 = vrot.slane %v2059, %v2066
    %v2069 = vunpack.c.l.s4 1983009808
    %v2070 = vunpack.c.0.s8 %v2069
    %v2071 = vlaneseq
    %v2072 = vshrl.u32 %v2071, 7
    %v2073 = vsub.s32 %v2070, %v2072
    %v2074 = vrot.slane %v2060, %v2073
    %v2075 = vcombine.low %v2067, %v2074
    %v2076 = vcombine.low %v905, %v906
    %v2077 = vcombine.low %v913, %v921
    %v2079 = vunpack.c.l.s4 1983009808
    %v2080 = vunpack.c.0.s8 %v2079
    %v2081 = vlaneseq
    %v2082 = vshrl.u32 %v2081, 7
    %v2083 = vsub.s32 %v2080, %v2082
    %v2084 = vrot.slane %v2076, %v2083
    %v2086 = vunpack.c.l.s4 1983009808
    %v2087 = vunpack.c.0.s8 %v2086
    %v2088 = vlaneseq
    %v2089 = vshrl.u32 %v2088, 7
    %v2090 = vsub.s32 %v2087, %v2089
    %v2091 = vrot.slane %v2077, %v2090
    %v2092 = vcombine.low %v2084, %v2091
    %v2093 = vcombine.low %v922, %v929
    %v2094 = vcombine.low %v930, %v937
    %v2096 = vunpack.c.l.s4 1983009808
    %v2097 = vunpack.c.0.s8 %v2096
    %v2098 = vlaneseq
    %v2099 = vshrl.u32 %v2098, 7
    %v2100 = vsub.s32 %v2097, %v2099
    %v2101 = vrot.slane %v2093, %v2100
    %v2103 = vunpack.c.l.s4 1983009808
    %v2104 = vunpack.c.0.s8 %v2103
    %v2105 = vlaneseq
    %v2106 = vshrl.u32 %v2105, 7
    %v2107 = vsub.s32 %v2104, %v2106
    %v2108 = vrot.slane %v2094, %v2107
    %v2109 = vcombine.low %v2101, %v2108
    %v2110 = vcombine.low %v945, %v946
    %v2111 = vcombine.low %v953, %v954
    %v2113 = vunpack.c.l.s4 1983009808
    %v2114 = vunpack.c.0.s8 %v2113
    %v2115 = vlaneseq
    %v2116 = vshrl.u32 %v2115, 7
    %v2117 = vsub.s32 %v2114, %v2116
    %v2118 = vrot.slane %v2110, %v2117
    %v2120 = vunpack.c.l.s4 1983009808
    %v2121 = vunpack.c.0.s8 %v2120
    %v2122 = vlaneseq
    %v2123 = vshrl.u32 %v2122, 7
    %v2124 = vsub.s32 %v2121, %v2123
    %v2125 = vrot.slane %v2111, %v2124
    %v2126 = vcombine.low %v2118, %v2125
    %v2127 = vcombine.low %v961, %v969
    %v2128 = vcombine.low %v970, %v977
    %v2130 = vunpack.c.l.s4 1983009808
    %v2131 = vunpack.c.0.s8 %v2130
    %v2132 = vlaneseq
    %v2133 = vshrl.u32 %v2132, 7
    %v2134 = vsub.s32 %v2131, %v2133
    %v2135 = vrot.slane %v2127, %v2134
    %v2137 = vunpack.c.l.s4 1983009808
    %v2138 = vunpack.c.0.s8 %v2137
    %v2139 = vlaneseq
    %v2140 = vshrl.u32 %v2139, 7
    %v2141 = vsub.s32 %v2138, %v2140
    %v2142 = vrot.slane %v2128, %v2141
    %v2143 = vcombine.low %v2135, %v2142
    %v2144 = vcombine.low %v978, %v985
    %v2145 = vcombine.low %v993, %v994
    %v2147 = vunpack.c.l.s4 1983009808
    %v2148 = vunpack.c.0.s8 %v2147
    %v2149 = vlaneseq
    %v2150 = vshrl.u32 %v2149, 7
    %v2151 = vsub.s32 %v2148, %v2150
    %v2152 = vrot.slane %v2144, %v2151
    %v2154 = vunpack.c.l.s4 1983009808
    %v2155 = vunpack.c.0.s8 %v2154
    %v2156 = vlaneseq
    %v2157 = vshrl.u32 %v2156, 7
    %v2158 = vsub.s32 %v2155, %v2157
    %v2159 = vrot.slane %v2145, %v2158
    %v2160 = vcombine.low %v2152, %v2159
    %v2161 = vcombine.low %v1001, %v1002
    %v2162 = vcombine.low %v1009, %v1017
    %v2164 = vunpack.c.l.s4 1983009808
    %v2165 = vunpack.c.0.s8 %v2164
    %v2166 = vlaneseq
    %v2167 = vshrl.u32 %v2166, 7
    %v2168 = vsub.s32 %v2165, %v2167
    %v2169 = vrot.slane %v2161, %v2168
    %v2171 = vunpack.c.l.s4 1983009808
    %v2172 = vunpack.c.0.s8 %v2171
    %v2173 = vlaneseq
    %v2174 = vshrl.u32 %v2173, 7
    %v2175 = vsub.s32 %v2172, %v2174
    %v2176 = vrot.slane %v2162, %v2175
    %v2177 = vcombine.low %v2169, %v2176
    %v2178 = vcombine.low %v1018, %v1025
    %v2179 = vcombine.low %v1026, %v1033
    %v2181 = vunpack.c.l.s4 1983009808
    %v2182 = vunpack.c.0.s8 %v2181
    %v2183 = vlaneseq
    %v2184 = vshrl.u32 %v2183, 7
    %v2185 = vsub.s32 %v2182, %v2184
    %v2186 = vrot.slane %v2178, %v2185
    %v2188 = vunpack.c.l.s4 1983009808
    %v2189 = vunpack.c.0.s8 %v2188
    %v2190 = vlaneseq
    %v2191 = vshrl.u32 %v2190, 7
    %v2192 = vsub.s32 %v2189, %v2191
    %v2193 = vrot.slane %v2179, %v2192
    %v2194 = vcombine.low %v2186, %v2193
    %v2195 = vcombine.low %v1041, %v1042
    %v2196 = vcombine.low %v1049, %v1050
    %v2198 = vunpack.c.l.s4 1983009808
    %v2199 = vunpack.c.0.s8 %v2198
    %v2200 = vlaneseq
    %v2201 = vshrl.u32 %v2200, 7
    %v2202 = vsub.s32 %v2199, %v2201
    %v2203 = vrot.slane %v2195, %v2202
    %v2205 = vunpack.c.l.s4 1983009808
    %v2206 = vunpack.c.0.s8 %v2205
    %v2207 = vlaneseq
    %v2208 = vshrl.u32 %v2207, 7
    %v2209 = vsub.s32 %v2206, %v2208
    %v2210 = vrot.slane %v2196, %v2209
    %v2211 = vcombine.low %v2203, %v2210
    %v2212 = vcombine.low %v1057, %v1065
    %v2213 = vcombine.low %v1066, %v1073
    %v2215 = vunpack.c.l.s4 1983009808
    %v2216 = vunpack.c.0.s8 %v2215
    %v2217 = vlaneseq
    %v2218 = vshrl.u32 %v2217, 7
    %v2219 = vsub.s32 %v2216, %v2218
    %v2220 = vrot.slane %v2212, %v2219
    %v2222 = vunpack.c.l.s4 1983009808
    %v2223 = vunpack.c.0.s8 %v2222
    %v2224 = vlaneseq
    %v2225 = vshrl.u32 %v2224, 7
    %v2226 = vsub.s32 %v2223, %v2225
    %v2227 = vrot.slane %v2213, %v2226
    %v2228 = vcombine.low %v2220, %v2227
    %v2229 = vcombine.low %v1074, %v1081
    %v2230 = vcombine.low %v1089, %v1090
    %v2232 = vunpack.c.l.s4 1983009808
    %v2233 = vunpack.c.0.s8 %v2232
    %v2234 = vlaneseq
    %v2235 = vshrl.u32 %v2234, 7
    %v2236 = vsub.s32 %v2233, %v2235
    %v2237 = vrot.slane %v2229, %v2236
    %v2239 = vunpack.c.l.s4 1983009808
    %v2240 = vunpack.c.0.s8 %v2239
    %v2241 = vlaneseq
    %v2242 = vshrl.u32 %v2241, 7
    %v2243 = vsub.s32 %v2240, %v2242
    %v2244 = vrot.slane %v2230, %v2243
    %v2245 = vcombine.low %v2237, %v2244
    %v2246 = vcombine.low %v1097, %v1098
    %v2247 = vcombine.low %v1105, %v1113
    %v2249 = vunpack.c.l.s4 1983009808
    %v2250 = vunpack.c.0.s8 %v2249
    %v2251 = vlaneseq
    %v2252 = vshrl.u32 %v2251, 7
    %v2253 = vsub.s32 %v2250, %v2252
    %v2254 = vrot.slane %v2246, %v2253
    %v2256 = vunpack.c.l.s4 1983009808
    %v2257 = vunpack.c.0.s8 %v2256
    %v2258 = vlaneseq
    %v2259 = vshrl.u32 %v2258, 7
    %v2260 = vsub.s32 %v2257, %v2259
    %v2261 = vrot.slane %v2247, %v2260
    %v2262 = vcombine.low %v2254, %v2261
    %v2263 = vcombine.low %v1114, %v1121
    %v2264 = vcombine.low %v1122, %v1129
    %v2266 = vunpack.c.l.s4 1983009808
    %v2267 = vunpack.c.0.s8 %v2266
    %v2268 = vlaneseq
    %v2269 = vshrl.u32 %v2268, 7
    %v2270 = vsub.s32 %v2267, %v2269
    %v2271 = vrot.slane %v2263, %v2270
    %v2273 = vunpack.c.l.s4 1983009808
    %v2274 = vunpack.c.0.s8 %v2273
    %v2275 = vlaneseq
    %v2276 = vshrl.u32 %v2275, 7
    %v2277 = vsub.s32 %v2274, %v2276
    %v2278 = vrot.slane %v2264, %v2277
    %v2279 = vcombine.low %v2271, %v2278
    %v2280 = vsel %vm1734, %v1956, 0
    %v2282 = vsel %vm1734, %v1973, 0
    %v2284 = vsel %vm1734, %v1990, 0
    %v2286 = vsel %vm1734, %v2007, 0
    %v2288 = vsel %vm1734, %v2024, 0
    %v2290 = vsel %vm1734, %v2041, 0
    %v2292 = vsel %vm1734, %v2058, 0
    %v2294 = vsel %vm1734, %v2075, 0
    %v2296 = vsel %vm1734, %v2092, 0
    %v2298 = vsel %vm1734, %v2109, 0
    %v2300 = vsel %vm1734, %v2126, 0
    %v2302 = vsel %vm1734, %v2143, 0
    %v2304 = vsel %vm1734, %v2160, 0
    %v2306 = vsel %vm1734, %v2177, 0
    %v2308 = vsel %vm1734, %v2194, 0
    %v2310 = vsel %vm1734, %v2211, 0
    %v2312 = vsel %vm1734, %v2228, 0
    %v2314 = vsel %vm1734, %v2245, 0
    %v2316 = vsel %vm1734, %v2262, 0
    %v2318 = vsel %vm1734, %v2279, 0
    %2320 = vmatprep.subr.mxu0 0.0
    %2321 = vmatpush1.msra.mxu0 %v742
    %2322 = vmatprep.subr.mxu0 0.0
    %2323 = vmatpush1.msra.mxu0 %v743
    %2324 = vmatprep.subr.mxu0 0.0
    %2325 = vmatpush1.msra.mxu0 0.0
    %2326 = vmatprep.subr.mxu0 0.0
    %2327 = vmatpush1.msra.mxu0 0.0
    %2328 = vmatprep.subr.mxu0 0.0
    %2329 = vmatpush1.msra.mxu0 0.0
    %2330 = vmatprep.subr.mxu0 0.0
    %2331 = vmatpush1.msra.mxu0 0.0
    %2332 = vmatprep.subr.mxu0 0.0
    %2333 = vmatpush1.msra.mxu0 0.0
    %2334 = vmatprep.subr.mxu0 0.0
    %2335 = vmatpush1.msra.mxu0 0.0
    %2336 = vmatprep.subr.mxu0 0.0
    %2337 = vmatpush1.msra.mxu0 0.0
    %2338 = vmatprep.subr.mxu0 0.0
    %2339 = vmatpush1.msra.mxu0 0.0
    %2340 = vmatprep.subr.mxu0 0.0
    %2341 = vmatpush1.msra.mxu0 0.0
    %2342 = vmatprep.subr.mxu0 0.0
    %2343 = vmatpush1.msra.mxu0 0.0
    %2344 = vmatprep.subr.mxu0 0.0
    %2345 = vmatpush1.msra.mxu0 0.0
    %2346 = vmatprep.subr.mxu0 0.0
    %2347 = vmatpush1.msra.mxu0 0.0
    %2348 = vmatprep.subr.mxu0 0.0
    %2349 = vmatpush1.msra.mxu0 0.0
    %2350 = vmatprep.subr.mxu0 0.0
    %2351 = vmatpush1.msra.mxu0 0.0
    %2352 = vmatprep.subr.mxu0 0.0
    %2353 = vmatpush1.msra.mxu0 0.0
    %2354 = vmatprep.subr.mxu0 0.0
    %2355 = vmatpush1.msra.mxu0 0.0
    %2356 = vmatprep.subr.mxu0 0.0
    %2357 = vmatpush1.msra.mxu0 0.0
    %2358 = vmatprep.subr.mxu0 0.0
    %2359 = vmatpush1.msra.mxu0 0.0
    %2360 = vmatprep.subr.mxu0 0.0
    %2361 = vmatpush1.msra.mxu0 0.0
    %2362 = vmatprep.subr.mxu0 0.0
    %2363 = vmatpush1.msra.mxu0 0.0
    %2364 = vmatprep.subr.mxu0 0.0
    %2365 = vmatpush1.msra.mxu0 0.0
    %2366 = vmatprep.subr.mxu0 0.0
    %2367 = vmatpush1.msra.mxu0 0.0
    %2368 = vmatprep.subr.mxu0 0.0
    %2369 = vmatpush1.msra.mxu0 0.0
    %2370 = vmatprep.subr.mxu0 0.0
    %2371 = vmatpush1.msra.mxu0 0.0
    %2372 = vmatprep.subr.mxu0 0.0
    %2373 = vmatpush1.msra.mxu0 0.0
    %2374 = vmatprep.subr.mxu0 0.0
    %2375 = vmatpush1.msra.mxu0 0.0
    %2376 = vmatprep.subr.mxu0 0.0
    %2377 = vmatpush1.msra.mxu0 0.0
    %2378 = vmatprep.subr.mxu0 0.0
    %2379 = vmatpush1.msra.mxu0 0.0
    %2380 = vmatprep.subr.mxu0 0.0
    %2381 = vmatpush1.msra.mxu0 0.0
    %2382 = vmatprep.subr.mxu0 0.0
    %2383 = vmatpush1.msra.mxu0 0.0
    %2384 = vmatprep.mubr.f32.mxu0 0.0
    %2385 = vmatmul.mubr.f32.gmra.mrb[0].mxu0 %v2280
    %v2386 = vpop.f32.mrb[0].mxu0
    %v2387 = vadd.f32 %v1842, %v2386
    %v2388 = vpop.f32.mrb[0].mxu0
    %2389 = vmatprep.mubr.f32.mxu0 0.0
    %2390 = vmatmul.mubr.f32.gmra.mrb[0].mxu0 %v2282
    %v2391 = vpop.f32.mrb[0].mxu0
    %v2392 = vadd.f32 %v1847, %v2391
    %v2393 = vpop.f32.mrb[0].mxu0
    %2394 = vmatprep.mubr.f32.mxu0 0.0
    %2395 = vmatmul.mubr.f32.gmra.mrb[0].mxu0 %v2284
    %v2396 = vpop.f32.mrb[0].mxu0
    %v2397 = vadd.f32 %v1852, %v2396
    %v2398 = vpop.f32.mrb[0].mxu0
    %2399 = vmatprep.mubr.f32.mxu0 0.0
    %2400 = vmatmul.mubr.f32.gmra.mrb[0].mxu0 %v2286
    %v2401 = vpop.f32.mrb[0].mxu0
    %v2402 = vadd.f32 %v1857, %v2401
    %v2403 = vpop.f32.mrb[0].mxu0
    %2404 = vmatprep.mubr.f32.mxu0 0.0
    %2405 = vmatmul.mubr.f32.gmra.mrb[0].mxu0 %v2288
    %v2406 = vpop.f32.mrb[0].mxu0
    %v2407 = vadd.f32 %v1862, %v2406
    %v2408 = vpop.f32.mrb[0].mxu0
    %2409 = vmatprep.mubr.f32.mxu0 0.0
    %2410 = vmatmul.mubr.f32.gmra.mrb[0].mxu0 %v2290
    %v2411 = vpop.f32.mrb[0].mxu0
    %v2412 = vadd.f32 %v1867, %v2411
    %v2413 = vpop.f32.mrb[0].mxu0
    %2414 = vmatprep.mubr.f32.mxu0 0.0
    %2415 = vmatmul.mubr.f32.gmra.mrb[0].mxu0 %v2292
    %v2416 = vpop.f32.mrb[0].mxu0
    %v2417 = vadd.f32 %v1872, %v2416
    %v2418 = vpop.f32.mrb[0].mxu0
    %2419 = vmatprep.mubr.f32.mxu0 0.0
    %2420 = vmatmul.mubr.f32.gmra.mrb[0].mxu0 %v2294
    %v2421 = vpop.f32.mrb[0].mxu0
    %v2422 = vadd.f32 %v1877, %v2421
    %v2423 = vpop.f32.mrb[0].mxu0
    %2424 = vmatprep.mubr.f32.mxu0 0.0
    %2425 = vmatmul.mubr.f32.gmra.mrb[0].mxu0 %v2296
    %v2426 = vpop.f32.mrb[0].mxu0
    %v2427 = vadd.f32 %v1882, %v2426
    %v2428 = vpop.f32.mrb[0].mxu0
    %2429 = vmatprep.mubr.f32.mxu0 0.0
    %2430 = vmatmul.mubr.f32.gmra.mrb[0].mxu0 %v2298
    %v2431 = vpop.f32.mrb[0].mxu0
    %v2432 = vadd.f32 %v1887, %v2431
    %v2433 = vpop.f32.mrb[0].mxu0
    %2434 = vmatprep.mubr.f32.mxu0 0.0
    %2435 = vmatmul.mubr.f32.gmra.mrb[0].mxu0 %v2300
    %v2436 = vpop.f32.mrb[0].mxu0
    %v2437 = vadd.f32 %v1892, %v2436
    %v2438 = vpop.f32.mrb[0].mxu0
    %2439 = vmatprep.mubr.f32.mxu0 0.0
    %2440 = vmatmul.mubr.f32.gmra.mrb[0].mxu0 %v2302
    %v2441 = vpop.f32.mrb[0].mxu0
    %v2442 = vadd.f32 %v1897, %v2441
    %v2443 = vpop.f32.mrb[0].mxu0
    %2444 = vmatprep.mubr.f32.mxu0 0.0
    %2445 = vmatmul.mubr.f32.gmra.mrb[0].mxu0 %v2304
    %v2446 = vpop.f32.mrb[0].mxu0
    %v2447 = vadd.f32 %v1902, %v2446
    %v2448 = vpop.f32.mrb[0].mxu0
    %2449 = vmatprep.mubr.f32.mxu0 0.0
    %2450 = vmatmul.mubr.f32.gmra.mrb[0].mxu0 %v2306
    %v2451 = vpop.f32.mrb[0].mxu0
    %v2452 = vadd.f32 %v1907, %v2451
    %v2453 = vpop.f32.mrb[0].mxu0
    %2454 = vmatprep.mubr.f32.mxu0 0.0
    %2455 = vmatmul.mubr.f32.gmra.mrb[0].mxu0 %v2308
    %v2456 = vpop.f32.mrb[0].mxu0
    %v2457 = vadd.f32 %v1912, %v2456
    %v2458 = vpop.f32.mrb[0].mxu0
    %2459 = vmatprep.mubr.f32.mxu0 0.0
    %2460 = vmatmul.mubr.f32.gmra.mrb[0].mxu0 %v2310
    %v2461 = vpop.f32.mrb[0].mxu0
    %v2462 = vadd.f32 %v1917, %v2461
    %v2463 = vpop.f32.mrb[0].mxu0
    %2464 = vmatprep.mubr.f32.mxu0 0.0
    %2465 = vmatmul.mubr.f32.gmra.mrb[0].mxu0 %v2312
    %v2466 = vpop.f32.mrb[0].mxu0
    %v2467 = vadd.f32 %v1922, %v2466
    %v2468 = vpop.f32.mrb[0].mxu0
    %2469 = vmatprep.mubr.f32.mxu0 0.0
    %2470 = vmatmul.mubr.f32.gmra.mrb[0].mxu0 %v2314
    %v2471 = vpop.f32.mrb[0].mxu0
    %v2472 = vadd.f32 %v1927, %v2471
    %v2473 = vpop.f32.mrb[0].mxu0
    %2474 = vmatprep.mubr.f32.mxu0 0.0
    %2475 = vmatmul.mubr.f32.gmra.mrb[0].mxu0 %v2316
    %v2476 = vpop.f32.mrb[0].mxu0
    %v2477 = vadd.f32 %v1932, %v2476
    %v2478 = vpop.f32.mrb[0].mxu0
    %2479 = vmatprep.mubr.f32.mxu0 0.0
    %2480 = vmatmul.mubr.f32.gmra.mrb[0].mxu0 %v2318
    %v2481 = vpop.f32.mrb[0].mxu0
    %v2482 = vadd.f32 %v1937, %v2481
    %v2483 = vpop.f32.mrb[0].mxu0
    %2484 = vdwg.mxu0
    %v2505 = vcombine.high %v2387, %v2387
    %v2507 = vunpack.c.l.s4 1983009808
    %v2508 = vunpack.c.0.s8 %v2507
    %v2509 = vlaneseq
    %v2510 = vshrl.u32 %v2509, 7
    %v2511 = vsub.s32 %v2508, %v2510
    %v2512 = vrot.slane %v2387, %v2511
    %v2514 = vunpack.c.l.s4 1983009808
    %v2515 = vunpack.c.0.s8 %v2514
    %v2516 = vlaneseq
    %v2517 = vshrl.u32 %v2516, 7
    %v2518 = vsub.s32 %v2515, %v2517
    %v2519 = vrot.slane %v2505, %v2518
    %v2520 = vcombine.high %v2512, %v2512
    %v2521 = vcombine.high %v2519, %v2519
    %v2522 = vcombine.high %v2392, %v2392
    %v2524 = vunpack.c.l.s4 1983009808
    %v2525 = vunpack.c.0.s8 %v2524
    %v2526 = vlaneseq
    %v2527 = vshrl.u32 %v2526, 7
    %v2528 = vsub.s32 %v2525, %v2527
    %v2529 = vrot.slane %v2392, %v2528
    %v2531 = vunpack.c.l.s4 1983009808
    %v2532 = vunpack.c.0.s8 %v2531
    %v2533 = vlaneseq
    %v2534 = vshrl.u32 %v2533, 7
    %v2535 = vsub.s32 %v2532, %v2534
    %v2536 = vrot.slane %v2522, %v2535
    %v2537 = vcombine.high %v2529, %v2529
    %v2538 = vcombine.high %v2536, %v2536
    %v2539 = vcombine.high %v2397, %v2397
    %v2541 = vunpack.c.l.s4 1983009808
    %v2542 = vunpack.c.0.s8 %v2541
    %v2543 = vlaneseq
    %v2544 = vshrl.u32 %v2543, 7
    %v2545 = vsub.s32 %v2542, %v2544
    %v2546 = vrot.slane %v2397, %v2545
    %v2548 = vunpack.c.l.s4 1983009808
    %v2549 = vunpack.c.0.s8 %v2548
    %v2550 = vlaneseq
    %v2551 = vshrl.u32 %v2550, 7
    %v2552 = vsub.s32 %v2549, %v2551
    %v2553 = vrot.slane %v2539, %v2552
    %v2554 = vcombine.high %v2546, %v2546
    %v2555 = vcombine.high %v2553, %v2553
    %v2556 = vcombine.high %v2402, %v2402
    %v2558 = vunpack.c.l.s4 1983009808
    %v2559 = vunpack.c.0.s8 %v2558
    %v2560 = vlaneseq
    %v2561 = vshrl.u32 %v2560, 7
    %v2562 = vsub.s32 %v2559, %v2561
    %v2563 = vrot.slane %v2402, %v2562
    %v2565 = vunpack.c.l.s4 1983009808
    %v2566 = vunpack.c.0.s8 %v2565
    %v2567 = vlaneseq
    %v2568 = vshrl.u32 %v2567, 7
    %v2569 = vsub.s32 %v2566, %v2568
    %v2570 = vrot.slane %v2556, %v2569
    %v2571 = vcombine.high %v2563, %v2563
    %v2572 = vcombine.high %v2570, %v2570
    %v2573 = vcombine.high %v2407, %v2407
    %v2575 = vunpack.c.l.s4 1983009808
    %v2576 = vunpack.c.0.s8 %v2575
    %v2577 = vlaneseq
    %v2578 = vshrl.u32 %v2577, 7
    %v2579 = vsub.s32 %v2576, %v2578
    %v2580 = vrot.slane %v2407, %v2579
    %v2582 = vunpack.c.l.s4 1983009808
    %v2583 = vunpack.c.0.s8 %v2582
    %v2584 = vlaneseq
    %v2585 = vshrl.u32 %v2584, 7
    %v2586 = vsub.s32 %v2583, %v2585
    %v2587 = vrot.slane %v2573, %v2586
    %v2588 = vcombine.high %v2580, %v2580
    %v2589 = vcombine.high %v2587, %v2587
    %v2590 = vcombine.high %v2412, %v2412
    %v2592 = vunpack.c.l.s4 1983009808
    %v2593 = vunpack.c.0.s8 %v2592
    %v2594 = vlaneseq
    %v2595 = vshrl.u32 %v2594, 7
    %v2596 = vsub.s32 %v2593, %v2595
    %v2597 = vrot.slane %v2412, %v2596
    %v2599 = vunpack.c.l.s4 1983009808
    %v2600 = vunpack.c.0.s8 %v2599
    %v2601 = vlaneseq
    %v2602 = vshrl.u32 %v2601, 7
    %v2603 = vsub.s32 %v2600, %v2602
    %v2604 = vrot.slane %v2590, %v2603
    %v2605 = vcombine.high %v2597, %v2597
    %v2606 = vcombine.high %v2604, %v2604
    %v2607 = vcombine.high %v2417, %v2417
    %v2609 = vunpack.c.l.s4 1983009808
    %v2610 = vunpack.c.0.s8 %v2609
    %v2611 = vlaneseq
    %v2612 = vshrl.u32 %v2611, 7
    %v2613 = vsub.s32 %v2610, %v2612
    %v2614 = vrot.slane %v2417, %v2613
    %v2616 = vunpack.c.l.s4 1983009808
    %v2617 = vunpack.c.0.s8 %v2616
    %v2618 = vlaneseq
    %v2619 = vshrl.u32 %v2618, 7
    %v2620 = vsub.s32 %v2617, %v2619
    %v2621 = vrot.slane %v2607, %v2620
    %v2622 = vcombine.high %v2614, %v2614
    %v2623 = vcombine.high %v2621, %v2621
    %v2624 = vcombine.high %v2422, %v2422
    %v2626 = vunpack.c.l.s4 1983009808
    %v2627 = vunpack.c.0.s8 %v2626
    %v2628 = vlaneseq
    %v2629 = vshrl.u32 %v2628, 7
    %v2630 = vsub.s32 %v2627, %v2629
    %v2631 = vrot.slane %v2422, %v2630
    %v2633 = vunpack.c.l.s4 1983009808
    %v2634 = vunpack.c.0.s8 %v2633
    %v2635 = vlaneseq
    %v2636 = vshrl.u32 %v2635, 7
    %v2637 = vsub.s32 %v2634, %v2636
    %v2638 = vrot.slane %v2624, %v2637
    %v2639 = vcombine.high %v2631, %v2631
    %v2640 = vcombine.high %v2638, %v2638
    %v2641 = vcombine.high %v2427, %v2427
    %v2643 = vunpack.c.l.s4 1983009808
    %v2644 = vunpack.c.0.s8 %v2643
    %v2645 = vlaneseq
    %v2646 = vshrl.u32 %v2645, 7
    %v2647 = vsub.s32 %v2644, %v2646
    %v2648 = vrot.slane %v2427, %v2647
    %v2650 = vunpack.c.l.s4 1983009808
    %v2651 = vunpack.c.0.s8 %v2650
    %v2652 = vlaneseq
    %v2653 = vshrl.u32 %v2652, 7
    %v2654 = vsub.s32 %v2651, %v2653
    %v2655 = vrot.slane %v2641, %v2654
    %v2656 = vcombine.high %v2648, %v2648
    %v2657 = vcombine.high %v2655, %v2655
    %v2658 = vcombine.high %v2432, %v2432
    %v2660 = vunpack.c.l.s4 1983009808
    %v2661 = vunpack.c.0.s8 %v2660
    %v2662 = vlaneseq
    %v2663 = vshrl.u32 %v2662, 7
    %v2664 = vsub.s32 %v2661, %v2663
    %v2665 = vrot.slane %v2432, %v2664
    %v2667 = vunpack.c.l.s4 1983009808
    %v2668 = vunpack.c.0.s8 %v2667
    %v2669 = vlaneseq
    %v2670 = vshrl.u32 %v2669, 7
    %v2671 = vsub.s32 %v2668, %v2670
    %v2672 = vrot.slane %v2658, %v2671
    %v2673 = vcombine.high %v2665, %v2665
    %v2674 = vcombine.high %v2672, %v2672
    %v2675 = vcombine.high %v2437, %v2437
    %v2677 = vunpack.c.l.s4 1983009808
    %v2678 = vunpack.c.0.s8 %v2677
    %v2679 = vlaneseq
    %v2680 = vshrl.u32 %v2679, 7
    %v2681 = vsub.s32 %v2678, %v2680
    %v2682 = vrot.slane %v2437, %v2681
    %v2684 = vunpack.c.l.s4 1983009808
    %v2685 = vunpack.c.0.s8 %v2684
    %v2686 = vlaneseq
    %v2687 = vshrl.u32 %v2686, 7
    %v2688 = vsub.s32 %v2685, %v2687
    %v2689 = vrot.slane %v2675, %v2688
    %v2690 = vcombine.high %v2682, %v2682
    %v2691 = vcombine.high %v2689, %v2689
    %v2692 = vcombine.high %v2442, %v2442
    %v2694 = vunpack.c.l.s4 1983009808
    %v2695 = vunpack.c.0.s8 %v2694
    %v2696 = vlaneseq
    %v2697 = vshrl.u32 %v2696, 7
    %v2698 = vsub.s32 %v2695, %v2697
    %v2699 = vrot.slane %v2442, %v2698
    %v2701 = vunpack.c.l.s4 1983009808
    %v2702 = vunpack.c.0.s8 %v2701
    %v2703 = vlaneseq
    %v2704 = vshrl.u32 %v2703, 7
    %v2705 = vsub.s32 %v2702, %v2704
    %v2706 = vrot.slane %v2692, %v2705
    %v2707 = vcombine.high %v2699, %v2699
    %v2708 = vcombine.high %v2706, %v2706
    %v2709 = vcombine.high %v2447, %v2447
    %v2711 = vunpack.c.l.s4 1983009808
    %v2712 = vunpack.c.0.s8 %v2711
    %v2713 = vlaneseq
    %v2714 = vshrl.u32 %v2713, 7
    %v2715 = vsub.s32 %v2712, %v2714
    %v2716 = vrot.slane %v2447, %v2715
    %v2718 = vunpack.c.l.s4 1983009808
    %v2719 = vunpack.c.0.s8 %v2718
    %v2720 = vlaneseq
    %v2721 = vshrl.u32 %v2720, 7
    %v2722 = vsub.s32 %v2719, %v2721
    %v2723 = vrot.slane %v2709, %v2722
    %v2724 = vcombine.high %v2716, %v2716
    %v2725 = vcombine.high %v2723, %v2723
    %v2726 = vcombine.high %v2452, %v2452
    %v2728 = vunpack.c.l.s4 1983009808
    %v2729 = vunpack.c.0.s8 %v2728
    %v2730 = vlaneseq
    %v2731 = vshrl.u32 %v2730, 7
    %v2732 = vsub.s32 %v2729, %v2731
    %v2733 = vrot.slane %v2452, %v2732
    %v2735 = vunpack.c.l.s4 1983009808
    %v2736 = vunpack.c.0.s8 %v2735
    %v2737 = vlaneseq
    %v2738 = vshrl.u32 %v2737, 7
    %v2739 = vsub.s32 %v2736, %v2738
    %v2740 = vrot.slane %v2726, %v2739
    %v2741 = vcombine.high %v2733, %v2733
    %v2742 = vcombine.high %v2740, %v2740
    %v2743 = vcombine.high %v2457, %v2457
    %v2745 = vunpack.c.l.s4 1983009808
    %v2746 = vunpack.c.0.s8 %v2745
    %v2747 = vlaneseq
    %v2748 = vshrl.u32 %v2747, 7
    %v2749 = vsub.s32 %v2746, %v2748
    %v2750 = vrot.slane %v2457, %v2749
    %v2752 = vunpack.c.l.s4 1983009808
    %v2753 = vunpack.c.0.s8 %v2752
    %v2754 = vlaneseq
    %v2755 = vshrl.u32 %v2754, 7
    %v2756 = vsub.s32 %v2753, %v2755
    %v2757 = vrot.slane %v2743, %v2756
    %v2758 = vcombine.high %v2750, %v2750
    %v2759 = vcombine.high %v2757, %v2757
    %v2760 = vcombine.high %v2462, %v2462
    %v2762 = vunpack.c.l.s4 1983009808
    %v2763 = vunpack.c.0.s8 %v2762
    %v2764 = vlaneseq
    %v2765 = vshrl.u32 %v2764, 7
    %v2766 = vsub.s32 %v2763, %v2765
    %v2767 = vrot.slane %v2462, %v2766
    %v2769 = vunpack.c.l.s4 1983009808
    %v2770 = vunpack.c.0.s8 %v2769
    %v2771 = vlaneseq
    %v2772 = vshrl.u32 %v2771, 7
    %v2773 = vsub.s32 %v2770, %v2772
    %v2774 = vrot.slane %v2760, %v2773
    %v2775 = vcombine.high %v2767, %v2767
    %v2776 = vcombine.high %v2774, %v2774
    %v2777 = vcombine.high %v2467, %v2467
    %v2779 = vunpack.c.l.s4 1983009808
    %v2780 = vunpack.c.0.s8 %v2779
    %v2781 = vlaneseq
    %v2782 = vshrl.u32 %v2781, 7
    %v2783 = vsub.s32 %v2780, %v2782
    %v2784 = vrot.slane %v2467, %v2783
    %v2786 = vunpack.c.l.s4 1983009808
    %v2787 = vunpack.c.0.s8 %v2786
    %v2788 = vlaneseq
    %v2789 = vshrl.u32 %v2788, 7
    %v2790 = vsub.s32 %v2787, %v2789
    %v2791 = vrot.slane %v2777, %v2790
    %v2792 = vcombine.high %v2784, %v2784
    %v2793 = vcombine.high %v2791, %v2791
    %v2794 = vcombine.high %v2472, %v2472
    %v2796 = vunpack.c.l.s4 1983009808
    %v2797 = vunpack.c.0.s8 %v2796
    %v2798 = vlaneseq
    %v2799 = vshrl.u32 %v2798, 7
    %v2800 = vsub.s32 %v2797, %v2799
    %v2801 = vrot.slane %v2472, %v2800
    %v2803 = vunpack.c.l.s4 1983009808
    %v2804 = vunpack.c.0.s8 %v2803
    %v2805 = vlaneseq
    %v2806 = vshrl.u32 %v2805, 7
    %v2807 = vsub.s32 %v2804, %v2806
    %v2808 = vrot.slane %v2794, %v2807
    %v2809 = vcombine.high %v2801, %v2801
    %v2810 = vcombine.high %v2808, %v2808
    %v2811 = vcombine.high %v2477, %v2477
    %v2813 = vunpack.c.l.s4 1983009808
    %v2814 = vunpack.c.0.s8 %v2813
    %v2815 = vlaneseq
    %v2816 = vshrl.u32 %v2815, 7
    %v2817 = vsub.s32 %v2814, %v2816
    %v2818 = vrot.slane %v2477, %v2817
    %v2820 = vunpack.c.l.s4 1983009808
    %v2821 = vunpack.c.0.s8 %v2820
    %v2822 = vlaneseq
    %v2823 = vshrl.u32 %v2822, 7
    %v2824 = vsub.s32 %v2821, %v2823
    %v2825 = vrot.slane %v2811, %v2824
    %v2826 = vcombine.high %v2818, %v2818
    %v2827 = vcombine.high %v2825, %v2825
    %v2828 = vcombine.high %v2482, %v2482
    %v2830 = vunpack.c.l.s4 1983009808
    %v2831 = vunpack.c.0.s8 %v2830
    %v2832 = vlaneseq
    %v2833 = vshrl.u32 %v2832, 7
    %v2834 = vsub.s32 %v2831, %v2833
    %v2835 = vrot.slane %v2482, %v2834
    %v2837 = vunpack.c.l.s4 1983009808
    %v2838 = vunpack.c.0.s8 %v2837
    %v2839 = vlaneseq
    %v2840 = vshrl.u32 %v2839, 7
    %v2841 = vsub.s32 %v2838, %v2840
    %v2842 = vrot.slane %v2828, %v2841
    %v2843 = vcombine.high %v2835, %v2835
    %v2844 = vcombine.high %v2842, %v2842
    %s2925 = scalar_lea.vmem %s5, 32
    %v2926 = vld [vmem:[%s2925] sm:$0xff]
    %v2927 = vld [vmem:[%s2925 + $0x8] sm:$0xff]
    %v2928 = vcombine.low %v754, %v761
    %v2929 = vcombine.low %v762, %v769
    %v2931 = vunpack.c.l.s4 1983009808
    %v2932 = vunpack.c.0.s8 %v2931
    %v2933 = vlaneseq
    %v2934 = vshrl.u32 %v2933, 7
    %v2935 = vsub.s32 %v2932, %v2934
    %v2936 = vrot.slane %v2928, %v2935
    %v2938 = vunpack.c.l.s4 1983009808
    %v2939 = vunpack.c.0.s8 %v2938
    %v2940 = vlaneseq
    %v2941 = vshrl.u32 %v2940, 7
    %v2942 = vsub.s32 %v2939, %v2941
    %v2943 = vrot.slane %v2929, %v2942
    %v2944 = vcombine.low %v2936, %v2943
    %v2945 = vcombine.low %v770, %v778
    %v2946 = vcombine.low %v785, %v786
    %v2948 = vunpack.c.l.s4 1983009808
    %v2949 = vunpack.c.0.s8 %v2948
    %v2950 = vlaneseq
    %v2951 = vshrl.u32 %v2950, 7
    %v2952 = vsub.s32 %v2949, %v2951
    %v2953 = vrot.slane %v2945, %v2952
    %v2955 = vunpack.c.l.s4 1983009808
    %v2956 = vunpack.c.0.s8 %v2955
    %v2957 = vlaneseq
    %v2958 = vshrl.u32 %v2957, 7
    %v2959 = vsub.s32 %v2956, %v2958
    %v2960 = vrot.slane %v2946, %v2959
    %v2961 = vcombine.low %v2953, %v2960
    %v2962 = vcombine.low %v793, %v794
    %v2963 = vcombine.low %v802, %v809
    %v2965 = vunpack.c.l.s4 1983009808
    %v2966 = vunpack.c.0.s8 %v2965
    %v2967 = vlaneseq
    %v2968 = vshrl.u32 %v2967, 7
    %v2969 = vsub.s32 %v2966, %v2968
    %v2970 = vrot.slane %v2962, %v2969
    %v2972 = vunpack.c.l.s4 1983009808
    %v2973 = vunpack.c.0.s8 %v2972
    %v2974 = vlaneseq
    %v2975 = vshrl.u32 %v2974, 7
    %v2976 = vsub.s32 %v2973, %v2975
    %v2977 = vrot.slane %v2963, %v2976
    %v2978 = vcombine.low %v2970, %v2977
    %v2979 = vcombine.low %v810, %v817
    %v2980 = vcombine.low %v818, %v826
    %v2982 = vunpack.c.l.s4 1983009808
    %v2983 = vunpack.c.0.s8 %v2982
    %v2984 = vlaneseq
    %v2985 = vshrl.u32 %v2984, 7
    %v2986 = vsub.s32 %v2983, %v2985
    %v2987 = vrot.slane %v2979, %v2986
    %v2989 = vunpack.c.l.s4 1983009808
    %v2990 = vunpack.c.0.s8 %v2989
    %v2991 = vlaneseq
    %v2992 = vshrl.u32 %v2991, 7
    %v2993 = vsub.s32 %v2990, %v2992
    %v2994 = vrot.slane %v2980, %v2993
    %v2995 = vcombine.low %v2987, %v2994
    %v2996 = vcombine.low %v833, %v834
    %v2997 = vcombine.low %v841, %v842
    %v2999 = vunpack.c.l.s4 1983009808
    %v3000 = vunpack.c.0.s8 %v2999
    %v3001 = vlaneseq
    %v3002 = vshrl.u32 %v3001, 7
    %v3003 = vsub.s32 %v3000, %v3002
    %v3004 = vrot.slane %v2996, %v3003
    %v3006 = vunpack.c.l.s4 1983009808
    %v3007 = vunpack.c.0.s8 %v3006
    %v3008 = vlaneseq
    %v3009 = vshrl.u32 %v3008, 7
    %v3010 = vsub.s32 %v3007, %v3009
    %v3011 = vrot.slane %v2997, %v3010
    %v3012 = vcombine.low %v3004, %v3011
    %v3013 = vcombine.low %v850, %v857
    %v3014 = vcombine.low %v858, %v865
    %v3016 = vunpack.c.l.s4 1983009808
    %v3017 = vunpack.c.0.s8 %v3016
    %v3018 = vlaneseq
    %v3019 = vshrl.u32 %v3018, 7
    %v3020 = vsub.s32 %v3017, %v3019
    %v3021 = vrot.slane %v3013, %v3020
    %v3023 = vunpack.c.l.s4 1983009808
    %v3024 = vunpack.c.0.s8 %v3023
    %v3025 = vlaneseq
    %v3026 = vshrl.u32 %v3025, 7
    %v3027 = vsub.s32 %v3024, %v3026
    %v3028 = vrot.slane %v3014, %v3027
    %v3029 = vcombine.low %v3021, %v3028
    %v3030 = vcombine.low %v866, %v874
    %v3031 = vcombine.low %v881, %v882
    %v3033 = vunpack.c.l.s4 1983009808
    %v3034 = vunpack.c.0.s8 %v3033
    %v3035 = vlaneseq
    %v3036 = vshrl.u32 %v3035, 7
    %v3037 = vsub.s32 %v3034, %v3036
    %v3038 = vrot.slane %v3030, %v3037
    %v3040 = vunpack.c.l.s4 1983009808
    %v3041 = vunpack.c.0.s8 %v3040
    %v3042 = vlaneseq
    %v3043 = vshrl.u32 %v3042, 7
    %v3044 = vsub.s32 %v3041, %v3043
    %v3045 = vrot.slane %v3031, %v3044
    %v3046 = vcombine.low %v3038, %v3045
    %v3047 = vcombine.low %v889, %v890
    %v3048 = vcombine.low %v898, %v905
    %v3050 = vunpack.c.l.s4 1983009808
    %v3051 = vunpack.c.0.s8 %v3050
    %v3052 = vlaneseq
    %v3053 = vshrl.u32 %v3052, 7
    %v3054 = vsub.s32 %v3051, %v3053
    %v3055 = vrot.slane %v3047, %v3054
    %v3057 = vunpack.c.l.s4 1983009808
    %v3058 = vunpack.c.0.s8 %v3057
    %v3059 = vlaneseq
    %v3060 = vshrl.u32 %v3059, 7
    %v3061 = vsub.s32 %v3058, %v3060
    %v3062 = vrot.slane %v3048, %v3061
    %v3063 = vcombine.low %v3055, %v3062
    %v3064 = vcombine.low %v906, %v913
    %v3065 = vcombine.low %v914, %v922
    %v3067 = vunpack.c.l.s4 1983009808
    %v3068 = vunpack.c.0.s8 %v3067
    %v3069 = vlaneseq
    %v3070 = vshrl.u32 %v3069, 7
    %v3071 = vsub.s32 %v3068, %v3070
    %v3072 = vrot.slane %v3064, %v3071
    %v3074 = vunpack.c.l.s4 1983009808
    %v3075 = vunpack.c.0.s8 %v3074
    %v3076 = vlaneseq
    %v3077 = vshrl.u32 %v3076, 7
    %v3078 = vsub.s32 %v3075, %v3077
    %v3079 = vrot.slane %v3065, %v3078
    %v3080 = vcombine.low %v3072, %v3079
    %v3081 = vcombine.low %v929, %v930
    %v3082 = vcombine.low %v937, %v938
    %v3084 = vunpack.c.l.s4 1983009808
    %v3085 = vunpack.c.0.s8 %v3084
    %v3086 = vlaneseq
    %v3087 = vshrl.u32 %v3086, 7
    %v3088 = vsub.s32 %v3085, %v3087
    %v3089 = vrot.slane %v3081, %v3088
    %v3091 = vunpack.c.l.s4 1983009808
    %v3092 = vunpack.c.0.s8 %v3091
    %v3093 = vlaneseq
    %v3094 = vshrl.u32 %v3093, 7
    %v3095 = vsub.s32 %v3092, %v3094
    %v3096 = vrot.slane %v3082, %v3095
    %v3097 = vcombine.low %v3089, %v3096
    %v3098 = vcombine.low %v946, %v953
    %v3099 = vcombine.low %v954, %v961
    %v3101 = vunpack.c.l.s4 1983009808
    %v3102 = vunpack.c.0.s8 %v3101
    %v3103 = vlaneseq
    %v3104 = vshrl.u32 %v3103, 7
    %v3105 = vsub.s32 %v3102, %v3104
    %v3106 = vrot.slane %v3098, %v3105
    %v3108 = vunpack.c.l.s4 1983009808
    %v3109 = vunpack.c.0.s8 %v3108
    %v3110 = vlaneseq
    %v3111 = vshrl.u32 %v3110, 7
    %v3112 = vsub.s32 %v3109, %v3111
    %v3113 = vrot.slane %v3099, %v3112
    %v3114 = vcombine.low %v3106, %v3113
    %v3115 = vcombine.low %v962, %v970
    %v3116 = vcombine.low %v977, %v978
    %v3118 = vunpack.c.l.s4 1983009808
    %v3119 = vunpack.c.0.s8 %v3118
    %v3120 = vlaneseq
    %v3121 = vshrl.u32 %v3120, 7
    %v3122 = vsub.s32 %v3119, %v3121
    %v3123 = vrot.slane %v3115, %v3122
    %v3125 = vunpack.c.l.s4 1983009808
    %v3126 = vunpack.c.0.s8 %v3125
    %v3127 = vlaneseq
    %v3128 = vshrl.u32 %v3127, 7
    %v3129 = vsub.s32 %v3126, %v3128
    %v3130 = vrot.slane %v3116, %v3129
    %v3131 = vcombine.low %v3123, %v3130
    %v3132 = vcombine.low %v985, %v986
    %v3133 = vcombine.low %v994, %v1001
    %v3135 = vunpack.c.l.s4 1983009808
    %v3136 = vunpack.c.0.s8 %v3135
    %v3137 = vlaneseq
    %v3138 = vshrl.u32 %v3137, 7
    %v3139 = vsub.s32 %v3136, %v3138
    %v3140 = vrot.slane %v3132, %v3139
    %v3142 = vunpack.c.l.s4 1983009808
    %v3143 = vunpack.c.0.s8 %v3142
    %v3144 = vlaneseq
    %v3145 = vshrl.u32 %v3144, 7
    %v3146 = vsub.s32 %v3143, %v3145
    %v3147 = vrot.slane %v3133, %v3146
    %v3148 = vcombine.low %v3140, %v3147
    %v3149 = vcombine.low %v1002, %v1009
    %v3150 = vcombine.low %v1010, %v1018
    %v3152 = vunpack.c.l.s4 1983009808
    %v3153 = vunpack.c.0.s8 %v3152
    %v3154 = vlaneseq
    %v3155 = vshrl.u32 %v3154, 7
    %v3156 = vsub.s32 %v3153, %v3155
    %v3157 = vrot.slane %v3149, %v3156
    %v3159 = vunpack.c.l.s4 1983009808
    %v3160 = vunpack.c.0.s8 %v3159
    %v3161 = vlaneseq
    %v3162 = vshrl.u32 %v3161, 7
    %v3163 = vsub.s32 %v3160, %v3162
    %v3164 = vrot.slane %v3150, %v3163
    %v3165 = vcombine.low %v3157, %v3164
    %v3166 = vcombine.low %v1025, %v1026
    %v3167 = vcombine.low %v1033, %v1034
    %v3169 = vunpack.c.l.s4 1983009808
    %v3170 = vunpack.c.0.s8 %v3169
    %v3171 = vlaneseq
    %v3172 = vshrl.u32 %v3171, 7
    %v3173 = vsub.s32 %v3170, %v3172
    %v3174 = vrot.slane %v3166, %v3173
    %v3176 = vunpack.c.l.s4 1983009808
    %v3177 = vunpack.c.0.s8 %v3176
    %v3178 = vlaneseq
    %v3179 = vshrl.u32 %v3178, 7
    %v3180 = vsub.s32 %v3177, %v3179
    %v3181 = vrot.slane %v3167, %v3180
    %v3182 = vcombine.low %v3174, %v3181
    %v3183 = vcombine.low %v1042, %v1049
    %v3184 = vcombine.low %v1050, %v1057
    %v3186 = vunpack.c.l.s4 1983009808
    %v3187 = vunpack.c.0.s8 %v3186
    %v3188 = vlaneseq
    %v3189 = vshrl.u32 %v3188, 7
    %v3190 = vsub.s32 %v3187, %v3189
    %v3191 = vrot.slane %v3183, %v3190
    %v3193 = vunpack.c.l.s4 1983009808
    %v3194 = vunpack.c.0.s8 %v3193
    %v3195 = vlaneseq
    %v3196 = vshrl.u32 %v3195, 7
    %v3197 = vsub.s32 %v3194, %v3196
    %v3198 = vrot.slane %v3184, %v3197
    %v3199 = vcombine.low %v3191, %v3198
    %v3200 = vcombine.low %v1058, %v1066
    %v3201 = vcombine.low %v1073, %v1074
    %v3203 = vunpack.c.l.s4 1983009808
    %v3204 = vunpack.c.0.s8 %v3203
    %v3205 = vlaneseq
    %v3206 = vshrl.u32 %v3205, 7
    %v3207 = vsub.s32 %v3204, %v3206
    %v3208 = vrot.slane %v3200, %v3207
    %v3210 = vunpack.c.l.s4 1983009808
    %v3211 = vunpack.c.0.s8 %v3210
    %v3212 = vlaneseq
    %v3213 = vshrl.u32 %v3212, 7
    %v3214 = vsub.s32 %v3211, %v3213
    %v3215 = vrot.slane %v3201, %v3214
    %v3216 = vcombine.low %v3208, %v3215
    %v3217 = vcombine.low %v1081, %v1082
    %v3218 = vcombine.low %v1090, %v1097
    %v3220 = vunpack.c.l.s4 1983009808
    %v3221 = vunpack.c.0.s8 %v3220
    %v3222 = vlaneseq
    %v3223 = vshrl.u32 %v3222, 7
    %v3224 = vsub.s32 %v3221, %v3223
    %v3225 = vrot.slane %v3217, %v3224
    %v3227 = vunpack.c.l.s4 1983009808
    %v3228 = vunpack.c.0.s8 %v3227
    %v3229 = vlaneseq
    %v3230 = vshrl.u32 %v3229, 7
    %v3231 = vsub.s32 %v3228, %v3230
    %v3232 = vrot.slane %v3218, %v3231
    %v3233 = vcombine.low %v3225, %v3232
    %v3234 = vcombine.low %v1098, %v1105
    %v3235 = vcombine.low %v1106, %v1114
    %v3237 = vunpack.c.l.s4 1983009808
    %v3238 = vunpack.c.0.s8 %v3237
    %v3239 = vlaneseq
    %v3240 = vshrl.u32 %v3239, 7
    %v3241 = vsub.s32 %v3238, %v3240
    %v3242 = vrot.slane %v3234, %v3241
    %v3244 = vunpack.c.l.s4 1983009808
    %v3245 = vunpack.c.0.s8 %v3244
    %v3246 = vlaneseq
    %v3247 = vshrl.u32 %v3246, 7
    %v3248 = vsub.s32 %v3245, %v3247
    %v3249 = vrot.slane %v3235, %v3248
    %v3250 = vcombine.low %v3242, %v3249
    %v3251 = vcombine.low %v1121, %v1122
    %v3252 = vcombine.low %v1129, %v1130
    %v3254 = vunpack.c.l.s4 1983009808
    %v3255 = vunpack.c.0.s8 %v3254
    %v3256 = vlaneseq
    %v3257 = vshrl.u32 %v3256, 7
    %v3258 = vsub.s32 %v3255, %v3257
    %v3259 = vrot.slane %v3251, %v3258
    %v3261 = vunpack.c.l.s4 1983009808
    %v3262 = vunpack.c.0.s8 %v3261
    %v3263 = vlaneseq
    %v3264 = vshrl.u32 %v3263, 7
    %v3265 = vsub.s32 %v3262, %v3264
    %v3266 = vrot.slane %v3252, %v3265
    %v3267 = vcombine.low %v3259, %v3266
    %v3268 = vsel %vm1734, %v2944, 0
    %v3270 = vsel %vm1734, %v2961, 0
    %v3272 = vsel %vm1734, %v2978, 0
    %v3274 = vsel %vm1734, %v2995, 0
    %v3276 = vsel %vm1734, %v3012, 0
    %v3278 = vsel %vm1734, %v3029, 0
    %v3280 = vsel %vm1734, %v3046, 0
    %v3282 = vsel %vm1734, %v3063, 0
    %v3284 = vsel %vm1734, %v3080, 0
    %v3286 = vsel %vm1734, %v3097, 0
    %v3288 = vsel %vm1734, %v3114, 0
    %v3290 = vsel %vm1734, %v3131, 0
    %v3292 = vsel %vm1734, %v3148, 0
    %v3294 = vsel %vm1734, %v3165, 0
    %v3296 = vsel %vm1734, %v3182, 0
    %v3298 = vsel %vm1734, %v3199, 0
    %v3300 = vsel %vm1734, %v3216, 0
    %v3302 = vsel %vm1734, %v3233, 0
    %v3304 = vsel %vm1734, %v3250, 0
    %v3306 = vsel %vm1734, %v3267, 0
    %3308 = vmatprep.subr.mxu0 0.0
    %3309 = vmatpush1.msra.mxu0 %v2926
    %3310 = vmatprep.subr.mxu0 0.0
    %3311 = vmatpush1.msra.mxu0 %v2927
    %3312 = vmatprep.subr.mxu0 0.0
    %3313 = vmatpush1.msra.mxu0 0.0
    %3314 = vmatprep.subr.mxu0 0.0
    %3315 = vmatpush1.msra.mxu0 0.0
    %3316 = vmatprep.subr.mxu0 0.0
    %3317 = vmatpush1.msra.mxu0 0.0
    %3318 = vmatprep.subr.mxu0 0.0
    %3319 = vmatpush1.msra.mxu0 0.0
    %3320 = vmatprep.subr.mxu0 0.0
    %3321 = vmatpush1.msra.mxu0 0.0
    %3322 = vmatprep.subr.mxu0 0.0
    %3323 = vmatpush1.msra.mxu0 0.0
    %3324 = vmatprep.subr.mxu0 0.0
    %3325 = vmatpush1.msra.mxu0 0.0
    %3326 = vmatprep.subr.mxu0 0.0
    %3327 = vmatpush1.msra.mxu0 0.0
    %3328 = vmatprep.subr.mxu0 0.0
    %3329 = vmatpush1.msra.mxu0 0.0
    %3330 = vmatprep.subr.mxu0 0.0
    %3331 = vmatpush1.msra.mxu0 0.0
    %3332 = vmatprep.subr.mxu0 0.0
    %3333 = vmatpush1.msra.mxu0 0.0
    %3334 = vmatprep.subr.mxu0 0.0
    %3335 = vmatpush1.msra.mxu0 0.0
    %3336 = vmatprep.subr.mxu0 0.0
    %3337 = vmatpush1.msra.mxu0 0.0
    %3338 = vmatprep.subr.mxu0 0.0
    %3339 = vmatpush1.msra.mxu0 0.0
    %3340 = vmatprep.subr.mxu0 0.0
    %3341 = vmatpush1.msra.mxu0 0.0
    %3342 = vmatprep.subr.mxu0 0.0
    %3343 = vmatpush1.msra.mxu0 0.0
    %3344 = vmatprep.subr.mxu0 0.0
    %3345 = vmatpush1.msra.mxu0 0.0
    %3346 = vmatprep.subr.mxu0 0.0
    %3347 = vmatpush1.msra.mxu0 0.0
    %3348 = vmatprep.subr.mxu0 0.0
    %3349 = vmatpush1.msra.mxu0 0.0
    %3350 = vmatprep.subr.mxu0 0.0
    %3351 = vmatpush1.msra.mxu0 0.0
    %3352 = vmatprep.subr.mxu0 0.0
    %3353 = vmatpush1.msra.mxu0 0.0
    %3354 = vmatprep.subr.mxu0 0.0
    %3355 = vmatpush1.msra.mxu0 0.0
    %3356 = vmatprep.subr.mxu0 0.0
    %3357 = vmatpush1.msra.mxu0 0.0
    %3358 = vmatprep.subr.mxu0 0.0
    %3359 = vmatpush1.msra.mxu0 0.0
    %3360 = vmatprep.subr.mxu0 0.0
    %3361 = vmatpush1.msra.mxu0 0.0
    %3362 = vmatprep.subr.mxu0 0.0
    %3363 = vmatpush1.msra.mxu0 0.0
    %3364 = vmatprep.subr.mxu0 0.0
    %3365 = vmatpush1.msra.mxu0 0.0
    %3366 = vmatprep.subr.mxu0 0.0
    %3367 = vmatpush1.msra.mxu0 0.0
    %3368 = vmatprep.subr.mxu0 0.0
    %3369 = vmatpush1.msra.mxu0 0.0
    %3370 = vmatprep.subr.mxu0 0.0
    %3371 = vmatpush1.msra.mxu0 0.0
    %3372 = vmatprep.mubr.f32.mxu0 0.0
    %3373 = vmatmul.mubr.f32.gmra.mrb[0].mxu0 %v3268
    %v3374 = vpop.f32.mrb[0].mxu0
    %v3375 = vadd.f32 0.0, %v3374
    %v3376 = vpop.f32.mrb[0].mxu0
    %3377 = vmatprep.mubr.f32.mxu0 0.0
    %3378 = vmatmul.mubr.f32.gmra.mrb[0].mxu0 %v3270
    %v3379 = vpop.f32.mrb[0].mxu0
    %v3380 = vadd.f32 0.0, %v3379
    %v3381 = vpop.f32.mrb[0].mxu0
    %3382 = vmatprep.mubr.f32.mxu0 0.0
    %3383 = vmatmul.mubr.f32.gmra.mrb[0].mxu0 %v3272
    %v3384 = vpop.f32.mrb[0].mxu0
    %v3385 = vadd.f32 0.0, %v3384
    %v3386 = vpop.f32.mrb[0].mxu0
    %3387 = vmatprep.mubr.f32.mxu0 0.0
    %3388 = vmatmul.mubr.f32.gmra.mrb[0].mxu0 %v3274
    %v3389 = vpop.f32.mrb[0].mxu0
    %v3390 = vadd.f32 0.0, %v3389
    %v3391 = vpop.f32.mrb[0].mxu0
    %3392 = vmatprep.mubr.f32.mxu0 0.0
    %3393 = vmatmul.mubr.f32.gmra.mrb[0].mxu0 %v3276
    %v3394 = vpop.f32.mrb[0].mxu0
    %v3395 = vadd.f32 0.0, %v3394
    %v3396 = vpop.f32.mrb[0].mxu0
    %3397 = vmatprep.mubr.f32.mxu0 0.0
    %3398 = vmatmul.mubr.f32.gmra.mrb[0].mxu0 %v3278
    %v3399 = vpop.f32.mrb[0].mxu0
    %v3400 = vadd.f32 0.0, %v3399
    %v3401 = vpop.f32.mrb[0].mxu0
    %3402 = vmatprep.mubr.f32.mxu0 0.0
    %3403 = vmatmul.mubr.f32.gmra.mrb[0].mxu0 %v3280
    %v3404 = vpop.f32.mrb[0].mxu0
    %v3405 = vadd.f32 0.0, %v3404
    %v3406 = vpop.f32.mrb[0].mxu0
    %3407 = vmatprep.mubr.f32.mxu0 0.0
    %3408 = vmatmul.mubr.f32.gmra.mrb[0].mxu0 %v3282
    %v3409 = vpop.f32.mrb[0].mxu0
    %v3410 = vadd.f32 0.0, %v3409
    %v3411 = vpop.f32.mrb[0].mxu0
    %3412 = vmatprep.mubr.f32.mxu0 0.0
    %3413 = vmatmul.mubr.f32.gmra.mrb[0].mxu0 %v3284
    %v3414 = vpop.f32.mrb[0].mxu0
    %v3415 = vadd.f32 0.0, %v3414
    %v3416 = vpop.f32.mrb[0].mxu0
    %3417 = vmatprep.mubr.f32.mxu0 0.0
    %3418 = vmatmul.mubr.f32.gmra.mrb[0].mxu0 %v3286
    %v3419 = vpop.f32.mrb[0].mxu0
    %v3420 = vadd.f32 0.0, %v3419
    %v3421 = vpop.f32.mrb[0].mxu0
    %3422 = vmatprep.mubr.f32.mxu0 0.0
    %3423 = vmatmul.mubr.f32.gmra.mrb[0].mxu0 %v3288
    %v3424 = vpop.f32.mrb[0].mxu0
    %v3425 = vadd.f32 0.0, %v3424
    %v3426 = vpop.f32.mrb[0].mxu0
    %3427 = vmatprep.mubr.f32.mxu0 0.0
    %3428 = vmatmul.mubr.f32.gmra.mrb[0].mxu0 %v3290
    %v3429 = vpop.f32.mrb[0].mxu0
    %v3430 = vadd.f32 0.0, %v3429
    %v3431 = vpop.f32.mrb[0].mxu0
    %3432 = vmatprep.mubr.f32.mxu0 0.0
    %3433 = vmatmul.mubr.f32.gmra.mrb[0].mxu0 %v3292
    %v3434 = vpop.f32.mrb[0].mxu0
    %v3435 = vadd.f32 0.0, %v3434
    %v3436 = vpop.f32.mrb[0].mxu0
    %3437 = vmatprep.mubr.f32.mxu0 0.0
    %3438 = vmatmul.mubr.f32.gmra.mrb[0].mxu0 %v3294
    %v3439 = vpop.f32.mrb[0].mxu0
    %v3440 = vadd.f32 0.0, %v3439
    %v3441 = vpop.f32.mrb[0].mxu0
    %3442 = vmatprep.mubr.f32.mxu0 0.0
    %3443 = vmatmul.mubr.f32.gmra.mrb[0].mxu0 %v3296
    %v3444 = vpop.f32.mrb[0].mxu0
    %v3445 = vadd.f32 0.0, %v3444
    %v3446 = vpop.f32.mrb[0].mxu0
    %3447 = vmatprep.mubr.f32.mxu0 0.0
    %3448 = vmatmul.mubr.f32.gmra.mrb[0].mxu0 %v3298
    %v3449 = vpop.f32.mrb[0].mxu0
    %v3450 = vadd.f32 0.0, %v3449
    %v3451 = vpop.f32.mrb[0].mxu0
    %3452 = vmatprep.mubr.f32.mxu0 0.0
    %3453 = vmatmul.mubr.f32.gmra.mrb[0].mxu0 %v3300
    %v3454 = vpop.f32.mrb[0].mxu0
    %v3455 = vadd.f32 0.0, %v3454
    %v3456 = vpop.f32.mrb[0].mxu0
    %3457 = vmatprep.mubr.f32.mxu0 0.0
    %3458 = vmatmul.mubr.f32.gmra.mrb[0].mxu0 %v3302
    %v3459 = vpop.f32.mrb[0].mxu0
    %v3460 = vadd.f32 0.0, %v3459
    %v3461 = vpop.f32.mrb[0].mxu0
    %3462 = vmatprep.mubr.f32.mxu0 0.0
    %3463 = vmatmul.mubr.f32.gmra.mrb[0].mxu0 %v3304
    %v3464 = vpop.f32.mrb[0].mxu0
    %v3465 = vadd.f32 0.0, %v3464
    %v3466 = vpop.f32.mrb[0].mxu0
    %3467 = vmatprep.mubr.f32.mxu0 0.0
    %3468 = vmatmul.mubr.f32.gmra.mrb[0].mxu0 %v3306
    %v3469 = vpop.f32.mrb[0].mxu0
    %v3470 = vadd.f32 0.0, %v3469
    %v3471 = vpop.f32.mrb[0].mxu0
    %3472 = vdwg.mxu0
    %v3493 = vcombine.high %v3375, %v3375
    %v3495 = vunpack.c.l.s4 1983009808
    %v3496 = vunpack.c.0.s8 %v3495
    %v3497 = vlaneseq
    %v3498 = vshrl.u32 %v3497, 7
    %v3499 = vsub.s32 %v3496, %v3498
    %v3500 = vrot.slane %v3375, %v3499
    %v3502 = vunpack.c.l.s4 1983009808
    %v3503 = vunpack.c.0.s8 %v3502
    %v3504 = vlaneseq
    %v3505 = vshrl.u32 %v3504, 7
    %v3506 = vsub.s32 %v3503, %v3505
    %v3507 = vrot.slane %v3493, %v3506
    %v3508 = vcombine.high %v3500, %v3500
    %v3509 = vcombine.high %v3507, %v3507
    %v3510 = vcombine.high %v3380, %v3380
    %v3512 = vunpack.c.l.s4 1983009808
    %v3513 = vunpack.c.0.s8 %v3512
    %v3514 = vlaneseq
    %v3515 = vshrl.u32 %v3514, 7
    %v3516 = vsub.s32 %v3513, %v3515
    %v3517 = vrot.slane %v3380, %v3516
    %v3519 = vunpack.c.l.s4 1983009808
    %v3520 = vunpack.c.0.s8 %v3519
    %v3521 = vlaneseq
    %v3522 = vshrl.u32 %v3521, 7
    %v3523 = vsub.s32 %v3520, %v3522
    %v3524 = vrot.slane %v3510, %v3523
    %v3525 = vcombine.high %v3517, %v3517
    %v3526 = vcombine.high %v3524, %v3524
    %v3527 = vcombine.high %v3385, %v3385
    %v3529 = vunpack.c.l.s4 1983009808
    %v3530 = vunpack.c.0.s8 %v3529
    %v3531 = vlaneseq
    %v3532 = vshrl.u32 %v3531, 7
    %v3533 = vsub.s32 %v3530, %v3532
    %v3534 = vrot.slane %v3385, %v3533
    %v3536 = vunpack.c.l.s4 1983009808
    %v3537 = vunpack.c.0.s8 %v3536
    %v3538 = vlaneseq
    %v3539 = vshrl.u32 %v3538, 7
    %v3540 = vsub.s32 %v3537, %v3539
    %v3541 = vrot.slane %v3527, %v3540
    %v3542 = vcombine.high %v3534, %v3534
    %v3543 = vcombine.high %v3541, %v3541
    %v3544 = vcombine.high %v3390, %v3390
    %v3546 = vunpack.c.l.s4 1983009808
    %v3547 = vunpack.c.0.s8 %v3546
    %v3548 = vlaneseq
    %v3549 = vshrl.u32 %v3548, 7
    %v3550 = vsub.s32 %v3547, %v3549
    %v3551 = vrot.slane %v3390, %v3550
    %v3553 = vunpack.c.l.s4 1983009808
    %v3554 = vunpack.c.0.s8 %v3553
    %v3555 = vlaneseq
    %v3556 = vshrl.u32 %v3555, 7
    %v3557 = vsub.s32 %v3554, %v3556
    %v3558 = vrot.slane %v3544, %v3557
    %v3559 = vcombine.high %v3551, %v3551
    %v3560 = vcombine.high %v3558, %v3558
    %v3561 = vcombine.high %v3395, %v3395
    %v3563 = vunpack.c.l.s4 1983009808
    %v3564 = vunpack.c.0.s8 %v3563
    %v3565 = vlaneseq
    %v3566 = vshrl.u32 %v3565, 7
    %v3567 = vsub.s32 %v3564, %v3566
    %v3568 = vrot.slane %v3395, %v3567
    %v3570 = vunpack.c.l.s4 1983009808
    %v3571 = vunpack.c.0.s8 %v3570
    %v3572 = vlaneseq
    %v3573 = vshrl.u32 %v3572, 7
    %v3574 = vsub.s32 %v3571, %v3573
    %v3575 = vrot.slane %v3561, %v3574
    %v3576 = vcombine.high %v3568, %v3568
    %v3577 = vcombine.high %v3575, %v3575
    %v3578 = vcombine.high %v3400, %v3400
    %v3580 = vunpack.c.l.s4 1983009808
    %v3581 = vunpack.c.0.s8 %v3580
    %v3582 = vlaneseq
    %v3583 = vshrl.u32 %v3582, 7
    %v3584 = vsub.s32 %v3581, %v3583
    %v3585 = vrot.slane %v3400, %v3584
    %v3587 = vunpack.c.l.s4 1983009808
    %v3588 = vunpack.c.0.s8 %v3587
    %v3589 = vlaneseq
    %v3590 = vshrl.u32 %v3589, 7
    %v3591 = vsub.s32 %v3588, %v3590
    %v3592 = vrot.slane %v3578, %v3591
    %v3593 = vcombine.high %v3585, %v3585
    %v3594 = vcombine.high %v3592, %v3592
    %v3595 = vcombine.high %v3405, %v3405
    %v3597 = vunpack.c.l.s4 1983009808
    %v3598 = vunpack.c.0.s8 %v3597
    %v3599 = vlaneseq
    %v3600 = vshrl.u32 %v3599, 7
    %v3601 = vsub.s32 %v3598, %v3600
    %v3602 = vrot.slane %v3405, %v3601
    %v3604 = vunpack.c.l.s4 1983009808
    %v3605 = vunpack.c.0.s8 %v3604
    %v3606 = vlaneseq
    %v3607 = vshrl.u32 %v3606, 7
    %v3608 = vsub.s32 %v3605, %v3607
    %v3609 = vrot.slane %v3595, %v3608
    %v3610 = vcombine.high %v3602, %v3602
    %v3611 = vcombine.high %v3609, %v3609
    %v3612 = vcombine.high %v3410, %v3410
    %v3614 = vunpack.c.l.s4 1983009808
    %v3615 = vunpack.c.0.s8 %v3614
    %v3616 = vlaneseq
    %v3617 = vshrl.u32 %v3616, 7
    %v3618 = vsub.s32 %v3615, %v3617
    %v3619 = vrot.slane %v3410, %v3618
    %v3621 = vunpack.c.l.s4 1983009808
    %v3622 = vunpack.c.0.s8 %v3621
    %v3623 = vlaneseq
    %v3624 = vshrl.u32 %v3623, 7
    %v3625 = vsub.s32 %v3622, %v3624
    %v3626 = vrot.slane %v3612, %v3625
    %v3627 = vcombine.high %v3619, %v3619
    %v3628 = vcombine.high %v3626, %v3626
    %v3629 = vcombine.high %v3415, %v3415
    %v3631 = vunpack.c.l.s4 1983009808
    %v3632 = vunpack.c.0.s8 %v3631
    %v3633 = vlaneseq
    %v3634 = vshrl.u32 %v3633, 7
    %v3635 = vsub.s32 %v3632, %v3634
    %v3636 = vrot.slane %v3415, %v3635
    %v3638 = vunpack.c.l.s4 1983009808
    %v3639 = vunpack.c.0.s8 %v3638
    %v3640 = vlaneseq
    %v3641 = vshrl.u32 %v3640, 7
    %v3642 = vsub.s32 %v3639, %v3641
    %v3643 = vrot.slane %v3629, %v3642
    %v3644 = vcombine.high %v3636, %v3636
    %v3645 = vcombine.high %v3643, %v3643
    %v3646 = vcombine.high %v3420, %v3420
    %v3648 = vunpack.c.l.s4 1983009808
    %v3649 = vunpack.c.0.s8 %v3648
    %v3650 = vlaneseq
    %v3651 = vshrl.u32 %v3650, 7
    %v3652 = vsub.s32 %v3649, %v3651
    %v3653 = vrot.slane %v3420, %v3652
    %v3655 = vunpack.c.l.s4 1983009808
    %v3656 = vunpack.c.0.s8 %v3655
    %v3657 = vlaneseq
    %v3658 = vshrl.u32 %v3657, 7
    %v3659 = vsub.s32 %v3656, %v3658
    %v3660 = vrot.slane %v3646, %v3659
    %v3661 = vcombine.high %v3653, %v3653
    %v3662 = vcombine.high %v3660, %v3660
    %v3663 = vcombine.high %v3425, %v3425
    %v3665 = vunpack.c.l.s4 1983009808
    %v3666 = vunpack.c.0.s8 %v3665
    %v3667 = vlaneseq
    %v3668 = vshrl.u32 %v3667, 7
    %v3669 = vsub.s32 %v3666, %v3668
    %v3670 = vrot.slane %v3425, %v3669
    %v3672 = vunpack.c.l.s4 1983009808
    %v3673 = vunpack.c.0.s8 %v3672
    %v3674 = vlaneseq
    %v3675 = vshrl.u32 %v3674, 7
    %v3676 = vsub.s32 %v3673, %v3675
    %v3677 = vrot.slane %v3663, %v3676
    %v3678 = vcombine.high %v3670, %v3670
    %v3679 = vcombine.high %v3677, %v3677
    %v3680 = vcombine.high %v3430, %v3430
    %v3682 = vunpack.c.l.s4 1983009808
    %v3683 = vunpack.c.0.s8 %v3682
    %v3684 = vlaneseq
    %v3685 = vshrl.u32 %v3684, 7
    %v3686 = vsub.s32 %v3683, %v3685
    %v3687 = vrot.slane %v3430, %v3686
    %v3689 = vunpack.c.l.s4 1983009808
    %v3690 = vunpack.c.0.s8 %v3689
    %v3691 = vlaneseq
    %v3692 = vshrl.u32 %v3691, 7
    %v3693 = vsub.s32 %v3690, %v3692
    %v3694 = vrot.slane %v3680, %v3693
    %v3695 = vcombine.high %v3687, %v3687
    %v3696 = vcombine.high %v3694, %v3694
    %v3697 = vcombine.high %v3435, %v3435
    %v3699 = vunpack.c.l.s4 1983009808
    %v3700 = vunpack.c.0.s8 %v3699
    %v3701 = vlaneseq
    %v3702 = vshrl.u32 %v3701, 7
    %v3703 = vsub.s32 %v3700, %v3702
    %v3704 = vrot.slane %v3435, %v3703
    %v3706 = vunpack.c.l.s4 1983009808
    %v3707 = vunpack.c.0.s8 %v3706
    %v3708 = vlaneseq
    %v3709 = vshrl.u32 %v3708, 7
    %v3710 = vsub.s32 %v3707, %v3709
    %v3711 = vrot.slane %v3697, %v3710
    %v3712 = vcombine.high %v3704, %v3704
    %v3713 = vcombine.high %v3711, %v3711
    %v3714 = vcombine.high %v3440, %v3440
    %v3716 = vunpack.c.l.s4 1983009808
    %v3717 = vunpack.c.0.s8 %v3716
    %v3718 = vlaneseq
    %v3719 = vshrl.u32 %v3718, 7
    %v3720 = vsub.s32 %v3717, %v3719
    %v3721 = vrot.slane %v3440, %v3720
    %v3723 = vunpack.c.l.s4 1983009808
    %v3724 = vunpack.c.0.s8 %v3723
    %v3725 = vlaneseq
    %v3726 = vshrl.u32 %v3725, 7
    %v3727 = vsub.s32 %v3724, %v3726
    %v3728 = vrot.slane %v3714, %v3727
    %v3729 = vcombine.high %v3721, %v3721
    %v3730 = vcombine.high %v3728, %v3728
    %v3731 = vcombine.high %v3445, %v3445
    %v3733 = vunpack.c.l.s4 1983009808
    %v3734 = vunpack.c.0.s8 %v3733
    %v3735 = vlaneseq
    %v3736 = vshrl.u32 %v3735, 7
    %v3737 = vsub.s32 %v3734, %v3736
    %v3738 = vrot.slane %v3445, %v3737
    %v3740 = vunpack.c.l.s4 1983009808
    %v3741 = vunpack.c.0.s8 %v3740
    %v3742 = vlaneseq
    %v3743 = vshrl.u32 %v3742, 7
    %v3744 = vsub.s32 %v3741, %v3743
    %v3745 = vrot.slane %v3731, %v3744
    %v3746 = vcombine.high %v3738, %v3738
    %v3747 = vcombine.high %v3745, %v3745
    %v3748 = vcombine.high %v3450, %v3450
    %v3750 = vunpack.c.l.s4 1983009808
    %v3751 = vunpack.c.0.s8 %v3750
    %v3752 = vlaneseq
    %v3753 = vshrl.u32 %v3752, 7
    %v3754 = vsub.s32 %v3751, %v3753
    %v3755 = vrot.slane %v3450, %v3754
    %v3757 = vunpack.c.l.s4 1983009808
    %v3758 = vunpack.c.0.s8 %v3757
    %v3759 = vlaneseq
    %v3760 = vshrl.u32 %v3759, 7
    %v3761 = vsub.s32 %v3758, %v3760
    %v3762 = vrot.slane %v3748, %v3761
    %v3763 = vcombine.high %v3755, %v3755
    %v3764 = vcombine.high %v3762, %v3762
    %v3765 = vcombine.high %v3455, %v3455
    %v3767 = vunpack.c.l.s4 1983009808
    %v3768 = vunpack.c.0.s8 %v3767
    %v3769 = vlaneseq
    %v3770 = vshrl.u32 %v3769, 7
    %v3771 = vsub.s32 %v3768, %v3770
    %v3772 = vrot.slane %v3455, %v3771
    %v3774 = vunpack.c.l.s4 1983009808
    %v3775 = vunpack.c.0.s8 %v3774
    %v3776 = vlaneseq
    %v3777 = vshrl.u32 %v3776, 7
    %v3778 = vsub.s32 %v3775, %v3777
    %v3779 = vrot.slane %v3765, %v3778
    %v3780 = vcombine.high %v3772, %v3772
    %v3781 = vcombine.high %v3779, %v3779
    %v3782 = vcombine.high %v3460, %v3460
    %v3784 = vunpack.c.l.s4 1983009808
    %v3785 = vunpack.c.0.s8 %v3784
    %v3786 = vlaneseq
    %v3787 = vshrl.u32 %v3786, 7
    %v3788 = vsub.s32 %v3785, %v3787
    %v3789 = vrot.slane %v3460, %v3788
    %v3791 = vunpack.c.l.s4 1983009808
    %v3792 = vunpack.c.0.s8 %v3791
    %v3793 = vlaneseq
    %v3794 = vshrl.u32 %v3793, 7
    %v3795 = vsub.s32 %v3792, %v3794
    %v3796 = vrot.slane %v3782, %v3795
    %v3797 = vcombine.high %v3789, %v3789
    %v3798 = vcombine.high %v3796, %v3796
    %v3799 = vcombine.high %v3465, %v3465
    %v3801 = vunpack.c.l.s4 1983009808
    %v3802 = vunpack.c.0.s8 %v3801
    %v3803 = vlaneseq
    %v3804 = vshrl.u32 %v3803, 7
    %v3805 = vsub.s32 %v3802, %v3804
    %v3806 = vrot.slane %v3465, %v3805
    %v3808 = vunpack.c.l.s4 1983009808
    %v3809 = vunpack.c.0.s8 %v3808
    %v3810 = vlaneseq
    %v3811 = vshrl.u32 %v3810, 7
    %v3812 = vsub.s32 %v3809, %v3811
    %v3813 = vrot.slane %v3799, %v3812
    %v3814 = vcombine.high %v3806, %v3806
    %v3815 = vcombine.high %v3813, %v3813
    %v3816 = vcombine.high %v3470, %v3470
    %v3818 = vunpack.c.l.s4 1983009808
    %v3819 = vunpack.c.0.s8 %v3818
    %v3820 = vlaneseq
    %v3821 = vshrl.u32 %v3820, 7
    %v3822 = vsub.s32 %v3819, %v3821
    %v3823 = vrot.slane %v3470, %v3822
    %v3825 = vunpack.c.l.s4 1983009808
    %v3826 = vunpack.c.0.s8 %v3825
    %v3827 = vlaneseq
    %v3828 = vshrl.u32 %v3827, 7
    %v3829 = vsub.s32 %v3826, %v3828
    %v3830 = vrot.slane %v3816, %v3829
    %v3831 = vcombine.high %v3823, %v3823
    %v3832 = vcombine.high %v3830, %v3830
    %v3913 = vadd.f32 %v2512, %v3500
    %v3914 = vadd.f32 %v2520, %v3508
    %v3915 = vadd.f32 %v2519, %v3507
    %v3916 = vadd.f32 %v2521, %v3509
    %v3917 = vadd.f32 %v2529, %v3517
    %v3918 = vadd.f32 %v2537, %v3525
    %v3919 = vadd.f32 %v2536, %v3524
    %v3920 = vadd.f32 %v2538, %v3526
    %v3921 = vadd.f32 %v2546, %v3534
    %v3922 = vadd.f32 %v2554, %v3542
    %v3923 = vadd.f32 %v2553, %v3541
    %v3924 = vadd.f32 %v2555, %v3543
    %v3925 = vadd.f32 %v2563, %v3551
    %v3926 = vadd.f32 %v2571, %v3559
    %v3927 = vadd.f32 %v2570, %v3558
    %v3928 = vadd.f32 %v2572, %v3560
    %v3929 = vadd.f32 %v2580, %v3568
    %v3930 = vadd.f32 %v2588, %v3576
    %v3931 = vadd.f32 %v2587, %v3575
    %v3932 = vadd.f32 %v2589, %v3577
    %v3933 = vadd.f32 %v2597, %v3585
    %v3934 = vadd.f32 %v2605, %v3593
    %v3935 = vadd.f32 %v2604, %v3592
    %v3936 = vadd.f32 %v2606, %v3594
    %v3937 = vadd.f32 %v2614, %v3602
    %v3938 = vadd.f32 %v2622, %v3610
    %v3939 = vadd.f32 %v2621, %v3609
    %v3940 = vadd.f32 %v2623, %v3611
    %v3941 = vadd.f32 %v2631, %v3619
    %v3942 = vadd.f32 %v2639, %v3627
    %v3943 = vadd.f32 %v2638, %v3626
    %v3944 = vadd.f32 %v2640, %v3628
    %v3945 = vadd.f32 %v2648, %v3636
    %v3946 = vadd.f32 %v2656, %v3644
    %v3947 = vadd.f32 %v2655, %v3643
    %v3948 = vadd.f32 %v2657, %v3645
    %v3949 = vadd.f32 %v2665, %v3653
    %v3950 = vadd.f32 %v2673, %v3661
    %v3951 = vadd.f32 %v2672, %v3660
    %v3952 = vadd.f32 %v2674, %v3662
    %v3953 = vadd.f32 %v2682, %v3670
    %v3954 = vadd.f32 %v2690, %v3678
    %v3955 = vadd.f32 %v2689, %v3677
    %v3956 = vadd.f32 %v2691, %v3679
    %v3957 = vadd.f32 %v2699, %v3687
    %v3958 = vadd.f32 %v2707, %v3695
    %v3959 = vadd.f32 %v2706, %v3694
    %v3960 = vadd.f32 %v2708, %v3696
    %v3961 = vadd.f32 %v2716, %v3704
    %v3962 = vadd.f32 %v2724, %v3712
    %v3963 = vadd.f32 %v2723, %v3711
    %v3964 = vadd.f32 %v2725, %v3713
    %v3965 = vadd.f32 %v2733, %v3721
    %v3966 = vadd.f32 %v2741, %v3729
    %v3967 = vadd.f32 %v2740, %v3728
    %v3968 = vadd.f32 %v2742, %v3730
    %v3969 = vadd.f32 %v2750, %v3738
    %v3970 = vadd.f32 %v2758, %v3746
    %v3971 = vadd.f32 %v2757, %v3745
    %v3972 = vadd.f32 %v2759, %v3747
    %v3973 = vadd.f32 %v2767, %v3755
    %v3974 = vadd.f32 %v2775, %v3763
    %v3975 = vadd.f32 %v2774, %v3762
    %v3976 = vadd.f32 %v2776, %v3764
    %v3977 = vadd.f32 %v2784, %v3772
    %v3978 = vadd.f32 %v2792, %v3780
    %v3979 = vadd.f32 %v2791, %v3779
    %v3980 = vadd.f32 %v2793, %v3781
    %v3981 = vadd.f32 %v2801, %v3789
    %v3982 = vadd.f32 %v2809, %v3797
    %v3983 = vadd.f32 %v2808, %v3796
    %v3984 = vadd.f32 %v2810, %v3798
    %v3985 = vadd.f32 %v2818, %v3806
    %v3986 = vadd.f32 %v2826, %v3814
    %v3987 = vadd.f32 %v2825, %v3813
    %v3988 = vadd.f32 %v2827, %v3815
    %v3989 = vadd.f32 %v2835, %v3823
    %v3990 = vadd.f32 %v2843, %v3831
    %v3991 = vadd.f32 %v2842, %v3830
    %v3992 = vadd.f32 %v2844, %v3832
    %v3993 = vld [vmem:[%s6] sm:$0x1]
    %v3995 = vlaneseq
    %v3996 = vshrl.u32 %v3995, 7
    %v3997 = vsub.s32 0, %v3996
    %v3998 = vrot.slane %v3993, %v3997
    %v3999 = vcombine.high %v3998, %v3998
    %v4001 = vunpack.c.l.s4 1983009808
    %v4002 = vunpack.c.0.s8 %v4001
    %v4003 = vlaneseq
    %v4004 = vshrl.u32 %v4003, 7
    %v4005 = vsub.s32 %v4002, %v4004
    %v4006 = vrot.slane %v3998, %v4005
    %v4008 = vunpack.c.l.s4 1983009808
    %v4009 = vunpack.c.0.s8 %v4008
    %v4010 = vlaneseq
    %v4011 = vshrl.u32 %v4010, 7
    %v4012 = vsub.s32 %v4009, %v4011
    %v4013 = vrot.slane %v3999, %v4012
    %v4014 = vcombine.high %v4006, %v4006
    %v4015 = vcombine.high %v4013, %v4013
    %v4020 = vadd.f32 %v3913, %v4006
    %v4021 = vadd.f32 %v3914, %v4014
    %v4022 = vadd.f32 %v3915, %v4013
    %v4023 = vadd.f32 %v3916, %v4015
    %v4024 = vadd.f32 %v3917, %v4006
    %v4025 = vadd.f32 %v3918, %v4006
    %v4026 = vadd.f32 %v3919, %v4014
    %v4027 = vadd.f32 %v3920, %v4013
    %v4028 = vadd.f32 %v3921, %v4015
    %v4029 = vadd.f32 %v3922, %v4006
    %v4030 = vadd.f32 %v3923, %v4006
    %v4031 = vadd.f32 %v3924, %v4014
    %v4032 = vadd.f32 %v3925, %v4013
    %v4033 = vadd.f32 %v3926, %v4015
    %v4034 = vadd.f32 %v3927, %v4006
    %v4035 = vadd.f32 %v3928, %v4006
    %v4036 = vadd.f32 %v3929, %v4014
    %v4037 = vadd.f32 %v3930, %v4013
    %v4038 = vadd.f32 %v3931, %v4015
    %v4039 = vadd.f32 %v3932, %v4006
    %v4040 = vadd.f32 %v3933, %v4006
    %v4041 = vadd.f32 %v3934, %v4014
    %v4042 = vadd.f32 %v3935, %v4013
    %v4043 = vadd.f32 %v3936, %v4015
    %v4044 = vadd.f32 %v3937, %v4006
    %v4045 = vadd.f32 %v3938, %v4006
    %v4046 = vadd.f32 %v3939, %v4014
    %v4047 = vadd.f32 %v3940, %v4013
    %v4048 = vadd.f32 %v3941, %v4015
    %v4049 = vadd.f32 %v3942, %v4006
    %v4050 = vadd.f32 %v3943, %v4006
    %v4051 = vadd.f32 %v3944, %v4014
    %v4052 = vadd.f32 %v3945, %v4013
    %v4053 = vadd.f32 %v3946, %v4015
    %v4054 = vadd.f32 %v3947, %v4006
    %v4055 = vadd.f32 %v3948, %v4006
    %v4056 = vadd.f32 %v3949, %v4014
    %v4057 = vadd.f32 %v3950, %v4013
    %v4058 = vadd.f32 %v3951, %v4015
    %v4059 = vadd.f32 %v3952, %v4006
    %v4060 = vadd.f32 %v3953, %v4006
    %v4061 = vadd.f32 %v3954, %v4014
    %v4062 = vadd.f32 %v3955, %v4013
    %v4063 = vadd.f32 %v3956, %v4015
    %v4064 = vadd.f32 %v3957, %v4006
    %v4065 = vadd.f32 %v3958, %v4006
    %v4066 = vadd.f32 %v3959, %v4014
    %v4067 = vadd.f32 %v3960, %v4013
    %v4068 = vadd.f32 %v3961, %v4015
    %v4069 = vadd.f32 %v3962, %v4006
    %v4070 = vadd.f32 %v3963, %v4006
    %v4071 = vadd.f32 %v3964, %v4014
    %v4072 = vadd.f32 %v3965, %v4013
    %v4073 = vadd.f32 %v3966, %v4015
    %v4074 = vadd.f32 %v3967, %v4006
    %v4075 = vadd.f32 %v3968, %v4006
    %v4076 = vadd.f32 %v3969, %v4014
    %v4077 = vadd.f32 %v3970, %v4013
    %v4078 = vadd.f32 %v3971, %v4015
    %v4079 = vadd.f32 %v3972, %v4006
    %v4080 = vadd.f32 %v3973, %v4006
    %v4081 = vadd.f32 %v3974, %v4014
    %v4082 = vadd.f32 %v3975, %v4013
    %v4083 = vadd.f32 %v3976, %v4015
    %v4084 = vadd.f32 %v3977, %v4006
    %v4085 = vadd.f32 %v3978, %v4006
    %v4086 = vadd.f32 %v3979, %v4014
    %v4087 = vadd.f32 %v3980, %v4013
    %v4088 = vadd.f32 %v3981, %v4015
    %v4089 = vadd.f32 %v3982, %v4006
    %v4090 = vadd.f32 %v3983, %v4006
    %v4091 = vadd.f32 %v3984, %v4014
    %v4092 = vadd.f32 %v3985, %v4013
    %v4093 = vadd.f32 %v3986, %v4015
    %v4094 = vadd.f32 %v3987, %v4006
    %v4095 = vadd.f32 %v3988, %v4006
    %v4096 = vadd.f32 %v3989, %v4014
    %v4097 = vadd.f32 %v3990, %v4013
    %v4098 = vadd.f32 %v3991, %v4015
    %v4099 = vadd.f32 %v3992, %v4006
    %v4100 = vmax.f32 %v4020, 0.0
    %v4101 = vmax.f32 %v4021, 0.0
    %v4102 = vmax.f32 %v4022, 0.0
    %v4103 = vmax.f32 %v4023, 0.0
    %v4104 = vmax.f32 %v4024, 0.0
    %v4105 = vmax.f32 %v4025, 0.0
    %v4106 = vmax.f32 %v4026, 0.0
    %v4107 = vmax.f32 %v4027, 0.0
    %v4108 = vmax.f32 %v4028, 0.0
    %v4109 = vmax.f32 %v4029, 0.0
    %v4110 = vmax.f32 %v4030, 0.0
    %v4111 = vmax.f32 %v4031, 0.0
    %v4112 = vmax.f32 %v4032, 0.0
    %v4113 = vmax.f32 %v4033, 0.0
    %v4114 = vmax.f32 %v4034, 0.0
    %v4115 = vmax.f32 %v4035, 0.0
    %v4116 = vmax.f32 %v4036, 0.0
    %v4117 = vmax.f32 %v4037, 0.0
    %v4118 = vmax.f32 %v4038, 0.0
    %v4119 = vmax.f32 %v4039, 0.0
    %v4120 = vmax.f32 %v4040, 0.0
    %v4121 = vmax.f32 %v4041, 0.0
    %v4122 = vmax.f32 %v4042, 0.0
    %v4123 = vmax.f32 %v4043, 0.0
    %v4124 = vmax.f32 %v4044, 0.0
    %v4125 = vmax.f32 %v4045, 0.0
    %v4126 = vmax.f32 %v4046, 0.0
    %v4127 = vmax.f32 %v4047, 0.0
    %v4128 = vmax.f32 %v4048, 0.0
    %v4129 = vmax.f32 %v4049, 0.0
    %v4130 = vmax.f32 %v4050, 0.0
    %v4131 = vmax.f32 %v4051, 0.0
    %v4132 = vmax.f32 %v4052, 0.0
    %v4133 = vmax.f32 %v4053, 0.0
    %v4134 = vmax.f32 %v4054, 0.0
    %v4135 = vmax.f32 %v4055, 0.0
    %v4136 = vmax.f32 %v4056, 0.0
    %v4137 = vmax.f32 %v4057, 0.0
    %v4138 = vmax.f32 %v4058, 0.0
    %v4139 = vmax.f32 %v4059, 0.0
    %v4140 = vmax.f32 %v4060, 0.0
    %v4141 = vmax.f32 %v4061, 0.0
    %v4142 = vmax.f32 %v4062, 0.0
    %v4143 = vmax.f32 %v4063, 0.0
    %v4144 = vmax.f32 %v4064, 0.0
    %v4145 = vmax.f32 %v4065, 0.0
    %v4146 = vmax.f32 %v4066, 0.0
    %v4147 = vmax.f32 %v4067, 0.0
    %v4148 = vmax.f32 %v4068, 0.0
    %v4149 = vmax.f32 %v4069, 0.0
    %v4150 = vmax.f32 %v4070, 0.0
    %v4151 = vmax.f32 %v4071, 0.0
    %v4152 = vmax.f32 %v4072, 0.0
    %v4153 = vmax.f32 %v4073, 0.0
    %v4154 = vmax.f32 %v4074, 0.0
    %v4155 = vmax.f32 %v4075, 0.0
    %v4156 = vmax.f32 %v4076, 0.0
    %v4157 = vmax.f32 %v4077, 0.0
    %v4158 = vmax.f32 %v4078, 0.0
    %v4159 = vmax.f32 %v4079, 0.0
    %v4160 = vmax.f32 %v4080, 0.0
    %v4161 = vmax.f32 %v4081, 0.0
    %v4162 = vmax.f32 %v4082, 0.0
    %v4163 = vmax.f32 %v4083, 0.0
    %v4164 = vmax.f32 %v4084, 0.0
    %v4165 = vmax.f32 %v4085, 0.0
    %v4166 = vmax.f32 %v4086, 0.0
    %v4167 = vmax.f32 %v4087, 0.0
    %v4168 = vmax.f32 %v4088, 0.0
    %v4169 = vmax.f32 %v4089, 0.0
    %v4170 = vmax.f32 %v4090, 0.0
    %v4171 = vmax.f32 %v4091, 0.0
    %v4172 = vmax.f32 %v4092, 0.0
    %v4173 = vmax.f32 %v4093, 0.0
    %v4174 = vmax.f32 %v4094, 0.0
    %v4175 = vmax.f32 %v4095, 0.0
    %v4176 = vmax.f32 %v4096, 0.0
    %v4177 = vmax.f32 %v4097, 0.0
    %v4178 = vmax.f32 %v4098, 0.0
    %v4179 = vmax.f32 %v4099, 0.0
    %v4260 = vcombine.low %v4100, %v4101
    %v4261 = vcombine.low %v4102, %v4103
    %v4263 = vunpack.c.l.s4 1983009808
    %v4264 = vunpack.c.0.s8 %v4263
    %v4265 = vlaneseq
    %v4266 = vshrl.u32 %v4265, 7
    %v4267 = vsub.s32 %v4264, %v4266
    %v4268 = vrot.slane %v4260, %v4267
    %v4270 = vunpack.c.l.s4 1983009808
    %v4271 = vunpack.c.0.s8 %v4270
    %v4272 = vlaneseq
    %v4273 = vshrl.u32 %v4272, 7
    %v4274 = vsub.s32 %v4271, %v4273
    %v4275 = vrot.slane %v4261, %v4274
    %v4276 = vcombine.low %v4268, %v4275
    %v4278 = vunpack.c.l.s4 1983009808
    %v4279 = vunpack.c.0.s8 %v4278
    %v4280 = vlaneseq
    %v4281 = vshrl.u32 %v4280, 7
    %v4282 = vsub.s32 %v4279, %v4281
    %v4283 = vrot.slane %v4104, %v4282
    %v4284 = vcombine.low %v4105, %v4106
    %v4285 = vcombine.low %v4107, %v4108
    %v4287 = vunpack.c.l.s4 1983009808
    %v4288 = vunpack.c.0.s8 %v4287
    %v4289 = vlaneseq
    %v4290 = vshrl.u32 %v4289, 7
    %v4291 = vsub.s32 %v4288, %v4290
    %v4292 = vrot.slane %v4284, %v4291
    %v4294 = vunpack.c.l.s4 1983009808
    %v4295 = vunpack.c.0.s8 %v4294
    %v4296 = vlaneseq
    %v4297 = vshrl.u32 %v4296, 7
    %v4298 = vsub.s32 %v4295, %v4297
    %v4299 = vrot.slane %v4285, %v4298
    %v4300 = vcombine.low %v4292, %v4299
    %v4302 = vunpack.c.l.s4 1983009808
    %v4303 = vunpack.c.0.s8 %v4302
    %v4304 = vlaneseq
    %v4305 = vshrl.u32 %v4304, 7
    %v4306 = vsub.s32 %v4303, %v4305
    %v4307 = vrot.slane %v4109, %v4306
    %v4308 = vcombine.low %v4110, %v4111
    %v4309 = vcombine.low %v4112, %v4113
    %v4311 = vunpack.c.l.s4 1983009808
    %v4312 = vunpack.c.0.s8 %v4311
    %v4313 = vlaneseq
    %v4314 = vshrl.u32 %v4313, 7
    %v4315 = vsub.s32 %v4312, %v4314
    %v4316 = vrot.slane %v4308, %v4315
    %v4318 = vunpack.c.l.s4 1983009808
    %v4319 = vunpack.c.0.s8 %v4318
    %v4320 = vlaneseq
    %v4321 = vshrl.u32 %v4320, 7
    %v4322 = vsub.s32 %v4319, %v4321
    %v4323 = vrot.slane %v4309, %v4322
    %v4324 = vcombine.low %v4316, %v4323
    %v4326 = vunpack.c.l.s4 1983009808
    %v4327 = vunpack.c.0.s8 %v4326
    %v4328 = vlaneseq
    %v4329 = vshrl.u32 %v4328, 7
    %v4330 = vsub.s32 %v4327, %v4329
    %v4331 = vrot.slane %v4114, %v4330
    %v4332 = vcombine.low %v4115, %v4116
    %v4333 = vcombine.low %v4117, %v4118
    %v4335 = vunpack.c.l.s4 1983009808
    %v4336 = vunpack.c.0.s8 %v4335
    %v4337 = vlaneseq
    %v4338 = vshrl.u32 %v4337, 7
    %v4339 = vsub.s32 %v4336, %v4338
    %v4340 = vrot.slane %v4332, %v4339
    %v4342 = vunpack.c.l.s4 1983009808
    %v4343 = vunpack.c.0.s8 %v4342
    %v4344 = vlaneseq
    %v4345 = vshrl.u32 %v4344, 7
    %v4346 = vsub.s32 %v4343, %v4345
    %v4347 = vrot.slane %v4333, %v4346
    %v4348 = vcombine.low %v4340, %v4347
    %v4350 = vunpack.c.l.s4 1983009808
    %v4351 = vunpack.c.0.s8 %v4350
    %v4352 = vlaneseq
    %v4353 = vshrl.u32 %v4352, 7
    %v4354 = vsub.s32 %v4351, %v4353
    %v4355 = vrot.slane %v4119, %v4354
    %v4356 = vcombine.low %v4120, %v4121
    %v4357 = vcombine.low %v4122, %v4123
    %v4359 = vunpack.c.l.s4 1983009808
    %v4360 = vunpack.c.0.s8 %v4359
    %v4361 = vlaneseq
    %v4362 = vshrl.u32 %v4361, 7
    %v4363 = vsub.s32 %v4360, %v4362
    %v4364 = vrot.slane %v4356, %v4363
    %v4366 = vunpack.c.l.s4 1983009808
    %v4367 = vunpack.c.0.s8 %v4366
    %v4368 = vlaneseq
    %v4369 = vshrl.u32 %v4368, 7
    %v4370 = vsub.s32 %v4367, %v4369
    %v4371 = vrot.slane %v4357, %v4370
    %v4372 = vcombine.low %v4364, %v4371
    %v4374 = vunpack.c.l.s4 1983009808
    %v4375 = vunpack.c.0.s8 %v4374
    %v4376 = vlaneseq
    %v4377 = vshrl.u32 %v4376, 7
    %v4378 = vsub.s32 %v4375, %v4377
    %v4379 = vrot.slane %v4124, %v4378
    %v4380 = vcombine.low %v4125, %v4126
    %v4381 = vcombine.low %v4127, %v4128
    %v4383 = vunpack.c.l.s4 1983009808
    %v4384 = vunpack.c.0.s8 %v4383
    %v4385 = vlaneseq
    %v4386 = vshrl.u32 %v4385, 7
    %v4387 = vsub.s32 %v4384, %v4386
    %v4388 = vrot.slane %v4380, %v4387
    %v4390 = vunpack.c.l.s4 1983009808
    %v4391 = vunpack.c.0.s8 %v4390
    %v4392 = vlaneseq
    %v4393 = vshrl.u32 %v4392, 7
    %v4394 = vsub.s32 %v4391, %v4393
    %v4395 = vrot.slane %v4381, %v4394
    %v4396 = vcombine.low %v4388, %v4395
    %v4398 = vunpack.c.l.s4 1983009808
    %v4399 = vunpack.c.0.s8 %v4398
    %v4400 = vlaneseq
    %v4401 = vshrl.u32 %v4400, 7
    %v4402 = vsub.s32 %v4399, %v4401
    %v4403 = vrot.slane %v4129, %v4402
    %v4404 = vcombine.low %v4130, %v4131
    %v4405 = vcombine.low %v4132, %v4133
    %v4407 = vunpack.c.l.s4 1983009808
    %v4408 = vunpack.c.0.s8 %v4407
    %v4409 = vlaneseq
    %v4410 = vshrl.u32 %v4409, 7
    %v4411 = vsub.s32 %v4408, %v4410
    %v4412 = vrot.slane %v4404, %v4411
    %v4414 = vunpack.c.l.s4 1983009808
    %v4415 = vunpack.c.0.s8 %v4414
    %v4416 = vlaneseq
    %v4417 = vshrl.u32 %v4416, 7
    %v4418 = vsub.s32 %v4415, %v4417
    %v4419 = vrot.slane %v4405, %v4418
    %v4420 = vcombine.low %v4412, %v4419
    %v4422 = vunpack.c.l.s4 1983009808
    %v4423 = vunpack.c.0.s8 %v4422
    %v4424 = vlaneseq
    %v4425 = vshrl.u32 %v4424, 7
    %v4426 = vsub.s32 %v4423, %v4425
    %v4427 = vrot.slane %v4134, %v4426
    %v4428 = vcombine.low %v4135, %v4136
    %v4429 = vcombine.low %v4137, %v4138
    %v4431 = vunpack.c.l.s4 1983009808
    %v4432 = vunpack.c.0.s8 %v4431
    %v4433 = vlaneseq
    %v4434 = vshrl.u32 %v4433, 7
    %v4435 = vsub.s32 %v4432, %v4434
    %v4436 = vrot.slane %v4428, %v4435
    %v4438 = vunpack.c.l.s4 1983009808
    %v4439 = vunpack.c.0.s8 %v4438
    %v4440 = vlaneseq
    %v4441 = vshrl.u32 %v4440, 7
    %v4442 = vsub.s32 %v4439, %v4441
    %v4443 = vrot.slane %v4429, %v4442
    %v4444 = vcombine.low %v4436, %v4443
    %v4446 = vunpack.c.l.s4 1983009808
    %v4447 = vunpack.c.0.s8 %v4446
    %v4448 = vlaneseq
    %v4449 = vshrl.u32 %v4448, 7
    %v4450 = vsub.s32 %v4447, %v4449
    %v4451 = vrot.slane %v4139, %v4450
    %v4452 = vcombine.low %v4140, %v4141
    %v4453 = vcombine.low %v4142, %v4143
    %v4455 = vunpack.c.l.s4 1983009808
    %v4456 = vunpack.c.0.s8 %v4455
    %v4457 = vlaneseq
    %v4458 = vshrl.u32 %v4457, 7
    %v4459 = vsub.s32 %v4456, %v4458
    %v4460 = vrot.slane %v4452, %v4459
    %v4462 = vunpack.c.l.s4 1983009808
    %v4463 = vunpack.c.0.s8 %v4462
    %v4464 = vlaneseq
    %v4465 = vshrl.u32 %v4464, 7
    %v4466 = vsub.s32 %v4463, %v4465
    %v4467 = vrot.slane %v4453, %v4466
    %v4468 = vcombine.low %v4460, %v4467
    %v4470 = vunpack.c.l.s4 1983009808
    %v4471 = vunpack.c.0.s8 %v4470
    %v4472 = vlaneseq
    %v4473 = vshrl.u32 %v4472, 7
    %v4474 = vsub.s32 %v4471, %v4473
    %v4475 = vrot.slane %v4144, %v4474
    %v4476 = vcombine.low %v4145, %v4146
    %v4477 = vcombine.low %v4147, %v4148
    %v4479 = vunpack.c.l.s4 1983009808
    %v4480 = vunpack.c.0.s8 %v4479
    %v4481 = vlaneseq
    %v4482 = vshrl.u32 %v4481, 7
    %v4483 = vsub.s32 %v4480, %v4482
    %v4484 = vrot.slane %v4476, %v4483
    %v4486 = vunpack.c.l.s4 1983009808
    %v4487 = vunpack.c.0.s8 %v4486
    %v4488 = vlaneseq
    %v4489 = vshrl.u32 %v4488, 7
    %v4490 = vsub.s32 %v4487, %v4489
    %v4491 = vrot.slane %v4477, %v4490
    %v4492 = vcombine.low %v4484, %v4491
    %v4494 = vunpack.c.l.s4 1983009808
    %v4495 = vunpack.c.0.s8 %v4494
    %v4496 = vlaneseq
    %v4497 = vshrl.u32 %v4496, 7
    %v4498 = vsub.s32 %v4495, %v4497
    %v4499 = vrot.slane %v4149, %v4498
    %v4500 = vcombine.low %v4150, %v4151
    %v4501 = vcombine.low %v4152, %v4153
    %v4503 = vunpack.c.l.s4 1983009808
    %v4504 = vunpack.c.0.s8 %v4503
    %v4505 = vlaneseq
    %v4506 = vshrl.u32 %v4505, 7
    %v4507 = vsub.s32 %v4504, %v4506
    %v4508 = vrot.slane %v4500, %v4507
    %v4510 = vunpack.c.l.s4 1983009808
    %v4511 = vunpack.c.0.s8 %v4510
    %v4512 = vlaneseq
    %v4513 = vshrl.u32 %v4512, 7
    %v4514 = vsub.s32 %v4511, %v4513
    %v4515 = vrot.slane %v4501, %v4514
    %v4516 = vcombine.low %v4508, %v4515
    %v4518 = vunpack.c.l.s4 1983009808
    %v4519 = vunpack.c.0.s8 %v4518
    %v4520 = vlaneseq
    %v4521 = vshrl.u32 %v4520, 7
    %v4522 = vsub.s32 %v4519, %v4521
    %v4523 = vrot.slane %v4154, %v4522
    %v4524 = vcombine.low %v4155, %v4156
    %v4525 = vcombine.low %v4157, %v4158
    %v4527 = vunpack.c.l.s4 1983009808
    %v4528 = vunpack.c.0.s8 %v4527
    %v4529 = vlaneseq
    %v4530 = vshrl.u32 %v4529, 7
    %v4531 = vsub.s32 %v4528, %v4530
    %v4532 = vrot.slane %v4524, %v4531
    %v4534 = vunpack.c.l.s4 1983009808
    %v4535 = vunpack.c.0.s8 %v4534
    %v4536 = vlaneseq
    %v4537 = vshrl.u32 %v4536, 7
    %v4538 = vsub.s32 %v4535, %v4537
    %v4539 = vrot.slane %v4525, %v4538
    %v4540 = vcombine.low %v4532, %v4539
    %v4542 = vunpack.c.l.s4 1983009808
    %v4543 = vunpack.c.0.s8 %v4542
    %v4544 = vlaneseq
    %v4545 = vshrl.u32 %v4544, 7
    %v4546 = vsub.s32 %v4543, %v4545
    %v4547 = vrot.slane %v4159, %v4546
    %v4548 = vcombine.low %v4160, %v4161
    %v4549 = vcombine.low %v4162, %v4163
    %v4551 = vunpack.c.l.s4 1983009808
    %v4552 = vunpack.c.0.s8 %v4551
    %v4553 = vlaneseq
    %v4554 = vshrl.u32 %v4553, 7
    %v4555 = vsub.s32 %v4552, %v4554
    %v4556 = vrot.slane %v4548, %v4555
    %v4558 = vunpack.c.l.s4 1983009808
    %v4559 = vunpack.c.0.s8 %v4558
    %v4560 = vlaneseq
    %v4561 = vshrl.u32 %v4560, 7
    %v4562 = vsub.s32 %v4559, %v4561
    %v4563 = vrot.slane %v4549, %v4562
    %v4564 = vcombine.low %v4556, %v4563
    %v4566 = vunpack.c.l.s4 1983009808
    %v4567 = vunpack.c.0.s8 %v4566
    %v4568 = vlaneseq
    %v4569 = vshrl.u32 %v4568, 7
    %v4570 = vsub.s32 %v4567, %v4569
    %v4571 = vrot.slane %v4164, %v4570
    %v4572 = vcombine.low %v4165, %v4166
    %v4573 = vcombine.low %v4167, %v4168
    %v4575 = vunpack.c.l.s4 1983009808
    %v4576 = vunpack.c.0.s8 %v4575
    %v4577 = vlaneseq
    %v4578 = vshrl.u32 %v4577, 7
    %v4579 = vsub.s32 %v4576, %v4578
    %v4580 = vrot.slane %v4572, %v4579
    %v4582 = vunpack.c.l.s4 1983009808
    %v4583 = vunpack.c.0.s8 %v4582
    %v4584 = vlaneseq
    %v4585 = vshrl.u32 %v4584, 7
    %v4586 = vsub.s32 %v4583, %v4585
    %v4587 = vrot.slane %v4573, %v4586
    %v4588 = vcombine.low %v4580, %v4587
    %v4590 = vunpack.c.l.s4 1983009808
    %v4591 = vunpack.c.0.s8 %v4590
    %v4592 = vlaneseq
    %v4593 = vshrl.u32 %v4592, 7
    %v4594 = vsub.s32 %v4591, %v4593
    %v4595 = vrot.slane %v4169, %v4594
    %v4596 = vcombine.low %v4170, %v4171
    %v4597 = vcombine.low %v4172, %v4173
    %v4599 = vunpack.c.l.s4 1983009808
    %v4600 = vunpack.c.0.s8 %v4599
    %v4601 = vlaneseq
    %v4602 = vshrl.u32 %v4601, 7
    %v4603 = vsub.s32 %v4600, %v4602
    %v4604 = vrot.slane %v4596, %v4603
    %v4606 = vunpack.c.l.s4 1983009808
    %v4607 = vunpack.c.0.s8 %v4606
    %v4608 = vlaneseq
    %v4609 = vshrl.u32 %v4608, 7
    %v4610 = vsub.s32 %v4607, %v4609
    %v4611 = vrot.slane %v4597, %v4610
    %v4612 = vcombine.low %v4604, %v4611
    %v4614 = vunpack.c.l.s4 1983009808
    %v4615 = vunpack.c.0.s8 %v4614
    %v4616 = vlaneseq
    %v4617 = vshrl.u32 %v4616, 7
    %v4618 = vsub.s32 %v4615, %v4617
    %v4619 = vrot.slane %v4174, %v4618
    %v4620 = vcombine.low %v4175, %v4176
    %v4621 = vcombine.low %v4177, %v4178
    %v4623 = vunpack.c.l.s4 1983009808
    %v4624 = vunpack.c.0.s8 %v4623
    %v4625 = vlaneseq
    %v4626 = vshrl.u32 %v4625, 7
    %v4627 = vsub.s32 %v4624, %v4626
    %v4628 = vrot.slane %v4620, %v4627
    %v4630 = vunpack.c.l.s4 1983009808
    %v4631 = vunpack.c.0.s8 %v4630
    %v4632 = vlaneseq
    %v4633 = vshrl.u32 %v4632, 7
    %v4634 = vsub.s32 %v4631, %v4633
    %v4635 = vrot.slane %v4621, %v4634
    %v4636 = vcombine.low %v4628, %v4635
    %v4638 = vunpack.c.l.s4 1983009808
    %v4639 = vunpack.c.0.s8 %v4638
    %v4640 = vlaneseq
    %v4641 = vshrl.u32 %v4640, 7
    %v4642 = vsub.s32 %v4639, %v4641
    %v4643 = vrot.slane %v4179, %v4642
    %vm4676 = vcmask 195584
    %v4677 = vsel %vm4676, %v4276, -inf
    %vm4678 = vcmask 189440
    %v4679 = vsel %vm4678, %v4283, -inf
    %v4680 = vmax.f32 %v4677, %v4679
    %v4681 = vrot.slane %v4680, 4
    %v4682 = vmax.f32 %v4680, %v4681
    %v4683 = vrot.slane %v4682, 2
    %v4684 = vmax.f32 %v4682, %v4683
    %v4685 = vrot.slane %v4684, 1
    %v4686 = vmax.f32 %v4684, %v4685
    %v4687 = vsel %vm4676, %v4300, -inf
    %v4688 = vsel %vm4678, %v4307, -inf
    %v4689 = vmax.f32 %v4687, %v4688
    %v4690 = vrot.slane %v4689, 4
    %v4691 = vmax.f32 %v4689, %v4690
    %v4692 = vrot.slane %v4691, 2
    %v4693 = vmax.f32 %v4691, %v4692
    %v4694 = vrot.slane %v4693, 1
    %v4695 = vmax.f32 %v4693, %v4694
    %v4696 = vsel %vm4676, %v4324, -inf
    %v4697 = vsel %vm4678, %v4331, -inf
    %v4698 = vmax.f32 %v4696, %v4697
    %v4699 = vrot.slane %v4698, 4
    %v4700 = vmax.f32 %v4698, %v4699
    %v4701 = vrot.slane %v4700, 2
    %v4702 = vmax.f32 %v4700, %v4701
    %v4703 = vrot.slane %v4702, 1
    %v4704 = vmax.f32 %v4702, %v4703
    %v4705 = vsel %vm4676, %v4348, -inf
    %v4706 = vsel %vm4678, %v4355, -inf
    %v4707 = vmax.f32 %v4705, %v4706
    %v4708 = vrot.slane %v4707, 4
    %v4709 = vmax.f32 %v4707, %v4708
    %v4710 = vrot.slane %v4709, 2
    %v4711 = vmax.f32 %v4709, %v4710
    %v4712 = vrot.slane %v4711, 1
    %v4713 = vmax.f32 %v4711, %v4712
    %v4714 = vsel %vm4676, %v4372, -inf
    %v4715 = vsel %vm4678, %v4379, -inf
    %v4716 = vmax.f32 %v4714, %v4715
    %v4717 = vrot.slane %v4716, 4
    %v4718 = vmax.f32 %v4716, %v4717
    %v4719 = vrot.slane %v4718, 2
    %v4720 = vmax.f32 %v4718, %v4719
    %v4721 = vrot.slane %v4720, 1
    %v4722 = vmax.f32 %v4720, %v4721
    %v4723 = vsel %vm4676, %v4396, -inf
    %v4724 = vsel %vm4678, %v4403, -inf
    %v4725 = vmax.f32 %v4723, %v4724
    %v4726 = vrot.slane %v4725, 4
    %v4727 = vmax.f32 %v4725, %v4726
    %v4728 = vrot.slane %v4727, 2
    %v4729 = vmax.f32 %v4727, %v4728
    %v4730 = vrot.slane %v4729, 1
    %v4731 = vmax.f32 %v4729, %v4730
    %v4732 = vsel %vm4676, %v4420, -inf
    %v4733 = vsel %vm4678, %v4427, -inf
    %v4734 = vmax.f32 %v4732, %v4733
    %v4735 = vrot.slane %v4734, 4
    %v4736 = vmax.f32 %v4734, %v4735
    %v4737 = vrot.slane %v4736, 2
    %v4738 = vmax.f32 %v4736, %v4737
    %v4739 = vrot.slane %v4738, 1
    %v4740 = vmax.f32 %v4738, %v4739
    %v4741 = vsel %vm4676, %v4444, -inf
    %v4742 = vsel %vm4678, %v4451, -inf
    %v4743 = vmax.f32 %v4741, %v4742
    %v4744 = vrot.slane %v4743, 4
    %v4745 = vmax.f32 %v4743, %v4744
    %v4746 = vrot.slane %v4745, 2
    %v4747 = vmax.f32 %v4745, %v4746
    %v4748 = vrot.slane %v4747, 1
    %v4749 = vmax.f32 %v4747, %v4748
    %v4750 = vsel %vm4676, %v4468, -inf
    %v4751 = vsel %vm4678, %v4475, -inf
    %v4752 = vmax.f32 %v4750, %v4751
    %v4753 = vrot.slane %v4752, 4
    %v4754 = vmax.f32 %v4752, %v4753
    %v4755 = vrot.slane %v4754, 2
    %v4756 = vmax.f32 %v4754, %v4755
    %v4757 = vrot.slane %v4756, 1
    %v4758 = vmax.f32 %v4756, %v4757
    %v4759 = vsel %vm4676, %v4492, -inf
    %v4760 = vsel %vm4678, %v4499, -inf
    %v4761 = vmax.f32 %v4759, %v4760
    %v4762 = vrot.slane %v4761, 4
    %v4763 = vmax.f32 %v4761, %v4762
    %v4764 = vrot.slane %v4763, 2
    %v4765 = vmax.f32 %v4763, %v4764
    %v4766 = vrot.slane %v4765, 1
    %v4767 = vmax.f32 %v4765, %v4766
    %v4768 = vsel %vm4676, %v4516, -inf
    %v4769 = vsel %vm4678, %v4523, -inf
    %v4770 = vmax.f32 %v4768, %v4769
    %v4771 = vrot.slane %v4770, 4
    %v4772 = vmax.f32 %v4770, %v4771
    %v4773 = vrot.slane %v4772, 2
    %v4774 = vmax.f32 %v4772, %v4773
    %v4775 = vrot.slane %v4774, 1
    %v4776 = vmax.f32 %v4774, %v4775
    %v4777 = vsel %vm4676, %v4540, -inf
    %v4778 = vsel %vm4678, %v4547, -inf
    %v4779 = vmax.f32 %v4777, %v4778
    %v4780 = vrot.slane %v4779, 4
    %v4781 = vmax.f32 %v4779, %v4780
    %v4782 = vrot.slane %v4781, 2
    %v4783 = vmax.f32 %v4781, %v4782
    %v4784 = vrot.slane %v4783, 1
    %v4785 = vmax.f32 %v4783, %v4784
    %v4786 = vsel %vm4676, %v4564, -inf
    %v4787 = vsel %vm4678, %v4571, -inf
    %v4788 = vmax.f32 %v4786, %v4787
    %v4789 = vrot.slane %v4788, 4
    %v4790 = vmax.f32 %v4788, %v4789
    %v4791 = vrot.slane %v4790, 2
    %v4792 = vmax.f32 %v4790, %v4791
    %v4793 = vrot.slane %v4792, 1
    %v4794 = vmax.f32 %v4792, %v4793
    %v4795 = vsel %vm4676, %v4588, -inf
    %v4796 = vsel %vm4678, %v4595, -inf
    %v4797 = vmax.f32 %v4795, %v4796
    %v4798 = vrot.slane %v4797, 4
    %v4799 = vmax.f32 %v4797, %v4798
    %v4800 = vrot.slane %v4799, 2
    %v4801 = vmax.f32 %v4799, %v4800
    %v4802 = vrot.slane %v4801, 1
    %v4803 = vmax.f32 %v4801, %v4802
    %v4804 = vsel %vm4676, %v4612, -inf
    %v4805 = vsel %vm4678, %v4619, -inf
    %v4806 = vmax.f32 %v4804, %v4805
    %v4807 = vrot.slane %v4806, 4
    %v4808 = vmax.f32 %v4806, %v4807
    %v4809 = vrot.slane %v4808, 2
    %v4810 = vmax.f32 %v4808, %v4809
    %v4811 = vrot.slane %v4810, 1
    %v4812 = vmax.f32 %v4810, %v4811
    %v4813 = vsel %vm4676, %v4636, -inf
    %v4814 = vsel %vm4678, %v4643, -inf
    %v4815 = vmax.f32 %v4813, %v4814
    %v4816 = vrot.slane %v4815, 4
    %v4817 = vmax.f32 %v4815, %v4816
    %v4818 = vrot.slane %v4817, 2
    %v4819 = vmax.f32 %v4817, %v4818
    %v4820 = vrot.slane %v4819, 1
    %v4821 = vmax.f32 %v4819, %v4820
    %v4822 = vadd.s32 %v140, 32
    %v4823 = vadd.s32 %v141, 32
    %v4824 = vadd.s32 %v142, 32
    %vm4825 = vcmp.eq.s32.totalorder %v40, %v4822
    %vm4826 = vcmp.eq.s32.totalorder %v40, %v4823
    %vm4827 = vcmp.eq.s32.totalorder %v40, %v4824
    %v4828 = vsel %vm4825, 1, 0
    %v4829 = vsel %vm4826, 1, 0
    %v4830 = vsel %vm4827, 1, 0
    %v4831 = vcvt.s32.f32 %v4828
    %v4832 = vcvt.s32.f32 %v4829
    %v4833 = vcvt.s32.f32 %v4830
    %vm4850 = vcmask 1041409
    %v4851 = vsel %vm4850, %v4695, %v4686
    %v4852 = vsel %vm1132, %v4704, %v4851
    %vm4853 = vcmask 1043459
    %v4854 = vsel %vm4853, %v4713, %v4852
    %v4855 = vsel %vm1134, %v4722, %v4854
    %vm4856 = vcmask 1045509
    %v4857 = vsel %vm4856, %v4731, %v4855
    %v4858 = vsel %vm1136, %v4740, %v4857
    %vm4859 = vcmask 1047559
    %v4860 = vsel %vm4859, %v4749, %v4858
    %v4861 = vsel %vm4850, %v4767, %v4758
    %v4862 = vsel %vm1132, %v4776, %v4861
    %v4863 = vsel %vm4853, %v4785, %v4862
    %v4864 = vsel %vm1134, %v4794, %v4863
    %v4865 = vsel %vm4856, %v4803, %v4864
    %v4866 = vsel %vm1136, %v4812, %v4865
    %v4867 = vsel %vm4859, %v4821, %v4866
    %v4868 = vsel %vm4676, %v4860, 0
    %v4870 = vsel %vm4676, %v4867, 0
    %4872 = vmatprep.subr.mxu0 0.0
    %4873 = vmatpush1.msra.mxu0 %v4831
    %4874 = vmatprep.subr.mxu0 0.0
    %4875 = vmatpush1.msra.mxu0 %v4832
    %4876 = vmatprep.subr.mxu0 0.0
    %4877 = vmatpush1.msra.mxu0 %v4833
    %4878 = vmatprep.subr.mxu0 0.0
    %4879 = vmatpush1.msra.mxu0 0.0
    %4880 = vmatprep.subr.mxu0 0.0
    %4881 = vmatpush1.msra.mxu0 0.0
    %4882 = vmatprep.subr.mxu0 0.0
    %4883 = vmatpush1.msra.mxu0 0.0
    %4884 = vmatprep.subr.mxu0 0.0
    %4885 = vmatpush1.msra.mxu0 0.0
    %4886 = vmatprep.subr.mxu0 0.0
    %4887 = vmatpush1.msra.mxu0 0.0
    %4888 = vmatprep.subr.mxu0 0.0
    %4889 = vmatpush1.msra.mxu0 0.0
    %4890 = vmatprep.subr.mxu0 0.0
    %4891 = vmatpush1.msra.mxu0 0.0
    %4892 = vmatprep.subr.mxu0 0.0
    %4893 = vmatpush1.msra.mxu0 0.0
    %4894 = vmatprep.subr.mxu0 0.0
    %4895 = vmatpush1.msra.mxu0 0.0
    %4896 = vmatprep.subr.mxu0 0.0
    %4897 = vmatpush1.msra.mxu0 0.0
    %4898 = vmatprep.subr.mxu0 0.0
    %4899 = vmatpush1.msra.mxu0 0.0
    %4900 = vmatprep.subr.mxu0 0.0
    %4901 = vmatpush1.msra.mxu0 0.0
    %4902 = vmatprep.subr.mxu0 0.0
    %4903 = vmatpush1.msra.mxu0 0.0
    %4904 = vmatprep.subr.mxu0 0.0
    %4905 = vmatpush1.msra.mxu0 0.0
    %4906 = vmatprep.subr.mxu0 0.0
    %4907 = vmatpush1.msra.mxu0 0.0
    %4908 = vmatprep.subr.mxu0 0.0
    %4909 = vmatpush1.msra.mxu0 0.0
    %4910 = vmatprep.subr.mxu0 0.0
    %4911 = vmatpush1.msra.mxu0 0.0
    %4912 = vmatprep.subr.mxu0 0.0
    %4913 = vmatpush1.msra.mxu0 0.0
    %4914 = vmatprep.subr.mxu0 0.0
    %4915 = vmatpush1.msra.mxu0 0.0
    %4916 = vmatprep.subr.mxu0 0.0
    %4917 = vmatpush1.msra.mxu0 0.0
    %4918 = vmatprep.subr.mxu0 0.0
    %4919 = vmatpush1.msra.mxu0 0.0
    %4920 = vmatprep.subr.mxu0 0.0
    %4921 = vmatpush1.msra.mxu0 0.0
    %4922 = vmatprep.subr.mxu0 0.0
    %4923 = vmatpush1.msra.mxu0 0.0
    %4924 = vmatprep.subr.mxu0 0.0
    %4925 = vmatpush1.msra.mxu0 0.0
    %4926 = vmatprep.subr.mxu0 0.0
    %4927 = vmatpush1.msra.mxu0 0.0
    %4928 = vmatprep.subr.mxu0 0.0
    %4929 = vmatpush1.msra.mxu0 0.0
    %4930 = vmatprep.subr.mxu0 0.0
    %4931 = vmatpush1.msra.mxu0 0.0
    %4932 = vmatprep.subr.mxu0 0.0
    %4933 = vmatpush1.msra.mxu0 0.0
    %4934 = vmatprep.subr.mxu0 0.0
    %4935 = vmatpush1.msra.mxu0 0.0
    %4936 = vmatprep.mubr.f32.mxu0 0.0
    %4937 = vmatmul.mubr.f32.gmra.mrb[0].mxu0 %v4868
    %v4938 = vpop.f32.mrb[0].mxu0
    %v4939 = vadd.f32 0.0, %v4938
    %v4940 = vpop.f32.mrb[0].mxu0
    %4941 = vmatprep.mubr.f32.mxu0 0.0
    %4942 = vmatmul.mubr.f32.gmra.mrb[0].mxu0 %v4870
    %v4943 = vpop.f32.mrb[0].mxu0
    %v4944 = vadd.f32 0.0, %v4943
    %v4945 = vpop.f32.mrb[0].mxu0
    %4946 = vdwg.mxu0
    %vm4947 = vcmask 261120
    %v4949 = vsel %vm4947, %v131, 0
    %v4952 = vsel %vm4947, %v136, 0
    %4954 = vmatprep.subr.mxu0 0.0
    %4955 = vmatpush1.msra.mxu0 %v152
    %4956 = vmatprep.subr.mxu0 0.0
    %4957 = vmatpush1.msra.mxu0 %v153
    %4958 = vmatprep.subr.mxu0 0.0
    %4959 = vmatpush1.msra.mxu0 %v154
    %4960 = vmatprep.subr.mxu0 0.0
    %4961 = vmatpush1.msra.mxu0 %v155
    %4962 = vmatprep.subr.mxu0 0.0
    %4963 = vmatpush1.msra.mxu0 0.0
    %4964 = vmatprep.subr.mxu0 0.0
    %4965 = vmatpush1.msra.mxu0 0.0
    %4966 = vmatprep.subr.mxu0 0.0
    %4967 = vmatpush1.msra.mxu0 0.0
    %4968 = vmatprep.subr.mxu0 0.0
    %4969 = vmatpush1.msra.mxu0 0.0
    %4970 = vmatprep.subr.mxu0 0.0
    %4971 = vmatpush1.msra.mxu0 0.0
    %4972 = vmatprep.subr.mxu0 0.0
    %4973 = vmatpush1.msra.mxu0 0.0
    %4974 = vmatprep.subr.mxu0 0.0
    %4975 = vmatpush1.msra.mxu0 0.0
    %4976 = vmatprep.subr.mxu0 0.0
    %4977 = vmatpush1.msra.mxu0 0.0
    %4978 = vmatprep.subr.mxu0 0.0
    %4979 = vmatpush1.msra.mxu0 0.0
    %4980 = vmatprep.subr.mxu0 0.0
    %4981 = vmatpush1.msra.mxu0 0.0
    %4982 = vmatprep.subr.mxu0 0.0
    %4983 = vmatpush1.msra.mxu0 0.0
    %4984 = vmatprep.subr.mxu0 0.0
    %4985 = vmatpush1.msra.mxu0 0.0
    %4986 = vmatprep.subr.mxu0 0.0
    %4987 = vmatpush1.msra.mxu0 0.0
    %4988 = vmatprep.subr.mxu0 0.0
    %4989 = vmatpush1.msra.mxu0 0.0
    %4990 = vmatprep.subr.mxu0 0.0
    %4991 = vmatpush1.msra.mxu0 0.0
    %4992 = vmatprep.subr.mxu0 0.0
    %4993 = vmatpush1.msra.mxu0 0.0
    %4994 = vmatprep.subr.mxu0 0.0
    %4995 = vmatpush1.msra.mxu0 0.0
    %4996 = vmatprep.subr.mxu0 0.0
    %4997 = vmatpush1.msra.mxu0 0.0
    %4998 = vmatprep.subr.mxu0 0.0
    %4999 = vmatpush1.msra.mxu0 0.0
    %5000 = vmatprep.subr.mxu0 0.0
    %5001 = vmatpush1.msra.mxu0 0.0
    %5002 = vmatprep.subr.mxu0 0.0
    %5003 = vmatpush1.msra.mxu0 0.0
    %5004 = vmatprep.subr.mxu0 0.0
    %5005 = vmatpush1.msra.mxu0 0.0
    %5006 = vmatprep.subr.mxu0 0.0
    %5007 = vmatpush1.msra.mxu0 0.0
    %5008 = vmatprep.subr.mxu0 0.0
    %5009 = vmatpush1.msra.mxu0 0.0
    %5010 = vmatprep.subr.mxu0 0.0
    %5011 = vmatpush1.msra.mxu0 0.0
    %5012 = vmatprep.subr.mxu0 0.0
    %5013 = vmatpush1.msra.mxu0 0.0
    %5014 = vmatprep.subr.mxu0 0.0
    %5015 = vmatpush1.msra.mxu0 0.0
    %5016 = vmatprep.subr.mxu0 0.0
    %5017 = vmatpush1.msra.mxu0 0.0
    %5018 = vmatprep.mubr.f32.mxu0 0.0
    %5019 = vmatmul.mubr.f32.gmra.mrb[0].mxu0 %v4949
    %v5020 = vpop.f32.mrb[0].mxu0
    %v5021 = vadd.f32 %v4939, %v5020
    %v5022 = vpop.f32.mrb[0].mxu0
    %5023 = vmatprep.mubr.f32.mxu0 0.0
    %5024 = vmatmul.mubr.f32.gmra.mrb[0].mxu0 %v4952
    %v5025 = vpop.f32.mrb[0].mxu0
    %v5026 = vadd.f32 %v4944, %v5025
    %v5027 = vpop.f32.mrb[0].mxu0
    %5028 = vdwg.mxu0
    %v5029 = vld [vmem:[%s2] sm:$0xff]
    %v5030 = vld [vmem:[%s2 + $0x8] sm:$0xff]
    %v5031 = vld [vmem:[%s7] sm:$0xff]
    %v5032 = vld [vmem:[%s7 + $0x8] sm:$0xff]
    %v5033 = vld [vmem:[%s7 + $0x10] sm:$0xff]
    %v5034 = vld [vmem:[%s7 + $0x18] sm:$0xff]
    %v5035 = vld [vmem:[%s7 + $0x20] sm:$0xff]
    %5036 = vset.pattern.permute.xlu0 0
    %5037 = vperm.xlu0 %5036, %v5029
    %v5038 = vpop.permute.xlu0 %5037
    %5039 = vset.pattern.permute.xlu0 0
    %5040 = vperm.xlu0 %5039, %v5030
    %v5041 = vpop.permute.xlu0 %5040
    %vm5042 = vcmp.eq.s32.totalorder %v40, %v5038
    %vm5043 = vcmp.eq.s32.totalorder %v40, %v5041
    %v5044 = vsel %vm5042, 1, 0
    %v5045 = vsel %vm5043, 1, 0
    %v5046 = vcvt.s32.f32 %v5044
    %v5047 = vcvt.s32.f32 %v5045
    %vm5048 = vcmask 326656
    %v5050 = vsel %vm5048, %v5046, 0
    %v5053 = vsel %vm5048, %v5047, 0
    %5055 = vmatprep.subr.mxu0 0.0
    %5056 = vmatpush1.msra.mxu0 %v5031
    %5057 = vmatprep.subr.mxu0 0.0
    %5058 = vmatpush1.msra.mxu0 %v5032
    %5059 = vmatprep.subr.mxu0 0.0
    %5060 = vmatpush1.msra.mxu0 %v5033
    %5061 = vmatprep.subr.mxu0 0.0
    %5062 = vmatpush1.msra.mxu0 %v5034
    %5063 = vmatprep.subr.mxu0 0.0
    %5064 = vmatpush1.msra.mxu0 %v5035
    %5065 = vmatprep.subr.mxu0 0.0
    %5066 = vmatpush1.msra.mxu0 0.0
    %5067 = vmatprep.subr.mxu0 0.0
    %5068 = vmatpush1.msra.mxu0 0.0
    %5069 = vmatprep.subr.mxu0 0.0
    %5070 = vmatpush1.msra.mxu0 0.0
    %5071 = vmatprep.subr.mxu0 0.0
    %5072 = vmatpush1.msra.mxu0 0.0
    %5073 = vmatprep.subr.mxu0 0.0
    %5074 = vmatpush1.msra.mxu0 0.0
    %5075 = vmatprep.subr.mxu0 0.0
    %5076 = vmatpush1.msra.mxu0 0.0
    %5077 = vmatprep.subr.mxu0 0.0
    %5078 = vmatpush1.msra.mxu0 0.0
    %5079 = vmatprep.subr.mxu0 0.0
    %5080 = vmatpush1.msra.mxu0 0.0
    %5081 = vmatprep.subr.mxu0 0.0
    %5082 = vmatpush1.msra.mxu0 0.0
    %5083 = vmatprep.subr.mxu0 0.0
    %5084 = vmatpush1.msra.mxu0 0.0
    %5085 = vmatprep.subr.mxu0 0.0
    %5086 = vmatpush1.msra.mxu0 0.0
    %5087 = vmatprep.subr.mxu0 0.0
    %5088 = vmatpush1.msra.mxu0 0.0
    %5089 = vmatprep.subr.mxu0 0.0
    %5090 = vmatpush1.msra.mxu0 0.0
    %5091 = vmatprep.subr.mxu0 0.0
    %5092 = vmatpush1.msra.mxu0 0.0
    %5093 = vmatprep.subr.mxu0 0.0
    %5094 = vmatpush1.msra.mxu0 0.0
    %5095 = vmatprep.subr.mxu0 0.0
    %5096 = vmatpush1.msra.mxu0 0.0
    %5097 = vmatprep.subr.mxu0 0.0
    %5098 = vmatpush1.msra.mxu0 0.0
    %5099 = vmatprep.subr.mxu0 0.0
    %5100 = vmatpush1.msra.mxu0 0.0
    %5101 = vmatprep.subr.mxu0 0.0
    %5102 = vmatpush1.msra.mxu0 0.0
    %5103 = vmatprep.subr.mxu0 0.0
    %5104 = vmatpush1.msra.mxu0 0.0
    %5105 = vmatprep.subr.mxu0 0.0
    %5106 = vmatpush1.msra.mxu0 0.0
    %5107 = vmatprep.subr.mxu0 0.0
    %5108 = vmatpush1.msra.mxu0 0.0
    %5109 = vmatprep.subr.mxu0 0.0
    %5110 = vmatpush1.msra.mxu0 0.0
    %5111 = vmatprep.subr.mxu0 0.0
    %5112 = vmatpush1.msra.mxu0 0.0
    %5113 = vmatprep.subr.mxu0 0.0
    %5114 = vmatpush1.msra.mxu0 0.0
    %5115 = vmatprep.subr.mxu0 0.0
    %5116 = vmatpush1.msra.mxu0 0.0
    %5117 = vmatprep.subr.mxu0 0.0
    %5118 = vmatpush1.msra.mxu0 0.0
    %5119 = vmatprep.mubr.f32.mxu0 0.0
    %5120 = vmatmul.mubr.f32.gmra.mrb[0].mxu0 %v5050
    %v5121 = vpop.f32.mrb[0].mxu0
    %v5122 = vadd.f32 0.0, %v5121
    %v5123 = vpop.f32.mrb[0].mxu0
    %5124 = vmatprep.mubr.f32.mxu0 0.0
    %5125 = vmatmul.mubr.f32.gmra.mrb[0].mxu0 %v5053
    %v5126 = vpop.f32.mrb[0].mxu0
    %v5127 = vadd.f32 0.0, %v5126
    %v5128 = vpop.f32.mrb[0].mxu0
    %5129 = vdwg.mxu0
    %v5130 = vadd.s32 %v140, 56
    %v5131 = vadd.s32 %v141, 56
    %vm5132 = vcmp.eq.s32.totalorder %v40, %v5130
    %vm5133 = vcmp.eq.s32.totalorder %v40, %v5131
    %v5134 = vsel %vm5132, 1, 0
    %v5135 = vsel %vm5133, 1, 0
    %v5136 = vcvt.s32.f32 %v5134
    %v5137 = vcvt.s32.f32 %v5135
    %v5139 = vsel %vm1734, %v5122, 0
    %v5142 = vsel %vm1734, %v5127, 0
    %5144 = vmatprep.subr.mxu0 0.0
    %5145 = vmatpush1.msra.mxu0 %v5136
    %5146 = vmatprep.subr.mxu0 0.0
    %5147 = vmatpush1.msra.mxu0 %v5137
    %5148 = vmatprep.subr.mxu0 0.0
    %5149 = vmatpush1.msra.mxu0 0.0
    %5150 = vmatprep.subr.mxu0 0.0
    %5151 = vmatpush1.msra.mxu0 0.0
    %5152 = vmatprep.subr.mxu0 0.0
    %5153 = vmatpush1.msra.mxu0 0.0
    %5154 = vmatprep.subr.mxu0 0.0
    %5155 = vmatpush1.msra.mxu0 0.0
    %5156 = vmatprep.subr.mxu0 0.0
    %5157 = vmatpush1.msra.mxu0 0.0
    %5158 = vmatprep.subr.mxu0 0.0
    %5159 = vmatpush1.msra.mxu0 0.0
    %5160 = vmatprep.subr.mxu0 0.0
    %5161 = vmatpush1.msra.mxu0 0.0
    %5162 = vmatprep.subr.mxu0 0.0
    %5163 = vmatpush1.msra.mxu0 0.0
    %5164 = vmatprep.subr.mxu0 0.0
    %5165 = vmatpush1.msra.mxu0 0.0
    %5166 = vmatprep.subr.mxu0 0.0
    %5167 = vmatpush1.msra.mxu0 0.0
    %5168 = vmatprep.subr.mxu0 0.0
    %5169 = vmatpush1.msra.mxu0 0.0
    %5170 = vmatprep.subr.mxu0 0.0
    %5171 = vmatpush1.msra.mxu0 0.0
    %5172 = vmatprep.subr.mxu0 0.0
    %5173 = vmatpush1.msra.mxu0 0.0
    %5174 = vmatprep.subr.mxu0 0.0
    %5175 = vmatpush1.msra.mxu0 0.0
    %5176 = vmatprep.subr.mxu0 0.0
    %5177 = vmatpush1.msra.mxu0 0.0
    %5178 = vmatprep.subr.mxu0 0.0
    %5179 = vmatpush1.msra.mxu0 0.0
    %5180 = vmatprep.subr.mxu0 0.0
    %5181 = vmatpush1.msra.mxu0 0.0
    %5182 = vmatprep.subr.mxu0 0.0
    %5183 = vmatpush1.msra.mxu0 0.0
    %5184 = vmatprep.subr.mxu0 0.0
    %5185 = vmatpush1.msra.mxu0 0.0
    %5186 = vmatprep.subr.mxu0 0.0
    %5187 = vmatpush1.msra.mxu0 0.0
    %5188 = vmatprep.subr.mxu0 0.0
    %5189 = vmatpush1.msra.mxu0 0.0
    %5190 = vmatprep.subr.mxu0 0.0
    %5191 = vmatpush1.msra.mxu0 0.0
    %5192 = vmatprep.subr.mxu0 0.0
    %5193 = vmatpush1.msra.mxu0 0.0
    %5194 = vmatprep.subr.mxu0 0.0
    %5195 = vmatpush1.msra.mxu0 0.0
    %5196 = vmatprep.subr.mxu0 0.0
    %5197 = vmatpush1.msra.mxu0 0.0
    %5198 = vmatprep.subr.mxu0 0.0
    %5199 = vmatpush1.msra.mxu0 0.0
    %5200 = vmatprep.subr.mxu0 0.0
    %5201 = vmatpush1.msra.mxu0 0.0
    %5202 = vmatprep.subr.mxu0 0.0
    %5203 = vmatpush1.msra.mxu0 0.0
    %5204 = vmatprep.subr.mxu0 0.0
    %5205 = vmatpush1.msra.mxu0 0.0
    %5206 = vmatprep.subr.mxu0 0.0
    %5207 = vmatpush1.msra.mxu0 0.0
    %5208 = vmatprep.mubr.f32.mxu0 0.0
    %5209 = vmatmul.mubr.f32.gmra.mrb[0].mxu0 %v5139
    %v5210 = vpop.f32.mrb[0].mxu0
    %v5211 = vadd.f32 0.0, %v5210
    %v5212 = vpop.f32.mrb[0].mxu0
    %5213 = vmatprep.mubr.f32.mxu0 0.0
    %5214 = vmatmul.mubr.f32.gmra.mrb[0].mxu0 %v5142
    %v5215 = vpop.f32.mrb[0].mxu0
    %v5216 = vadd.f32 0.0, %v5215
    %v5217 = vpop.f32.mrb[0].mxu0
    %5218 = vdwg.mxu0
    %v5219 = vadd.f32 %v5021, %v5211
    %v5220 = vadd.f32 %v5026, %v5216
    %5221 = vst [vmem:[#allocation2] sm:$0xff] %v5219
    %5222 = vst [vmem:[#allocation2 + $0x8] sm:$0xff] %v5220
    // Predicated region
    $region34: #{tpu_custom_call.1} parent=1 // pred_check
      _
    $region35: #{tpu_custom_call.1} parent=1 // pred_check_branch
      %5224 = sbr.rel (0) target = $region37
    $region36: #{tpu_custom_call.1} parent=1 // pred_region
      %s5226 = ssub.s32 256, 256
      %5227 = vsyncadd [#allocation3], %s5226
      %s5228 = sshll.u32 [#allocation2], 4
      %s5229 = int_to_ptr.vmem [resolvable:$true] %s5228
      %5234 = dma.vmem_to_hbm [thread:$0]  %s5229, 256, %s8, [#allocation3], 128, 128, 8
    $region37: #{tpu_custom_call.1} parent=1 // pred_fallthru
      _
    // Predicated region
    $region38: #{tpu_custom_call.1} parent=1 // pred_check
      _
    $region39: #{tpu_custom_call.1} parent=1 // pred_check_branch
      %5236 = sbr.rel (0) target = $region41
    $region40: #{tpu_custom_call.1} parent=1 // pred_region
      %5237 = dma.done [#allocation3], 256
    $region41: #{tpu_custom_call.1} parent=1 // pred_fallthru
      _
    %5238 = vsyncpa [#allocation3], 1

</llo_original>
